<compile_context>
chip_gen: v7x
topology: tpu7x:2x2x1
jax: 0.10.0
libtpu: 0.0.40
codegen_flags: <defaults>
</compile_context>

<pallas_src>
import functools

import jax
import jax.numpy as jnp
from jax.experimental import pallas as pl
from jax.experimental.pallas import tpu as pltpu

_VMEM_LIMIT = 32 * 1024 * 1024  # >= default scoped limit, <= physical on all gens


def _cparams(*sem):
    return pltpu.CompilerParams(dimension_semantics=tuple(sem),
                                vmem_limit_bytes=_VMEM_LIMIT)


# --------------------------------------------------------------------------
# tile-size helpers (VMEM-aware)
# --------------------------------------------------------------------------
def _pick_tile(m, cap, min_steps=2):
    """Largest multiple-of-8 divisor of m that is <= cap, preferring >=
    min_steps grid steps (pipelining / megacore); falls back to m."""
    if m <= 8:
        return m
    cap = max(8, min(cap, m))
    t = cap - (cap % 8)
    best = None
    while t >= 8:
        if m % t == 0:
            if m // t >= min_steps:
                return t
            if best is None:
                best = t
        t -= 8
    return best if best is not None else m


def _row_cap(row_bytes, fixed_bytes, budget=10 * 1024 * 1024):
    """Cap on row tile: double-buffered row blocks + (double-buffered)
    grid-invariant operands must stay within `budget` of VMEM."""
    avail = max(budget - fixed_bytes, 1 << 20)
    return max(8, int(avail // (2 * row_bytes)))


def _channel_tile(hidden):
    """Multiple-of-128 divisor of `hidden`, preferring >= 2 chunks."""
    cap = min(hidden, 512)
    t = cap - (cap % 128)
    best = None
    while t >= 128:
        if hidden % t == 0:
            if hidden // t >= 2:
                return t
            if best is None:
                best = t
        t -= 128
    return best if best is not None else hidden


def _row_strip(H, W, tc, budget=32 * 1024):
    """Row-strip size bounding the dwconv f32 accumulator live range."""
    for rs in range(H, 0, -1):
        if H % rs == 0 and rs * W * tc * 4 <= budget:
            return rs
    return 1


# --------------------------------------------------------------------------
# in-kernel helpers
# --------------------------------------------------------------------------
def _ln(x, g, b, eps):
    mu = jnp.mean(x, axis=-1, keepdims=True)
    xc = x - mu
    var = jnp.mean(xc * xc, axis=-1, keepdims=True)
    return xc * jax.lax.rsqrt(var + eps) * g + b


# --------------------------------------------------------------------------
# Pallas kernels
# --------------------------------------------------------------------------
def _ln_matmul_kernel(x_ref, g_ref, b_ref, w_ref, bias_ref, o_ref, *, eps):
    """o = LayerNorm(x) @ W + bias."""
    xn = _ln(x_ref[...].astype(jnp.float32), g_ref[...], b_ref[...], eps)
    y = jnp.dot(xn.astype(w_ref.dtype), w_ref[...],
                preferred_element_type=jnp.float32) + bias_ref[...]
    o_ref[...] = y.astype(o_ref.dtype)


def _ln_qkv_kernel(x_ref, g_ref, b_ref, wq_ref, bq_ref, wkv_ref, bkv_ref,
                   q_ref, kv_ref, *, eps):
    """One LayerNorm feeding Q and KV projections (two lane-dense outputs)."""
    xn = _ln(x_ref[...].astype(jnp.float32), g_ref[...], b_ref[...], eps)
    xnb = xn.astype(wq_ref.dtype)
    q_ref[...] = (jnp.dot(xnb, wq_ref[...], preferred_element_type=jnp.float32)
                  + bq_ref[...]).astype(q_ref.dtype)
    kv_ref[...] = (jnp.dot(xnb, wkv_ref[...], preferred_element_type=jnp.float32)
                   + bkv_ref[...]).astype(kv_ref.dtype)


def _ln_q_xn_kernel(x_ref, g_ref, b_ref, wq_ref, bq_ref, q_ref, xn_ref, *, eps):
    """sr>1 path: Q projection plus the normalized input (re-used downstream)."""
    xn = _ln(x_ref[...].astype(jnp.float32), g_ref[...], b_ref[...], eps)
    xnb = xn.astype(jnp.bfloat16)
    xn_ref[...] = xnb
    q_ref[...] = (jnp.dot(xnb, wq_ref[...], preferred_element_type=jnp.float32)
                  + bq_ref[...]).astype(q_ref.dtype)


def _srconv_ln_kv_kernel(p_ref, wsr_ref, bsr_ref, gn_ref, bn_ref,
                         wkv_ref, bkv_ref, kv_ref, *, eps):
    """Spatial-reduction conv (patch matmul) + LayerNorm + KV projection."""
    xr = jnp.dot(p_ref[...], wsr_ref[...],
                 preferred_element_type=jnp.float32) + bsr_ref[...]
    xn = _ln(xr, gn_ref[...], bn_ref[...], eps)
    kv_ref[...] = (jnp.dot(xn.astype(wkv_ref.dtype), wkv_ref[...],
                           preferred_element_type=jnp.float32)
                   + bkv_ref[...]).astype(kv_ref.dtype)


def _attn_kernel(q_ref, kv_ref, wp_ref, bp_ref, xres_ref, o_ref, *, num_heads):
    """Multi-head attention for one (batch, query-row tile).

    q:(1,tq,C) bf16 (q already scaled via weight folding), kv:(1,Nk,2C) bf16,
    wp:(C,C) bf16, bp:(1,C) f32, xres:(1,tq,C) f32, o:(1,tq,C) f32.
    Per-head contexts are concatenated and projected with ONE K=C matmul;
    bias + residual are a short-live-range epilogue.
    """
    q = q_ref[0]                                   # (tq, C)  bf16
    kv = kv_ref[0]                                 # (Nk, 2C) bf16
    c = q.shape[-1]
    hd = c // num_heads
    # TODO(synk): with hd < 128 the per-head slices are not lane-aligned; a
    # head-major padded layout would avoid the XLU relayouts per head.
    ctx_parts = []
    for h in range(num_heads):
        lo = h * hd
        qh = q[:, lo:lo + hd]
        kh = kv[:, lo:lo + hd]
        vh = kv[:, c + lo:c + lo + hd]
        s = jax.lax.dot_general(qh, kh, (((1,), (1,)), ((), ())),
                                preferred_element_type=jnp.float32)
        s = s - jnp.max(s, axis=-1, keepdims=True)
        p = jnp.exp(s)
        p = p * pl.reciprocal(jnp.sum(p, axis=-1, keepdims=True), approx=True)
        ctx_parts.append(jnp.dot(p.astype(kv.dtype), vh,
                                 preferred_element_type=jnp.float32))
    ctx = ctx_parts[0] if num_heads == 1 else jnp.concatenate(ctx_parts, axis=-1)
    out = jnp.dot(ctx.astype(wp_ref.dtype), wp_ref[...],
                  preferred_element_type=jnp.float32)
    o_ref[0] = out + bp_ref[...] + xres_ref[0]


def _dwconv_mlp_kernel(x_ref, dww_ref, dwb_ref, w2_ref, b2_ref, xres_ref,
                       o_ref, xpad_ref, hbuf_ref, acc_ref, *, H, W, rs):
    """DWConv3x3 + bias + GELU + fc2 (channel-chunked) + bias + residual.

    Grid = (batch, hidden-channel chunk). Padding is fused: the unpadded
    (H,W,tc) input chunk is copied into a zero-bordered VMEM scratch whose
    interior sits at an 8-aligned sublane offset (no jnp.pad HBM round trip).
    The fc2 partial products are accumulated in a VMEM f32 accumulator across
    channel chunks ("arbitrary" reduction axis).
    """
    kc = pl.program_id(1)

    @pl.when(kc == 0)
    def _init():
        xpad_ref[...] = jnp.zeros_like(xpad_ref)   # zero borders (once per batch)
        acc_ref[...] = jnp.zeros_like(acc_ref)

    # interior copy: rows 1..H, sublane columns 8..8+W-1 (aligned store)
    xpad_ref[pl.ds(1, H), pl.ds(8, W), :] = x_ref[0].astype(xpad_ref.dtype)

    dw = dww_ref[...]                              # (9, tc) f32
    tc = dw.shape[-1]
    # depthwise 3x3, strip-mined over rows to bound the f32 accumulator
    for y0 in range(0, H, rs):
        acc = jnp.zeros((rs, W, tc), jnp.float32)
        for idx in range(9):
            ky, kx = idx // 3, idx % 3
            acc = acc + xpad_ref[pl.ds(y0 + ky, rs), pl.ds(7 + kx, W), :] \
                        * dw[idx:idx + 1, :]
        hseg = acc.reshape(rs * W, tc) + dwb_ref[...]
        # TODO(synk): PyTorch nn.GELU defaults to exact erf; tanh approximation
        # is used here (EUP-friendly, ~1e-3 abs difference).
        hseg = jax.nn.gelu(hseg, approximate=True)
        hbuf_ref[pl.ds(y0 * W, rs * W), :] = hseg.astype(hbuf_ref.dtype)

    acc_ref[...] += jnp.dot(hbuf_ref[...], w2_ref[...],
                            preferred_element_type=jnp.float32)
    o_ref[0] = acc_ref[...] + b2_ref[...] + xres_ref[0]


# --------------------------------------------------------------------------
# pallas_call wrappers
# --------------------------------------------------------------------------
def ln_matmul(x, g, b, w, bias, *, out_dtype=jnp.bfloat16, eps=1e-5):
    m, c = x.shape
    f = w.shape[1]
    tm = _pick_tile(m, _row_cap(c * 4 + f * 2, 4 * c * f))
    return pl.pallas_call(
        functools.partial(_ln_matmul_kernel, eps=eps),
        out_shape=jax.ShapeDtypeStruct((m, f), out_dtype),
        grid=(m // tm,),
        in_specs=[
            pl.BlockSpec((tm, c), lambda i: (i, 0)),
            pl.BlockSpec((1, c), lambda i: (0, 0)),
            pl.BlockSpec((1, c), lambda i: (0, 0)),
            pl.BlockSpec((c, f), lambda i: (0, 0)),
            pl.BlockSpec((1, f), lambda i: (0, 0)),
        ],
        out_specs=pl.BlockSpec((tm, f), lambda i: (i, 0)),
        compiler_params=_cparams("parallel"),
    )(x, g, b, w, bias)


def ln_qkv(x, g, b, wq, bq, wkv, bkv, *, eps=1e-5):
    m, c = x.shape
    f1, f2 = wq.shape[1], wkv.shape[1]
    tm = _pick_tile(m, _row_cap(c * 4 + (f1 + f2) * 2, 4 * c * (f1 + f2)))
    return pl.pallas_call(
        functools.partial(_ln_qkv_kernel, eps=eps),
        out_shape=(jax.ShapeDtypeStruct((m, f1), jnp.bfloat16),
                   jax.ShapeDtypeStruct((m, f2), jnp.bfloat16)),
        grid=(m // tm,),
        in_specs=[
            pl.BlockSpec((tm, c), lambda i: (i, 0)),
            pl.BlockSpec((1, c), lambda i: (0, 0)),
            pl.BlockSpec((1, c), lambda i: (0, 0)),
            pl.BlockSpec((c, f1), lambda i: (0, 0)),
            pl.BlockSpec((1, f1), lambda i: (0, 0)),
            pl.BlockSpec((c, f2), lambda i: (0, 0)),
            pl.BlockSpec((1, f2), lambda i: (0, 0)),
        ],
        out_specs=(pl.BlockSpec((tm, f1), lambda i: (i, 0)),
                   pl.BlockSpec((tm, f2), lambda i: (i, 0))),
        compiler_params=_cparams("parallel"),
    )(x, g, b, wq, bq, wkv, bkv)


def ln_q_xn(x, g, b, wq, bq, *, eps=1e-5):
    m, c = x.shape
    tm = _pick_tile(m, _row_cap(c * 4 + c * 4, 4 * c * c))
    return pl.pallas_call(
        functools.partial(_ln_q_xn_kernel, eps=eps),
        out_shape=(jax.ShapeDtypeStruct((m, c), jnp.bfloat16),
                   jax.ShapeDtypeStruct((m, c), jnp.bfloat16)),
        grid=(m // tm,),
        in_specs=[
            pl.BlockSpec((tm, c), lambda i: (i, 0)),
            pl.BlockSpec((1, c), lambda i: (0, 0)),
            pl.BlockSpec((1, c), lambda i: (0, 0)),
            pl.BlockSpec((c, c), lambda i: (0, 0)),
            pl.BlockSpec((1, c), lambda i: (0, 0)),
        ],
        out_specs=(pl.BlockSpec((tm, c), lambda i: (i, 0)),
                   pl.BlockSpec((tm, c), lambda i: (i, 0))),
        compiler_params=_cparams("parallel"),
    )(x, g, b, wq, bq)


def srconv_ln_kv(patches, wsr, bsr, gn, bn, wkv, bkv, *, eps=1e-5):
    m, k = patches.shape
    c, f2 = wsr.shape[1], wkv.shape[1]
    tm = _pick_tile(m, _row_cap(k * 2 + f2 * 2, 4 * (k * c + c * f2)))
    return pl.pallas_call(
        functools.partial(_srconv_ln_kv_kernel, eps=eps),
        out_shape=jax.ShapeDtypeStruct((m, f2), jnp.bfloat16),
        grid=(m // tm,),
        in_specs=[
            pl.BlockSpec((tm, k), lambda i: (i, 0)),
            pl.BlockSpec((k, c), lambda i: (0, 0)),
            pl.BlockSpec((1, c), lambda i: (0, 0)),
            pl.BlockSpec((1, c), lambda i: (0, 0)),
            pl.BlockSpec((1, c), lambda i: (0, 0)),
            pl.BlockSpec((c, f2), lambda i: (0, 0)),
            pl.BlockSpec((1, f2), lambda i: (0, 0)),
        ],
        out_specs=pl.BlockSpec((tm, f2), lambda i: (i, 0)),
        compiler_params=_cparams("parallel"),
    )(patches, wsr, bsr, gn, bn, wkv, bkv)


def attention(q, kv, wp, bp, xres, *, num_heads):
    B, N, C = xres.shape
    Nk = kv.shape[1]
    tq = _pick_tile(N, 256)   # query-row tiling bounds scores and gives >=2 steps
    return pl.pallas_call(
        functools.partial(_attn_kernel, num_heads=num_heads),
        out_shape=jax.ShapeDtypeStruct((B, N, C), jnp.float32),
        grid=(B, N // tq),
        in_specs=[
            pl.BlockSpec((1, tq, C), lambda b, i: (b, i, 0)),
            pl.BlockSpec((1, Nk, 2 * C), lambda b, i: (b, 0, 0)),
            pl.BlockSpec((C, C), lambda b, i: (0, 0)),
            pl.BlockSpec((1, C), lambda b, i: (0, 0)),
            pl.BlockSpec((1, tq, C), lambda b, i: (b, i, 0)),
        ],
        out_specs=pl.BlockSpec((1, tq, C), lambda b, i: (b, i, 0)),
        compiler_params=_cparams("parallel", "parallel"),
    )(q, kv, wp, bp, xres)


def dwconv_mlp(h, dww, dwb, w2, b2, xres, *, H, W):
    B, _, _, hidden = h.shape
    N = H * W
    C = xres.shape[-1]
    tc = _channel_tile(hidden)
    rs = _row_strip(H, W, tc)
    return pl.pallas_call(
        functools.partial(_dwconv_mlp_kernel, H=H, W=W, rs=rs),
        out_shape=jax.ShapeDtypeStruct((B, N, C), jnp.float32),
        grid=(B, hidden // tc),
        in_specs=[
            pl.BlockSpec((1, H, W, tc), lambda b, k: (b, 0, 0, k)),  # fc1 out chunk
            pl.BlockSpec((9, tc), lambda b, k: (0, k)),              # dw weights
            pl.BlockSpec((1, tc), lambda b, k: (0, k)),              # dw bias
            pl.BlockSpec((tc, C), lambda b, k: (k, 0)),              # fc2 W chunk
            pl.BlockSpec((1, C), lambda b, k: (0, 0)),               # fc2 bias
            pl.BlockSpec((1, N, C), lambda b, k: (b, 0, 0)),         # residual x
        ],
        out_specs=pl.BlockSpec((1, N, C), lambda b, k: (b, 0, 0)),
        scratch_shapes=[
            pltpu.VMEM((H + 2, W + 9, tc), jnp.float32),   # zero-padded dw input
            pltpu.VMEM((N, tc), jnp.bfloat16),             # GELU(hidden) buffer
            pltpu.VMEM((N, C), jnp.float32),               # fc2 accumulator
        ],
        compiler_params=_cparams("parallel", "arbitrary"),
    )(h, dww, dwb, w2, b2, xres)


# --------------------------------------------------------------------------
# Block forward
# --------------------------------------------------------------------------
def block_forward(params, x, *, H, W, num_heads, sr_ratio=1):
    """x: (B, N, C) f32 with N == H*W.  `params` must come from
    prepare_block_params (bf16 weights, row biases, qk scale folded into wq)."""
    B, N, C = x.shape
    assert N == H * W and C % num_heads == 0
    x2 = x.reshape(B * N, C)

    # ---------------- attention branch: x = x + Attn(norm1(x)) ----------------
    if sr_ratio == 1:
        q, kv = ln_qkv(x2, params["g1"], params["b1"], params["wq"],
                       params["bq"], params["wkv"], params["bkv"])
        Nk = N
    else:
        q, xn = ln_q_xn(x2, params["g1"], params["b1"], params["wq"],
                        params["bq"])
        hs, ws = H // sr_ratio, W // sr_ratio
        Nk = hs * ws
        # TODO(synk): the patch rearrangement is a pure-layout HBM transpose by
        # XLA; folding it into the kernel via an Element index_map would save
        # one more pass over the (downsampled) tensor.
        patches = xn.reshape(B, hs, sr_ratio, ws, sr_ratio, C)
        patches = patches.transpose(0, 1, 3, 2, 4, 5).reshape(
            B * Nk, sr_ratio * sr_ratio * C)
        kv = srconv_ln_kv(patches, params["wsr"], params["bsr"], params["gn"],
                          params["bn"], params["wkv"], params["bkv"])
    q = q.reshape(B, N, C)
    kv = kv.reshape(B, Nk, 2 * C)
    x = attention(q, kv, params["wproj"], params["bproj"], x,
                  num_heads=num_heads)

    # ---------------- MLP branch: x = x + Mlp(norm2(x)) ----------------
    hidden = params["w1"].shape[1]
    h = ln_matmul(x.reshape(B * N, C), params["g2"], params["b2"],
                  params["w1"], params["bias1"])
    x = dwconv_mlp(h.reshape(B, H, W, hidden), params["dww"], params["dwb"],
                   params["w2"], params["bias2"], x, H=H, W=W)
    return x


# --------------------------------------------------------------------------
# parameter initialization / one-time preparation (outside jit)
# --------------------------------------------------------------------------
def init_block_params(key, dim, num_heads, mlp_ratio=4.0, sr_ratio=1):
    del num_heads  # head split is a view of the same weights
    hidden = int(dim * mlp_ratio)
    keys = iter(jax.random.split(key, 16))
    w = lambda shape: 0.02 * jax.random.normal(next(keys), shape, jnp.float32)
    b = lambda n: 0.01 * jax.random.normal(next(keys), (n,), jnp.float32)
    ones = lambda n: jnp.ones((n,), jnp.float32)
    zeros = lambda n: jnp.zeros((n,), jnp.float32)
    p = {
        "g1": ones(dim), "b1": zeros(dim),          # norm1
        "g2": ones(dim), "b2": zeros(dim),          # norm2
        # attention (qkv_bias=False -> zero bias == no bias)
        "wq": w((dim, dim)), "bq": zeros(dim),
        "wkv": w((dim, 2 * dim)), "bkv": zeros(2 * dim),
        "wproj": w((dim, dim)), "bproj": b(dim),
        # mlp
        "w1": w((dim, hidden)), "bias1": b(hidden),
        "dww": w((9, hidden)), "dwb": b(hidden),
        "w2": w((hidden, dim)), "bias2": b(dim),
    }
    if sr_ratio > 1:
        p["wsr"] = w((sr_ratio * sr_ratio * dim, dim))
        p["bsr"] = b(dim)
        p["gn"] = ones(dim)                          # Attention.norm (LayerNorm)
        p["bn"] = zeros(dim)
    return p


def prepare_block_params(p, *, num_heads, qk_scale=None, sr_ratio=1):
    """One-time prep (outside jit): bf16 weights, (1,F) f32 biases/affines,
    qk scale folded into the Q projection."""
    dim = p["wq"].shape[0]
    hd = dim // num_heads
    scale = qk_scale if qk_scale is not None else hd ** -0.5
    bf = lambda a: a.astype(jnp.bfloat16)
    row = lambda a: a.reshape(1, -1).astype(jnp.float32)
    out = {
        "g1": row(p["g1"]), "b1": row(p["b1"]),
        "g2": row(p["g2"]), "b2": row(p["b2"]),
        "wq": bf(p["wq"] * scale), "bq": row(p["bq"] * scale),
        "wkv": bf(p["wkv"]), "bkv": row(p["bkv"]),
        "wproj": bf(p["wproj"]), "bproj": row(p["bproj"]),
        "w1": bf(p["w1"]), "bias1": row(p["bias1"]),
        "dww": p["dww"].astype(jnp.float32), "dwb": row(p["dwb"]),
        "w2": bf(p["w2"]), "bias2": row(p["bias2"]),
    }
    if sr_ratio > 1:
        out["wsr"] = bf(p["wsr"])
        out["bsr"] = row(p["bsr"])
        out["gn"] = row(p["gn"])
        out["bn"] = row(p["bn"])
    return out


# --------------------------------------------------------------------------
# pure-JAX reference (f32) for validation
# --------------------------------------------------------------------------
def _layernorm(x, g, b, eps=1e-5):
    mu = jnp.mean(x, axis=-1, keepdims=True)
    xc = x - mu
    var = jnp.mean(xc * xc, axis=-1, keepdims=True)
    return xc * jax.lax.rsqrt(var + eps) * g + b


def block_ref(p, x, *, H, W, num_heads, sr_ratio=1, qk_scale=None):
    B, N, C = x.shape
    hd = C // num_heads
    scale = qk_scale if qk_scale is not None else hd ** -0.5
    h1 = _layernorm(x, p["g1"], p["b1"])
    q = h1 @ p["wq"] + p["bq"]
    if sr_ratio > 1:
        hs, ws = H // sr_ratio, W // sr_ratio
        patches = h1.reshape(B, hs, sr_ratio, ws, sr_ratio, C)
        patches = patches.transpose(0, 1, 3, 2, 4, 5).reshape(
            B, hs * ws, sr_ratio * sr_ratio * C)
        xr = _layernorm(patches @ p["wsr"] + p["bsr"], p["gn"], p["bn"])
        kvsrc = xr
    else:
        kvsrc = h1
    kv = kvsrc @ p["wkv"] + p["bkv"]
    Nk = kv.shape[1]
    k, v = kv[..., :C], kv[..., C:]
    qh = q.reshape(B, N, num_heads, hd).transpose(0, 2, 1, 3)
    kh = k.reshape(B, Nk, num_heads, hd).transpose(0, 2, 1, 3)
    vh = v.reshape(B, Nk, num_heads, hd).transpose(0, 2, 1, 3)
    attn = jax.nn.softmax(jnp.einsum("bhqd,bhkd->bhqk", qh, kh) * scale, -1)
    ctx = jnp.einsum("bhqk,bhkd->bhqd", attn, vh).transpose(0, 2, 1, 3)
    ctx = ctx.reshape(B, N, C)
    x = x + ctx @ p["wproj"] + p["bproj"]
    h2 = _layernorm(x, p["g2"], p["b2"])
    hm = h2 @ p["w1"] + p["bias1"]
    hi = hm.reshape(B, H, W, -1)
    hp = jnp.pad(hi, ((0, 0), (1, 1), (1, 1), (0, 0)))
    acc = jnp.zeros_like(hi)
    for idx in range(9):
        ky, kx = idx // 3, idx % 3
        acc = acc + hp[:, ky:ky + H, kx:kx + W, :] * p["dww"][idx]
    hm = jax.nn.gelu(acc.reshape(B, N, -1) + p["dwb"], approximate=True)
    return x + hm @ p["w2"] + p["bias2"]


# --------------------------------------------------------------------------
if __name__ == "__main__":
    key = jax.random.PRNGKey(0)
    k1, k2, k3, k4 = jax.random.split(key, 4)

    B, H, W = 2, 8, 8
    N = H * W

    # Config 1: dim=128, heads=2, sr_ratio=1 (module default sr path).
    dim1, heads1 = 128, 2
    raw1 = init_block_params(k1, dim1, heads1, mlp_ratio=4.0, sr_ratio=1)
    prep1 = prepare_block_params(raw1, num_heads=heads1, sr_ratio=1)
    x1 = jax.random.normal(k2, (B, N, dim1), jnp.float32)
    fwd1 = jax.jit(functools.partial(block_forward, H=H, W=W,
                                     num_heads=heads1, sr_ratio=1))
    y1 = fwd1(prep1, x1)
    jax.block_until_ready(y1)
    assert y1.shape == (B, N, dim1), y1.shape
    assert bool(jnp.all(jnp.isfinite(y1)))
    r1 = block_ref(raw1, x1, H=H, W=W, num_heads=heads1, sr_ratio=1)
    err1 = float(jnp.max(jnp.abs(y1 - r1)))
    assert err1 < 3e-2, f"config1 max abs err {err1}"

    # Config 2: dim=64, heads=1, sr_ratio=2 (spatial-reduction attention path).
    dim2, heads2, sr2 = 64, 1, 2
    raw2 = init_block_params(k3, dim2, heads2, mlp_ratio=4.0, sr_ratio=sr2)
    prep2 = prepare_block_params(raw2, num_heads=heads2, sr_ratio=sr2)
    x2 = jax.random.normal(k4, (B, N, dim2), jnp.float32)
    fwd2 = jax.jit(functools.partial(block_forward, H=H, W=W,
                                     num_heads=heads2, sr_ratio=sr2))
    y2 = fwd2(prep2, x2)
    jax.block_until_ready(y2)
    assert y2.shape == (B, N, dim2), y2.shape
    assert bool(jnp.all(jnp.isfinite(y2)))
    r2 = block_ref(raw2, x2, H=H, W=W, num_heads=heads2, sr_ratio=sr2)
    err2 = float(jnp.max(jnp.abs(y2 - r2)))
    assert err2 < 3e-2, f"config2 max abs err {err2}"

    print("KERNEL_OK")
</pallas_src>

<mosaic_0001>
module attributes {stable_mosaic.version = 11 : i64} {
  func.func @_ln_matmul_kernel(%arg0: i32, %arg1: memref<64x128xf32, #tpu.memory_space<vmem>>, %arg2: memref<1x128xf32, #tpu.memory_space<vmem>>, %arg3: memref<1x128xf32, #tpu.memory_space<vmem>>, %arg4: memref<128x512xbf16, #tpu.memory_space<vmem>>, %arg5: memref<1x512xf32, #tpu.memory_space<vmem>>, %arg6: memref<64x512xbf16, #tpu.memory_space<vmem>>) attributes {dimension_semantics = [#tpu.dimension_semantics<parallel>], iteration_bounds = array<i64: 2>, scalar_prefetch = 0 : i64, scratch_operands = 0 : i64, tpu.core_type = #tpu.core_type<tc>, window_params = [{transform_indices = @transform_0, window_bounds = array<i64: 64, 128>}, {pipeline_mode = #tpu.pipeline_mode<synchronous>, transform_indices = @transform_1, window_bounds = array<i64: 1, 128>}, {pipeline_mode = #tpu.pipeline_mode<synchronous>, transform_indices = @transform_2, window_bounds = array<i64: 1, 128>}, {pipeline_mode = #tpu.pipeline_mode<synchronous>, transform_indices = @transform_3, window_bounds = array<i64: 128, 512>}, {pipeline_mode = #tpu.pipeline_mode<synchronous>, transform_indices = @transform_4, window_bounds = array<i64: 1, 512>}, {transform_indices = @transform_5, window_bounds = array<i64: 64, 512>}]} {
    %c0 = arith.constant 0 : index
    %c0_0 = arith.constant 0 : index
    %0 = vector.load %arg1[%c0, %c0_0] : memref<64x128xf32, #tpu.memory_space<vmem>>, vector<64x128xf32>
    %c0_1 = arith.constant 0 : index
    %c0_2 = arith.constant 0 : index
    %1 = vector.load %arg2[%c0_1, %c0_2] : memref<1x128xf32, #tpu.memory_space<vmem>>, vector<1x128xf32>
    %c0_3 = arith.constant 0 : index
    %c0_4 = arith.constant 0 : index
    %2 = vector.load %arg3[%c0_3, %c0_4] : memref<1x128xf32, #tpu.memory_space<vmem>>, vector<1x128xf32>
    %cst = arith.constant dense<0.000000e+00> : vector<64xf32>
    %3 = vector.multi_reduction <add>, %0, %cst [1] : vector<64x128xf32> to vector<64xf32>
    %4 = vector.shape_cast %3 : vector<64xf32> to vector<64x1xf32>
    %cst_5 = arith.constant 1.280000e+02 : f32
    %5 = vector.broadcast %cst_5 : f32 to vector<64x1xf32>
    %6 = arith.divf %4, %5 : vector<64x1xf32>
    %7 = vector.broadcast %6 : vector<64x1xf32> to vector<64x128xf32>
    %8 = arith.subf %0, %7 : vector<64x128xf32>
    %9 = arith.mulf %8, %8 : vector<64x128xf32>
    %cst_6 = arith.constant dense<0.000000e+00> : vector<64xf32>
    %10 = vector.multi_reduction <add>, %9, %cst_6 [1] : vector<64x128xf32> to vector<64xf32>
    %11 = vector.shape_cast %10 : vector<64xf32> to vector<64x1xf32>
    %cst_7 = arith.constant 1.280000e+02 : f32
    %12 = vector.broadcast %cst_7 : f32 to vector<64x1xf32>
    %13 = arith.divf %11, %12 : vector<64x1xf32>
    %cst_8 = arith.constant 9.99999974E-6 : f32
    %14 = vector.broadcast %cst_8 : f32 to vector<64x1xf32>
    %15 = arith.addf %13, %14 : vector<64x1xf32>
    %16 = math.rsqrt %15 : vector<64x1xf32>
    %17 = vector.broadcast %16 : vector<64x1xf32> to vector<64x128xf32>
    %18 = arith.mulf %8, %17 : vector<64x128xf32>
    %19 = vector.broadcast %1 : vector<1x128xf32> to vector<64x128xf32>
    %20 = arith.mulf %18, %19 : vector<64x128xf32>
    %21 = vector.broadcast %2 : vector<1x128xf32> to vector<64x128xf32>
    %22 = arith.addf %20, %21 : vector<64x128xf32>
    %23 = arith.truncf %22 : vector<64x128xf32> to vector<64x128xbf16>
    %c0_9 = arith.constant 0 : index
    %c0_10 = arith.constant 0 : index
    %24 = vector.load %arg4[%c0_9, %c0_10] : memref<128x512xbf16, #tpu.memory_space<vmem>>, vector<128x512xbf16>
    %cst_11 = arith.constant dense<0.000000e+00> : vector<64x512xf32>
    %25 = tpu.matmul %23, %24, %cst_11 {dimension_numbers = #tpu.dot_dimension_numbers<[1], [0], [0], [1], [0, 0, 1, 1], [], []>} : vector<64x128xbf16>, vector<128x512xbf16>, vector<64x512xf32> -> vector<64x512xf32>
    %c0_12 = arith.constant 0 : index
    %c0_13 = arith.constant 0 : index
    %26 = vector.load %arg5[%c0_12, %c0_13] : memref<1x512xf32, #tpu.memory_space<vmem>>, vector<1x512xf32>
    %27 = vector.broadcast %26 : vector<1x512xf32> to vector<64x512xf32>
    %28 = arith.addf %25, %27 : vector<64x512xf32>
    %29 = arith.truncf %28 : vector<64x512xf32> to vector<64x512xbf16>
    %c0_14 = arith.constant 0 : index
    %c0_15 = arith.constant 0 : index
    %30 = vector.load %arg6[%c0_14, %c0_15] : memref<64x512xbf16, #tpu.memory_space<vmem>>, vector<64x512xbf16>
    tpu.vector_store %arg6[%c0_14, %c0_15], %29 {strides = array<i32>} : memref<64x512xbf16, #tpu.memory_space<vmem>>, vector<64x512xbf16>,
    return
  }
  func.func @transform_0(%arg0: i32) -> (i32, i32) {
    %c0_i32 = arith.constant 0 : i32
    %c0_i32_0 = arith.constant 0 : i32
    return %arg0, %c0_i32 : i32, i32
  }
  func.func @transform_1(%arg0: i32) -> (i32, i32) {
    %c0_i32 = arith.constant 0 : i32
    %c0_i32_0 = arith.constant 0 : i32
    %c0_i32_1 = arith.constant 0 : i32
    return %c0_i32, %c0_i32_0 : i32, i32
  }
  func.func @transform_2(%arg0: i32) -> (i32, i32) {
    %c0_i32 = arith.constant 0 : i32
    %c0_i32_0 = arith.constant 0 : i32
    %c0_i32_1 = arith.constant 0 : i32
    return %c0_i32, %c0_i32_0 : i32, i32
  }
  func.func @transform_3(%arg0: i32) -> (i32, i32) {
    %c0_i32 = arith.constant 0 : i32
    %c0_i32_0 = arith.constant 0 : i32
    %c0_i32_1 = arith.constant 0 : i32
    return %c0_i32, %c0_i32_0 : i32, i32
  }
  func.func @transform_4(%arg0: i32) -> (i32, i32) {
    %c0_i32 = arith.constant 0 : i32
    %c0_i32_0 = arith.constant 0 : i32
    %c0_i32_1 = arith.constant 0 : i32
    return %c0_i32, %c0_i32_0 : i32, i32
  }
  func.func @transform_5(%arg0: i32) -> (i32, i32) {
    %c0_i32 = arith.constant 0 : i32
    %c0_i32_0 = arith.constant 0 : i32
    return %arg0, %c0_i32 : i32, i32
  }
}

module attributes {stable_mosaic.version = 11 : i64} {
  func.func @_dwconv_mlp_kernel(%arg0: i32, %arg1: i32, %arg2: memref<1x8x8x256xbf16, #tpu.memory_space<vmem>>, %arg3: memref<9x256xf32, #tpu.memory_space<vmem>>, %arg4: memref<1x256xf32, #tpu.memory_space<vmem>>, %arg5: memref<256x128xbf16, #tpu.memory_space<vmem>>, %arg6: memref<1x128xf32, #tpu.memory_space<vmem>>, %arg7: memref<1x64x128xf32, #tpu.memory_space<vmem>>, %arg8: memref<1x64x128xf32, #tpu.memory_space<vmem>>, %arg9: memref<10x17x256xf32, #tpu.memory_space<vmem>>, %arg10: memref<64x256xbf16, #tpu.memory_space<vmem>>, %arg11: memref<64x128xf32, #tpu.memory_space<vmem>>) attributes {dimension_semantics = [#tpu.dimension_semantics<parallel>, #tpu.dimension_semantics<arbitrary>], iteration_bounds = array<i64: 2, 2>, scalar_prefetch = 0 : i64, scratch_operands = 3 : i64, tpu.core_type = #tpu.core_type<tc>, window_params = [{transform_indices = @transform_0, window_bounds = array<i64: 1, 8, 8, 256>}, {transform_indices = @transform_1, window_bounds = array<i64: 9, 256>}, {transform_indices = @transform_2, window_bounds = array<i64: 1, 256>}, {transform_indices = @transform_3, window_bounds = array<i64: 256, 128>}, {pipeline_mode = #tpu.pipeline_mode<synchronous>, transform_indices = @transform_4, window_bounds = array<i64: 1, 128>}, {transform_indices = @transform_5, window_bounds = array<i64: 1, 64, 128>}, {transform_indices = @transform_6, window_bounds = array<i64: 1, 64, 128>}]} {
    %c0_i32 = arith.constant 0 : i32
    %0 = arith.cmpi eq, %arg1, %c0_i32 : i32
    %1 = arith.extui %0 : i1 to i32
    %c0_i32_0 = arith.constant 0 : i32
    %2 = arith.cmpi ne, %1, %c0_i32_0 : i32
    scf.if %2 {
      %cst_90 = arith.constant 0.000000e+00 : f32
      %172 = vector.broadcast %cst_90 : f32 to vector<10x17x256xf32>
      %c0_91 = arith.constant 0 : index
      %c0_92 = arith.constant 0 : index
      %c0_93 = arith.constant 0 : index
      %173 = vector.load %arg9[%c0_91, %c0_92, %c0_93] : memref<10x17x256xf32, #tpu.memory_space<vmem>>, vector<10x17x256xf32>
      tpu.vector_store %arg9[%c0_91, %c0_92, %c0_93], %172 {strides = array<i32>} : memref<10x17x256xf32, #tpu.memory_space<vmem>>, vector<10x17x256xf32>,
      %cst_94 = arith.constant 0.000000e+00 : f32
      %174 = vector.broadcast %cst_94 : f32 to vector<64x128xf32>
      %c0_95 = arith.constant 0 : index
      %c0_96 = arith.constant 0 : index
      %175 = vector.load %arg11[%c0_95, %c0_96] : memref<64x128xf32, #tpu.memory_space<vmem>>, vector<64x128xf32>
      tpu.vector_store %arg11[%c0_95, %c0_96], %174 {strides = array<i32>} : memref<64x128xf32, #tpu.memory_space<vmem>>, vector<64x128xf32>,
    } else {
    }
    %c0 = arith.constant 0 : index
    %c0_1 = arith.constant 0 : index
    %c0_2 = arith.constant 0 : index
    %c0_3 = arith.constant 0 : index
    %3 = vector.load %arg2[%c0, %c0_1, %c0_2, %c0_3] : memref<1x8x8x256xbf16, #tpu.memory_space<vmem>>, vector<1x8x8x256xbf16>
    %4 = vector.shape_cast %3 : vector<1x8x8x256xbf16> to vector<8x8x256xbf16>
    %5 = arith.extf %4 : vector<8x8x256xbf16> to vector<8x8x256xf32>
    %c1 = arith.constant 1 : index
    %c8 = arith.constant 8 : index
    %c0_4 = arith.constant 0 : index
    %6 = vector.load %arg9[%c1, %c8, %c0_4] : memref<10x17x256xf32, #tpu.memory_space<vmem>>, vector<8x8x256xf32>
    tpu.vector_store %arg9[%c1, %c8, %c0_4], %5 {strides = array<i32>} : memref<10x17x256xf32, #tpu.memory_space<vmem>>, vector<8x8x256xf32>,
    %c0_5 = arith.constant 0 : index
    %c0_6 = arith.constant 0 : index
    %7 = vector.load %arg3[%c0_5, %c0_6] : memref<9x256xf32, #tpu.memory_space<vmem>>, vector<9x256xf32>
    %cst = arith.constant 0.000000e+00 : f32
    %8 = vector.broadcast %cst : f32 to vector<4x8x256xf32>
    %c0_7 = arith.constant 0 : index
    %c7 = arith.constant 7 : index
    %c0_8 = arith.constant 0 : index
    %9 = vector.load %arg9[%c0_7, %c7, %c0_8] : memref<10x17x256xf32, #tpu.memory_space<vmem>>, vector<4x8x256xf32>
    %10 = vector.extract_strided_slice %7 {offsets = [0, 0], sizes = [1, 256], strides = [1, 1]} : vector<9x256xf32> to vector<1x256xf32>
    %11 = vector.shape_cast %10 : vector<1x256xf32> to vector<1x1x256xf32>
    %12 = vector.broadcast %11 : vector<1x1x256xf32> to vector<4x8x256xf32>
    %13 = arith.mulf %9, %12 : vector<4x8x256xf32>
    %14 = arith.addf %8, %13 : vector<4x8x256xf32>
    %c0_9 = arith.constant 0 : index
    %c8_10 = arith.constant 8 : index
    %c0_11 = arith.constant 0 : index
    %15 = vector.load %arg9[%c0_9, %c8_10, %c0_11] : memref<10x17x256xf32, #tpu.memory_space<vmem>>, vector<4x8x256xf32>
    %16 = vector.extract_strided_slice %7 {offsets = [1, 0], sizes = [1, 256], strides = [1, 1]} : vector<9x256xf32> to vector<1x256xf32>
    %17 = vector.shape_cast %16 : vector<1x256xf32> to vector<1x1x256xf32>
    %18 = vector.broadcast %17 : vector<1x1x256xf32> to vector<4x8x256xf32>
    %19 = arith.mulf %15, %18 : vector<4x8x256xf32>
    %20 = arith.addf %14, %19 : vector<4x8x256xf32>
    %c0_12 = arith.constant 0 : index
    %c9 = arith.constant 9 : index
    %c0_13 = arith.constant 0 : index
    %21 = vector.load %arg9[%c0_12, %c9, %c0_13] : memref<10x17x256xf32, #tpu.memory_space<vmem>>, vector<4x8x256xf32>
    %22 = vector.extract_strided_slice %7 {offsets = [2, 0], sizes = [1, 256], strides = [1, 1]} : vector<9x256xf32> to vector<1x256xf32>
    %23 = vector.shape_cast %22 : vector<1x256xf32> to vector<1x1x256xf32>
    %24 = vector.broadcast %23 : vector<1x1x256xf32> to vector<4x8x256xf32>
    %25 = arith.mulf %21, %24 : vector<4x8x256xf32>
    %26 = arith.addf %20, %25 : vector<4x8x256xf32>
    %c1_14 = arith.constant 1 : index
    %c7_15 = arith.constant 7 : index
    %c0_16 = arith.constant 0 : index
    %27 = vector.load %arg9[%c1_14, %c7_15, %c0_16] : memref<10x17x256xf32, #tpu.memory_space<vmem>>, vector<4x8x256xf32>
    %28 = vector.extract_strided_slice %7 {offsets = [3, 0], sizes = [1, 256], strides = [1, 1]} : vector<9x256xf32> to vector<1x256xf32>
    %29 = vector.shape_cast %28 : vector<1x256xf32> to vector<1x1x256xf32>
    %30 = vector.broadcast %29 : vector<1x1x256xf32> to vector<4x8x256xf32>
    %31 = arith.mulf %27, %30 : vector<4x8x256xf32>
    %32 = arith.addf %26, %31 : vector<4x8x256xf32>
    %c1_17 = arith.constant 1 : index
    %c8_18 = arith.constant 8 : index
    %c0_19 = arith.constant 0 : index
    %33 = vector.load %arg9[%c1_17, %c8_18, %c0_19] : memref<10x17x256xf32, #tpu.memory_space<vmem>>, vector<4x8x256xf32>
    %34 = vector.extract_strided_slice %7 {offsets = [4, 0], sizes = [1, 256], strides = [1, 1]} : vector<9x256xf32> to vector<1x256xf32>
    %35 = vector.shape_cast %34 : vector<1x256xf32> to vector<1x1x256xf32>
    %36 = vector.broadcast %35 : vector<1x1x256xf32> to vector<4x8x256xf32>
    %37 = arith.mulf %33, %36 : vector<4x8x256xf32>
    %38 = arith.addf %32, %37 : vector<4x8x256xf32>
    %c1_20 = arith.constant 1 : index
    %c9_21 = arith.constant 9 : index
    %c0_22 = arith.constant 0 : index
    %39 = vector.load %arg9[%c1_20, %c9_21, %c0_22] : memref<10x17x256xf32, #tpu.memory_space<vmem>>, vector<4x8x256xf32>
    %40 = vector.extract_strided_slice %7 {offsets = [5, 0], sizes = [1, 256], strides = [1, 1]} : vector<9x256xf32> to vector<1x256xf32>
    %41 = vector.shape_cast %40 : vector<1x256xf32> to vector<1x1x256xf32>
    %42 = vector.broadcast %41 : vector<1x1x256xf32> to vector<4x8x256xf32>
    %43 = arith.mulf %39, %42 : vector<4x8x256xf32>
    %44 = arith.addf %38, %43 : vector<4x8x256xf32>
    %c2 = arith.constant 2 : index
    %c7_23 = arith.constant 7 : index
    %c0_24 = arith.constant 0 : index
    %45 = vector.load %arg9[%c2, %c7_23, %c0_24] : memref<10x17x256xf32, #tpu.memory_space<vmem>>, vector<4x8x256xf32>
    %46 = vector.extract_strided_slice %7 {offsets = [6, 0], sizes = [1, 256], strides = [1, 1]} : vector<9x256xf32> to vector<1x256xf32>
    %47 = vector.shape_cast %46 : vector<1x256xf32> to vector<1x1x256xf32>
    %48 = vector.broadcast %47 : vector<1x1x256xf32> to vector<4x8x256xf32>
    %49 = arith.mulf %45, %48 : vector<4x8x256xf32>
    %50 = arith.addf %44, %49 : vector<4x8x256xf32>
    %c2_25 = arith.constant 2 : index
    %c8_26 = arith.constant 8 : index
    %c0_27 = arith.constant 0 : index
    %51 = vector.load %arg9[%c2_25, %c8_26, %c0_27] : memref<10x17x256xf32, #tpu.memory_space<vmem>>, vector<4x8x256xf32>
    %52 = vector.extract_strided_slice %7 {offsets = [7, 0], sizes = [1, 256], strides = [1, 1]} : vector<9x256xf32> to vector<1x256xf32>
    %53 = vector.shape_cast %52 : vector<1x256xf32> to vector<1x1x256xf32>
    %54 = vector.broadcast %53 : vector<1x1x256xf32> to vector<4x8x256xf32>
    %55 = arith.mulf %51, %54 : vector<4x8x256xf32>
    %56 = arith.addf %50, %55 : vector<4x8x256xf32>
    %c2_28 = arith.constant 2 : index
    %c9_29 = arith.constant 9 : index
    %c0_30 = arith.constant 0 : index
    %57 = vector.load %arg9[%c2_28, %c9_29, %c0_30] : memref<10x17x256xf32, #tpu.memory_space<vmem>>, vector<4x8x256xf32>
    %58 = vector.extract_strided_slice %7 {offsets = [8, 0], sizes = [1, 256], strides = [1, 1]} : vector<9x256xf32> to vector<1x256xf32>
    %59 = vector.shape_cast %58 : vector<1x256xf32> to vector<1x1x256xf32>
    %60 = vector.broadcast %59 : vector<1x1x256xf32> to vector<4x8x256xf32>
    %61 = arith.mulf %57, %60 : vector<4x8x256xf32>
    %62 = arith.addf %56, %61 : vector<4x8x256xf32>
    %63 = vector.shape_cast %62 : vector<4x8x256xf32> to vector<32x256xf32>
    %c0_31 = arith.constant 0 : index
    %c0_32 = arith.constant 0 : index
    %64 = vector.load %arg4[%c0_31, %c0_32] : memref<1x256xf32, #tpu.memory_space<vmem>>, vector<1x256xf32>
    %65 = vector.broadcast %64 : vector<1x256xf32> to vector<32x256xf32>
    %66 = arith.addf %63, %65 : vector<32x256xf32>
    %67 = arith.mulf %66, %66 : vector<32x256xf32>
    %68 = arith.mulf %66, %67 : vector<32x256xf32>
    %cst_33 = arith.constant 4.471500e-02 : f32
    %69 = vector.broadcast %cst_33 : f32 to vector<32x256xf32>
    %70 = arith.mulf %69, %68 : vector<32x256xf32>
    %71 = arith.addf %66, %70 : vector<32x256xf32>
    %cst_34 = arith.constant 0.797884583 : f32
    %72 = vector.broadcast %cst_34 : f32 to vector<32x256xf32>
    %73 = arith.mulf %72, %71 : vector<32x256xf32>
    %74 = math.tanh %73 : vector<32x256xf32>
    %cst_35 = arith.constant 1.000000e+00 : f32
    %75 = vector.broadcast %cst_35 : f32 to vector<32x256xf32>
    %76 = arith.addf %75, %74 : vector<32x256xf32>
    %cst_36 = arith.constant 5.000000e-01 : f32
    %77 = vector.broadcast %cst_36 : f32 to vector<32x256xf32>
    %78 = arith.mulf %77, %76 : vector<32x256xf32>
    %79 = arith.mulf %66, %78 : vector<32x256xf32>
    %80 = arith.truncf %79 : vector<32x256xf32> to vector<32x256xbf16>
    %c0_37 = arith.constant 0 : index
    %c0_38 = arith.constant 0 : index
    %81 = vector.load %arg10[%c0_37, %c0_38] : memref<64x256xbf16, #tpu.memory_space<vmem>>, vector<32x256xbf16>
    tpu.vector_store %arg10[%c0_37, %c0_38], %80 {strides = array<i32>} : memref<64x256xbf16, #tpu.memory_space<vmem>>, vector<32x256xbf16>,
    %cst_39 = arith.constant 0.000000e+00 : f32
    %82 = vector.broadcast %cst_39 : f32 to vector<4x8x256xf32>
    %c4 = arith.constant 4 : index
    %c7_40 = arith.constant 7 : index
    %c0_41 = arith.constant 0 : index
    %83 = vector.load %arg9[%c4, %c7_40, %c0_41] : memref<10x17x256xf32, #tpu.memory_space<vmem>>, vector<4x8x256xf32>
    %84 = vector.extract_strided_slice %7 {offsets = [0, 0], sizes = [1, 256], strides = [1, 1]} : vector<9x256xf32> to vector<1x256xf32>
    %85 = vector.shape_cast %84 : vector<1x256xf32> to vector<1x1x256xf32>
    %86 = vector.broadcast %85 : vector<1x1x256xf32> to vector<4x8x256xf32>
    %87 = arith.mulf %83, %86 : vector<4x8x256xf32>
    %88 = arith.addf %82, %87 : vector<4x8x256xf32>
    %c4_42 = arith.constant 4 : index
    %c8_43 = arith.constant 8 : index
    %c0_44 = arith.constant 0 : index
    %89 = vector.load %arg9[%c4_42, %c8_43, %c0_44] : memref<10x17x256xf32, #tpu.memory_space<vmem>>, vector<4x8x256xf32>
    %90 = vector.extract_strided_slice %7 {offsets = [1, 0], sizes = [1, 256], strides = [1, 1]} : vector<9x256xf32> to vector<1x256xf32>
    %91 = vector.shape_cast %90 : vector<1x256xf32> to vector<1x1x256xf32>
    %92 = vector.broadcast %91 : vector<1x1x256xf32> to vector<4x8x256xf32>
    %93 = arith.mulf %89, %92 : vector<4x8x256xf32>
    %94 = arith.addf %88, %93 : vector<4x8x256xf32>
    %c4_45 = arith.constant 4 : index
    %c9_46 = arith.constant 9 : index
    %c0_47 = arith.constant 0 : index
    %95 = vector.load %arg9[%c4_45, %c9_46, %c0_47] : memref<10x17x256xf32, #tpu.memory_space<vmem>>, vector<4x8x256xf32>
    %96 = vector.extract_strided_slice %7 {offsets = [2, 0], sizes = [1, 256], strides = [1, 1]} : vector<9x256xf32> to vector<1x256xf32>
    %97 = vector.shape_cast %96 : vector<1x256xf32> to vector<1x1x256xf32>
    %98 = vector.broadcast %97 : vector<1x1x256xf32> to vector<4x8x256xf32>
    %99 = arith.mulf %95, %98 : vector<4x8x256xf32>
    %100 = arith.addf %94, %99 : vector<4x8x256xf32>
    %c5 = arith.constant 5 : index
    %c7_48 = arith.constant 7 : index
    %c0_49 = arith.constant 0 : index
    %101 = vector.load %arg9[%c5, %c7_48, %c0_49] : memref<10x17x256xf32, #tpu.memory_space<vmem>>, vector<4x8x256xf32>
    %102 = vector.extract_strided_slice %7 {offsets = [3, 0], sizes = [1, 256], strides = [1, 1]} : vector<9x256xf32> to vector<1x256xf32>
    %103 = vector.shape_cast %102 : vector<1x256xf32> to vector<1x1x256xf32>
    %104 = vector.broadcast %103 : vector<1x1x256xf32> to vector<4x8x256xf32>
    %105 = arith.mulf %101, %104 : vector<4x8x256xf32>
    %106 = arith.addf %100, %105 : vector<4x8x256xf32>
    %c5_50 = arith.constant 5 : index
    %c8_51 = arith.constant 8 : index
    %c0_52 = arith.constant 0 : index
    %107 = vector.load %arg9[%c5_50, %c8_51, %c0_52] : memref<10x17x256xf32, #tpu.memory_space<vmem>>, vector<4x8x256xf32>
    %108 = vector.extract_strided_slice %7 {offsets = [4, 0], sizes = [1, 256], strides = [1, 1]} : vector<9x256xf32> to vector<1x256xf32>
    %109 = vector.shape_cast %108 : vector<1x256xf32> to vector<1x1x256xf32>
    %110 = vector.broadcast %109 : vector<1x1x256xf32> to vector<4x8x256xf32>
    %111 = arith.mulf %107, %110 : vector<4x8x256xf32>
    %112 = arith.addf %106, %111 : vector<4x8x256xf32>
    %c5_53 = arith.constant 5 : index
    %c9_54 = arith.constant 9 : index
    %c0_55 = arith.constant 0 : index
    %113 = vector.load %arg9[%c5_53, %c9_54, %c0_55] : memref<10x17x256xf32, #tpu.memory_space<vmem>>, vector<4x8x256xf32>
    %114 = vector.extract_strided_slice %7 {offsets = [5, 0], sizes = [1, 256], strides = [1, 1]} : vector<9x256xf32> to vector<1x256xf32>
    %115 = vector.shape_cast %114 : vector<1x256xf32> to vector<1x1x256xf32>
    %116 = vector.broadcast %115 : vector<1x1x256xf32> to vector<4x8x256xf32>
    %117 = arith.mulf %113, %116 : vector<4x8x256xf32>
    %118 = arith.addf %112, %117 : vector<4x8x256xf32>
    %c6 = arith.constant 6 : index
    %c7_56 = arith.constant 7 : index
    %c0_57 = arith.constant 0 : index
    %119 = vector.load %arg9[%c6, %c7_56, %c0_57] : memref<10x17x256xf32, #tpu.memory_space<vmem>>, vector<4x8x256xf32>
    %120 = vector.extract_strided_slice %7 {offsets = [6, 0], sizes = [1, 256], strides = [1, 1]} : vector<9x256xf32> to vector<1x256xf32>
    %121 = vector.shape_cast %120 : vector<1x256xf32> to vector<1x1x256xf32>
    %122 = vector.broadcast %121 : vector<1x1x256xf32> to vector<4x8x256xf32>
    %123 = arith.mulf %119, %122 : vector<4x8x256xf32>
    %124 = arith.addf %118, %123 : vector<4x8x256xf32>
    %c6_58 = arith.constant 6 : index
    %c8_59 = arith.constant 8 : index
    %c0_60 = arith.constant 0 : index
    %125 = vector.load %arg9[%c6_58, %c8_59, %c0_60] : memref<10x17x256xf32, #tpu.memory_space<vmem>>, vector<4x8x256xf32>
    %126 = vector.extract_strided_slice %7 {offsets = [7, 0], sizes = [1, 256], strides = [1, 1]} : vector<9x256xf32> to vector<1x256xf32>
    %127 = vector.shape_cast %126 : vector<1x256xf32> to vector<1x1x256xf32>
    %128 = vector.broadcast %127 : vector<1x1x256xf32> to vector<4x8x256xf32>
    %129 = arith.mulf %125, %128 : vector<4x8x256xf32>
    %130 = arith.addf %124, %129 : vector<4x8x256xf32>
    %c6_61 = arith.constant 6 : index
    %c9_62 = arith.constant 9 : index
    %c0_63 = arith.constant 0 : index
    %131 = vector.load %arg9[%c6_61, %c9_62, %c0_63] : memref<10x17x256xf32, #tpu.memory_space<vmem>>, vector<4x8x256xf32>
    %132 = vector.extract_strided_slice %7 {offsets = [8, 0], sizes = [1, 256], strides = [1, 1]} : vector<9x256xf32> to vector<1x256xf32>
    %133 = vector.shape_cast %132 : vector<1x256xf32> to vector<1x1x256xf32>
    %134 = vector.broadcast %133 : vector<1x1x256xf32> to vector<4x8x256xf32>
    %135 = arith.mulf %131, %134 : vector<4x8x256xf32>
    %136 = arith.addf %130, %135 : vector<4x8x256xf32>
    %137 = vector.shape_cast %136 : vector<4x8x256xf32> to vector<32x256xf32>
    %c0_64 = arith.constant 0 : index
    %c0_65 = arith.constant 0 : index
    %138 = vector.load %arg4[%c0_64, %c0_65] : memref<1x256xf32, #tpu.memory_space<vmem>>, vector<1x256xf32>
    %139 = vector.broadcast %138 : vector<1x256xf32> to vector<32x256xf32>
    %140 = arith.addf %137, %139 : vector<32x256xf32>
    %141 = arith.mulf %140, %140 : vector<32x256xf32>
    %142 = arith.mulf %140, %141 : vector<32x256xf32>
    %cst_66 = arith.constant 4.471500e-02 : f32
    %143 = vector.broadcast %cst_66 : f32 to vector<32x256xf32>
    %144 = arith.mulf %143, %142 : vector<32x256xf32>
    %145 = arith.addf %140, %144 : vector<32x256xf32>
    %cst_67 = arith.constant 0.797884583 : f32
    %146 = vector.broadcast %cst_67 : f32 to vector<32x256xf32>
    %147 = arith.mulf %146, %145 : vector<32x256xf32>
    %148 = math.tanh %147 : vector<32x256xf32>
    %cst_68 = arith.constant 1.000000e+00 : f32
    %149 = vector.broadcast %cst_68 : f32 to vector<32x256xf32>
    %150 = arith.addf %149, %148 : vector<32x256xf32>
    %cst_69 = arith.constant 5.000000e-01 : f32
    %151 = vector.broadcast %cst_69 : f32 to vector<32x256xf32>
    %152 = arith.mulf %151, %150 : vector<32x256xf32>
    %153 = arith.mulf %140, %152 : vector<32x256xf32>
    %154 = arith.truncf %153 : vector<32x256xf32> to vector<32x256xbf16>
    %c32 = arith.constant 32 : index
    %c0_70 = arith.constant 0 : index
    %155 = vector.load %arg10[%c32, %c0_70] : memref<64x256xbf16, #tpu.memory_space<vmem>>, vector<32x256xbf16>
    tpu.vector_store %arg10[%c32, %c0_70], %154 {strides = array<i32>} : memref<64x256xbf16, #tpu.memory_space<vmem>>, vector<32x256xbf16>,
    %c0_71 = arith.constant 0 : index
    %c0_72 = arith.constant 0 : index
    %156 = vector.load %arg11[%c0_71, %c0_72] : memref<64x128xf32, #tpu.memory_space<vmem>>, vector<64x128xf32>
    %c0_73 = arith.constant 0 : index
    %c0_74 = arith.constant 0 : index
    %157 = vector.load %arg10[%c0_73, %c0_74] : memref<64x256xbf16, #tpu.memory_space<vmem>>, vector<64x256xbf16>
    %c0_75 = arith.constant 0 : index
    %c0_76 = arith.constant 0 : index
    %158 = vector.load %arg5[%c0_75, %c0_76] : memref<256x128xbf16, #tpu.memory_space<vmem>>, vector<256x128xbf16>
    %cst_77 = arith.constant dense<0.000000e+00> : vector<64x128xf32>
    %159 = tpu.matmul %157, %158, %cst_77 {dimension_numbers = #tpu.dot_dimension_numbers<[1], [0], [0], [1], [0, 0, 1, 1], [], []>} : vector<64x256xbf16>, vector<256x128xbf16>, vector<64x128xf32> -> vector<64x128xf32>
    %160 = arith.addf %156, %159 : vector<64x128xf32>
    %c0_78 = arith.constant 0 : index
    %c0_79 = arith.constant 0 : index
    %161 = vector.load %arg11[%c0_78, %c0_79] : memref<64x128xf32, #tpu.memory_space<vmem>>, vector<64x128xf32>
    tpu.vector_store %arg11[%c0_78, %c0_79], %160 {strides = array<i32>} : memref<64x128xf32, #tpu.memory_space<vmem>>, vector<64x128xf32>,
    %c0_80 = arith.constant 0 : index
    %c0_81 = arith.constant 0 : index
    %162 = vector.load %arg11[%c0_80, %c0_81] : memref<64x128xf32, #tpu.memory_space<vmem>>, vector<64x128xf32>
    %c0_82 = arith.constant 0 : index
    %c0_83 = arith.constant 0 : index
    %163 = vector.load %arg6[%c0_82, %c0_83] : memref<1x128xf32, #tpu.memory_space<vmem>>, vector<1x128xf32>
    %164 = vector.broadcast %163 : vector<1x128xf32> to vector<64x128xf32>
    %165 = arith.addf %162, %164 : vector<64x128xf32>
    %c0_84 = arith.constant 0 : index
    %c0_85 = arith.constant 0 : index
    %c0_86 = arith.constant 0 : index
    %166 = vector.load %arg7[%c0_84, %c0_85, %c0_86] : memref<1x64x128xf32, #tpu.memory_space<vmem>>, vector<1x64x128xf32>
    %167 = vector.shape_cast %166 : vector<1x64x128xf32> to vector<64x128xf32>
    %168 = arith.addf %165, %167 : vector<64x128xf32>
    %c0_87 = arith.constant 0 : index
    %c0_88 = arith.constant 0 : index
    %c0_89 = arith.constant 0 : index
    %169 = vector.load %arg8[%c0_87, %c0_88, %c0_89] : memref<1x64x128xf32, #tpu.memory_space<vmem>>, vector<1x64x128xf32>
    %170 = vector.shape_cast %169 : vector<1x64x128xf32> to vector<64x128xf32>
    %171 = vector.shape_cast %168 : vector<64x128xf32> to vector<1x64x128xf32>
    tpu.vector_store %arg8[%c0_87, %c0_88, %c0_89], %171 {strides = array<i32>} : memref<1x64x128xf32, #tpu.memory_space<vmem>>, vector<1x64x128xf32>,
    return
  }
  func.func @transform_0(%arg0: i32, %arg1: i32) -> (i32, i32, i32, i32) {
    %c0_i32 = arith.constant 0 : i32
    %c0_i32_0 = arith.constant 0 : i32
    %c0_i32_1 = arith.constant 0 : i32
    return %arg0, %c0_i32, %c0_i32_0, %arg1 : i32, i32, i32, i32
  }
  func.func @transform_1(%arg0: i32, %arg1: i32) -> (i32, i32) {
    %c0_i32 = arith.constant 0 : i32
    %c0_i32_0 = arith.constant 0 : i32
    return %c0_i32, %arg1 : i32, i32
  }
  func.func @transform_2(%arg0: i32, %arg1: i32) -> (i32, i32) {
    %c0_i32 = arith.constant 0 : i32
    %c0_i32_0 = arith.constant 0 : i32
    return %c0_i32, %arg1 : i32, i32
  }
  func.func @transform_3(%arg0: i32, %arg1: i32) -> (i32, i32) {
    %c0_i32 = arith.constant 0 : i32
    %c0_i32_0 = arith.constant 0 : i32
    return %arg1, %c0_i32 : i32, i32
  }
  func.func @transform_4(%arg0: i32, %arg1: i32) -> (i32, i32) {
    %c0_i32 = arith.constant 0 : i32
    %c0_i32_0 = arith.constant 0 : i32
    %c0_i32_1 = arith.constant 0 : i32
    return %c0_i32, %c0_i32_0 : i32, i32
  }
  func.func @transform_5(%arg0: i32, %arg1: i32) -> (i32, i32, i32) {
    %c0_i32 = arith.constant 0 : i32
    %c0_i32_0 = arith.constant 0 : i32
    %c0_i32_1 = arith.constant 0 : i32
    return %arg0, %c0_i32, %c0_i32_0 : i32, i32, i32
  }
  func.func @transform_6(%arg0: i32, %arg1: i32) -> (i32, i32, i32) {
    %c0_i32 = arith.constant 0 : i32
    %c0_i32_0 = arith.constant 0 : i32
    %c0_i32_1 = arith.constant 0 : i32
    return %arg0, %c0_i32, %c0_i32_0 : i32, i32, i32
  }
}

module attributes {stable_mosaic.version = 11 : i64} {
  func.func @_ln_qkv_kernel(%arg0: i32, %arg1: memref<64x128xf32, #tpu.memory_space<vmem>>, %arg2: memref<1x128xf32, #tpu.memory_space<vmem>>, %arg3: memref<1x128xf32, #tpu.memory_space<vmem>>, %arg4: memref<128x128xbf16, #tpu.memory_space<vmem>>, %arg5: memref<1x128xf32, #tpu.memory_space<vmem>>, %arg6: memref<128x256xbf16, #tpu.memory_space<vmem>>, %arg7: memref<1x256xf32, #tpu.memory_space<vmem>>, %arg8: memref<64x128xbf16, #tpu.memory_space<vmem>>, %arg9: memref<64x256xbf16, #tpu.memory_space<vmem>>) attributes {dimension_semantics = [#tpu.dimension_semantics<parallel>], iteration_bounds = array<i64: 2>, scalar_prefetch = 0 : i64, scratch_operands = 0 : i64, tpu.core_type = #tpu.core_type<tc>, window_params = [{transform_indices = @transform_0, window_bounds = array<i64: 64, 128>}, {pipeline_mode = #tpu.pipeline_mode<synchronous>, transform_indices = @transform_1, window_bounds = array<i64: 1, 128>}, {pipeline_mode = #tpu.pipeline_mode<synchronous>, transform_indices = @transform_2, window_bounds = array<i64: 1, 128>}, {pipeline_mode = #tpu.pipeline_mode<synchronous>, transform_indices = @transform_3, window_bounds = array<i64: 128, 128>}, {pipeline_mode = #tpu.pipeline_mode<synchronous>, transform_indices = @transform_4, window_bounds = array<i64: 1, 128>}, {pipeline_mode = #tpu.pipeline_mode<synchronous>, transform_indices = @transform_5, window_bounds = array<i64: 128, 256>}, {pipeline_mode = #tpu.pipeline_mode<synchronous>, transform_indices = @transform_6, window_bounds = array<i64: 1, 256>}, {transform_indices = @transform_7, window_bounds = array<i64: 64, 128>}, {transform_indices = @transform_8, window_bounds = array<i64: 64, 256>}]} {
    %c0 = arith.constant 0 : index
    %c0_0 = arith.constant 0 : index
    %0 = vector.load %arg1[%c0, %c0_0] : memref<64x128xf32, #tpu.memory_space<vmem>>, vector<64x128xf32>
    %c0_1 = arith.constant 0 : index
    %c0_2 = arith.constant 0 : index
    %1 = vector.load %arg2[%c0_1, %c0_2] : memref<1x128xf32, #tpu.memory_space<vmem>>, vector<1x128xf32>
    %c0_3 = arith.constant 0 : index
    %c0_4 = arith.constant 0 : index
    %2 = vector.load %arg3[%c0_3, %c0_4] : memref<1x128xf32, #tpu.memory_space<vmem>>, vector<1x128xf32>
    %cst = arith.constant dense<0.000000e+00> : vector<64xf32>
    %3 = vector.multi_reduction <add>, %0, %cst [1] : vector<64x128xf32> to vector<64xf32>
    %4 = vector.shape_cast %3 : vector<64xf32> to vector<64x1xf32>
    %cst_5 = arith.constant 1.280000e+02 : f32
    %5 = vector.broadcast %cst_5 : f32 to vector<64x1xf32>
    %6 = arith.divf %4, %5 : vector<64x1xf32>
    %7 = vector.broadcast %6 : vector<64x1xf32> to vector<64x128xf32>
    %8 = arith.subf %0, %7 : vector<64x128xf32>
    %9 = arith.mulf %8, %8 : vector<64x128xf32>
    %cst_6 = arith.constant dense<0.000000e+00> : vector<64xf32>
    %10 = vector.multi_reduction <add>, %9, %cst_6 [1] : vector<64x128xf32> to vector<64xf32>
    %11 = vector.shape_cast %10 : vector<64xf32> to vector<64x1xf32>
    %cst_7 = arith.constant 1.280000e+02 : f32
    %12 = vector.broadcast %cst_7 : f32 to vector<64x1xf32>
    %13 = arith.divf %11, %12 : vector<64x1xf32>
    %cst_8 = arith.constant 9.99999974E-6 : f32
    %14 = vector.broadcast %cst_8 : f32 to vector<64x1xf32>
    %15 = arith.addf %13, %14 : vector<64x1xf32>
    %16 = math.rsqrt %15 : vector<64x1xf32>
    %17 = vector.broadcast %16 : vector<64x1xf32> to vector<64x128xf32>
    %18 = arith.mulf %8, %17 : vector<64x128xf32>
    %19 = vector.broadcast %1 : vector<1x128xf32> to vector<64x128xf32>
    %20 = arith.mulf %18, %19 : vector<64x128xf32>
    %21 = vector.broadcast %2 : vector<1x128xf32> to vector<64x128xf32>
    %22 = arith.addf %20, %21 : vector<64x128xf32>
    %23 = arith.truncf %22 : vector<64x128xf32> to vector<64x128xbf16>
    %c0_9 = arith.constant 0 : index
    %c0_10 = arith.constant 0 : index
    %24 = vector.load %arg4[%c0_9, %c0_10] : memref<128x128xbf16, #tpu.memory_space<vmem>>, vector<128x128xbf16>
    %cst_11 = arith.constant dense<0.000000e+00> : vector<64x128xf32>
    %25 = tpu.matmul %23, %24, %cst_11 {dimension_numbers = #tpu.dot_dimension_numbers<[1], [0], [0], [1], [0, 0, 1, 1], [], []>} : vector<64x128xbf16>, vector<128x128xbf16>, vector<64x128xf32> -> vector<64x128xf32>
    %c0_12 = arith.constant 0 : index
    %c0_13 = arith.constant 0 : index
    %26 = vector.load %arg5[%c0_12, %c0_13] : memref<1x128xf32, #tpu.memory_space<vmem>>, vector<1x128xf32>
    %27 = vector.broadcast %26 : vector<1x128xf32> to vector<64x128xf32>
    %28 = arith.addf %25, %27 : vector<64x128xf32>
    %29 = arith.truncf %28 : vector<64x128xf32> to vector<64x128xbf16>
    %c0_14 = arith.constant 0 : index
    %c0_15 = arith.constant 0 : index
    %30 = vector.load %arg8[%c0_14, %c0_15] : memref<64x128xbf16, #tpu.memory_space<vmem>>, vector<64x128xbf16>
    tpu.vector_store %arg8[%c0_14, %c0_15], %29 {strides = array<i32>} : memref<64x128xbf16, #tpu.memory_space<vmem>>, vector<64x128xbf16>,
    %c0_16 = arith.constant 0 : index
    %c0_17 = arith.constant 0 : index
    %31 = vector.load %arg6[%c0_16, %c0_17] : memref<128x256xbf16, #tpu.memory_space<vmem>>, vector<128x256xbf16>
    %cst_18 = arith.constant dense<0.000000e+00> : vector<64x256xf32>
    %32 = tpu.matmul %23, %31, %cst_18 {dimension_numbers = #tpu.dot_dimension_numbers<[1], [0], [0], [1], [0, 0, 1, 1], [], []>} : vector<64x128xbf16>, vector<128x256xbf16>, vector<64x256xf32> -> vector<64x256xf32>
    %c0_19 = arith.constant 0 : index
    %c0_20 = arith.constant 0 : index
    %33 = vector.load %arg7[%c0_19, %c0_20] : memref<1x256xf32, #tpu.memory_space<vmem>>, vector<1x256xf32>
    %34 = vector.broadcast %33 : vector<1x256xf32> to vector<64x256xf32>
    %35 = arith.addf %32, %34 : vector<64x256xf32>
    %36 = arith.truncf %35 : vector<64x256xf32> to vector<64x256xbf16>
    %c0_21 = arith.constant 0 : index
    %c0_22 = arith.constant 0 : index
    %37 = vector.load %arg9[%c0_21, %c0_22] : memref<64x256xbf16, #tpu.memory_space<vmem>>, vector<64x256xbf16>
    tpu.vector_store %arg9[%c0_21, %c0_22], %36 {strides = array<i32>} : memref<64x256xbf16, #tpu.memory_space<vmem>>, vector<64x256xbf16>,
    return
  }
  func.func @transform_0(%arg0: i32) -> (i32, i32) {
    %c0_i32 = arith.constant 0 : i32
    %c0_i32_0 = arith.constant 0 : i32
    return %arg0, %c0_i32 : i32, i32
  }
  func.func @transform_1(%arg0: i32) -> (i32, i32) {
    %c0_i32 = arith.constant 0 : i32
    %c0_i32_0 = arith.constant 0 : i32
    %c0_i32_1 = arith.constant 0 : i32
    return %c0_i32, %c0_i32_0 : i32, i32
  }
  func.func @transform_2(%arg0: i32) -> (i32, i32) {
    %c0_i32 = arith.constant 0 : i32
    %c0_i32_0 = arith.constant 0 : i32
    %c0_i32_1 = arith.constant 0 : i32
    return %c0_i32, %c0_i32_0 : i32, i32
  }
  func.func @transform_3(%arg0: i32) -> (i32, i32) {
    %c0_i32 = arith.constant 0 : i32
    %c0_i32_0 = arith.constant 0 : i32
    %c0_i32_1 = arith.constant 0 : i32
    return %c0_i32, %c0_i32_0 : i32, i32
  }
  func.func @transform_4(%arg0: i32) -> (i32, i32) {
    %c0_i32 = arith.constant 0 : i32
    %c0_i32_0 = arith.constant 0 : i32
    %c0_i32_1 = arith.constant 0 : i32
    return %c0_i32, %c0_i32_0 : i32, i32
  }
  func.func @transform_5(%arg0: i32) -> (i32, i32) {
    %c0_i32 = arith.constant 0 : i32
    %c0_i32_0 = arith.constant 0 : i32
    %c0_i32_1 = arith.constant 0 : i32
    return %c0_i32, %c0_i32_0 : i32, i32
  }
  func.func @transform_6(%arg0: i32) -> (i32, i32) {
    %c0_i32 = arith.constant 0 : i32
    %c0_i32_0 = arith.constant 0 : i32
    %c0_i32_1 = arith.constant 0 : i32
    return %c0_i32, %c0_i32_0 : i32, i32
  }
  func.func @transform_7(%arg0: i32) -> (i32, i32) {
    %c0_i32 = arith.constant 0 : i32
    %c0_i32_0 = arith.constant 0 : i32
    return %arg0, %c0_i32 : i32, i32
  }
  func.func @transform_8(%arg0: i32) -> (i32, i32) {
    %c0_i32 = arith.constant 0 : i32
    %c0_i32_0 = arith.constant 0 : i32
    return %arg0, %c0_i32 : i32, i32
  }
}

module attributes {stable_mosaic.version = 11 : i64} {
  func.func @_attn_kernel(%arg0: i32, %arg1: i32, %arg2: memref<1x32x128xbf16, #tpu.memory_space<vmem>>, %arg3: memref<1x64x256xbf16, #tpu.memory_space<vmem>>, %arg4: memref<128x128xbf16, #tpu.memory_space<vmem>>, %arg5: memref<1x128xf32, #tpu.memory_space<vmem>>, %arg6: memref<1x32x128xf32, #tpu.memory_space<vmem>>, %arg7: memref<1x32x128xf32, #tpu.memory_space<vmem>>) attributes {dimension_semantics = [#tpu.dimension_semantics<parallel>, #tpu.dimension_semantics<parallel>], iteration_bounds = array<i64: 2, 2>, scalar_prefetch = 0 : i64, scratch_operands = 0 : i64, tpu.core_type = #tpu.core_type<tc>, window_params = [{transform_indices = @transform_0, window_bounds = array<i64: 1, 32, 128>}, {transform_indices = @transform_1, window_bounds = array<i64: 1, 64, 256>}, {pipeline_mode = #tpu.pipeline_mode<synchronous>, transform_indices = @transform_2, window_bounds = array<i64: 128, 128>}, {pipeline_mode = #tpu.pipeline_mode<synchronous>, transform_indices = @transform_3, window_bounds = array<i64: 1, 128>}, {transform_indices = @transform_4, window_bounds = array<i64: 1, 32, 128>}, {transform_indices = @transform_5, window_bounds = array<i64: 1, 32, 128>}]} {
    %c0 = arith.constant 0 : index
    %c0_0 = arith.constant 0 : index
    %c0_1 = arith.constant 0 : index
    %0 = vector.load %arg2[%c0, %c0_0, %c0_1] : memref<1x32x128xbf16, #tpu.memory_space<vmem>>, vector<1x32x128xbf16>
    %1 = vector.shape_cast %0 : vector<1x32x128xbf16> to vector<32x128xbf16>
    %c0_2 = arith.constant 0 : index
    %c0_3 = arith.constant 0 : index
    %c0_4 = arith.constant 0 : index
    %2 = vector.load %arg3[%c0_2, %c0_3, %c0_4] : memref<1x64x256xbf16, #tpu.memory_space<vmem>>, vector<1x64x256xbf16>
    %3 = vector.shape_cast %2 : vector<1x64x256xbf16> to vector<64x256xbf16>
    %4 = vector.extract_strided_slice %1 {offsets = [0, 0], sizes = [32, 64], strides = [1, 1]} : vector<32x128xbf16> to vector<32x64xbf16>
    %5 = vector.extract_strided_slice %3 {offsets = [0, 0], sizes = [64, 64], strides = [1, 1]} : vector<64x256xbf16> to vector<64x64xbf16>
    %6 = vector.extract_strided_slice %3 {offsets = [0, 128], sizes = [64, 64], strides = [1, 1]} : vector<64x256xbf16> to vector<64x64xbf16>
    %cst = arith.constant dense<0.000000e+00> : vector<32x64xf32>
    %7 = tpu.matmul %4, %5, %cst {dimension_numbers = #tpu.dot_dimension_numbers<[1], [1], [0], [0], [0, 0, 1, 0], [], []>} : vector<32x64xbf16>, vector<64x64xbf16>, vector<32x64xf32> -> vector<32x64xf32>
    %cst_5 = arith.constant dense<0xFF800000> : vector<32xf32>
    %8 = vector.multi_reduction <maximumf>, %7, %cst_5 [1] : vector<32x64xf32> to vector<32xf32>
    %9 = vector.shape_cast %8 : vector<32xf32> to vector<32x1xf32>
    %10 = vector.broadcast %9 : vector<32x1xf32> to vector<32x64xf32>
    %11 = arith.subf %7, %10 : vector<32x64xf32>
    %12 = math.exp %11 : vector<32x64xf32>
    %cst_6 = arith.constant dense<0.000000e+00> : vector<32xf32>
    %13 = vector.multi_reduction <add>, %12, %cst_6 [1] : vector<32x64xf32> to vector<32xf32>
    %14 = vector.shape_cast %13 : vector<32xf32> to vector<32x1xf32>
    %15 = tpu.reciprocal %14 {approx = true} : vector<32x1xf32> -> vector<32x1xf32>
    %16 = vector.broadcast %15 : vector<32x1xf32> to vector<32x64xf32>
    %17 = arith.mulf %12, %16 : vector<32x64xf32>
    %18 = arith.truncf %17 : vector<32x64xf32> to vector<32x64xbf16>
    %cst_7 = arith.constant dense<0.000000e+00> : vector<32x64xf32>
    %19 = tpu.matmul %18, %6, %cst_7 {dimension_numbers = #tpu.dot_dimension_numbers<[1], [0], [0], [1], [0, 0, 1, 1], [], []>} : vector<32x64xbf16>, vector<64x64xbf16>, vector<32x64xf32> -> vector<32x64xf32>
    %20 = vector.extract_strided_slice %1 {offsets = [0, 64], sizes = [32, 64], strides = [1, 1]} : vector<32x128xbf16> to vector<32x64xbf16>
    %21 = vector.extract_strided_slice %3 {offsets = [0, 64], sizes = [64, 64], strides = [1, 1]} : vector<64x256xbf16> to vector<64x64xbf16>
    %22 = vector.extract_strided_slice %3 {offsets = [0, 192], sizes = [64, 64], strides = [1, 1]} : vector<64x256xbf16> to vector<64x64xbf16>
    %cst_8 = arith.constant dense<0.000000e+00> : vector<32x64xf32>
    %23 = tpu.matmul %20, %21, %cst_8 {dimension_numbers = #tpu.dot_dimension_numbers<[1], [1], [0], [0], [0, 0, 1, 0], [], []>} : vector<32x64xbf16>, vector<64x64xbf16>, vector<32x64xf32> -> vector<32x64xf32>
    %cst_9 = arith.constant dense<0xFF800000> : vector<32xf32>
    %24 = vector.multi_reduction <maximumf>, %23, %cst_9 [1] : vector<32x64xf32> to vector<32xf32>
    %25 = vector.shape_cast %24 : vector<32xf32> to vector<32x1xf32>
    %26 = vector.broadcast %25 : vector<32x1xf32> to vector<32x64xf32>
    %27 = arith.subf %23, %26 : vector<32x64xf32>
    %28 = math.exp %27 : vector<32x64xf32>
    %cst_10 = arith.constant dense<0.000000e+00> : vector<32xf32>
    %29 = vector.multi_reduction <add>, %28, %cst_10 [1] : vector<32x64xf32> to vector<32xf32>
    %30 = vector.shape_cast %29 : vector<32xf32> to vector<32x1xf32>
    %31 = tpu.reciprocal %30 {approx = true} : vector<32x1xf32> -> vector<32x1xf32>
    %32 = vector.broadcast %31 : vector<32x1xf32> to vector<32x64xf32>
    %33 = arith.mulf %28, %32 : vector<32x64xf32>
    %34 = arith.truncf %33 : vector<32x64xf32> to vector<32x64xbf16>
    %cst_11 = arith.constant dense<0.000000e+00> : vector<32x64xf32>
    %35 = tpu.matmul %34, %22, %cst_11 {dimension_numbers = #tpu.dot_dimension_numbers<[1], [0], [0], [1], [0, 0, 1, 1], [], []>} : vector<32x64xbf16>, vector<64x64xbf16>, vector<32x64xf32> -> vector<32x64xf32>
    %36 = tpu.concatenate %19, %35 in 1 : vector<32x64xf32>, vector<32x64xf32> -> vector<32x128xf32>
    %37 = arith.truncf %36 : vector<32x128xf32> to vector<32x128xbf16>
    %c0_12 = arith.constant 0 : index
    %c0_13 = arith.constant 0 : index
    %38 = vector.load %arg4[%c0_12, %c0_13] : memref<128x128xbf16, #tpu.memory_space<vmem>>, vector<128x128xbf16>
    %cst_14 = arith.constant dense<0.000000e+00> : vector<32x128xf32>
    %39 = tpu.matmul %37, %38, %cst_14 {dimension_numbers = #tpu.dot_dimension_numbers<[1], [0], [0], [1], [0, 0, 1, 1], [], []>} : vector<32x128xbf16>, vector<128x128xbf16>, vector<32x128xf32> -> vector<32x128xf32>
    %c0_15 = arith.constant 0 : index
    %c0_16 = arith.constant 0 : index
    %40 = vector.load %arg5[%c0_15, %c0_16] : memref<1x128xf32, #tpu.memory_space<vmem>>, vector<1x128xf32>
    %41 = vector.broadcast %40 : vector<1x128xf32> to vector<32x128xf32>
    %42 = arith.addf %39, %41 : vector<32x128xf32>
    %c0_17 = arith.constant 0 : index
    %c0_18 = arith.constant 0 : index
    %c0_19 = arith.constant 0 : index
    %43 = vector.load %arg6[%c0_17, %c0_18, %c0_19] : memref<1x32x128xf32, #tpu.memory_space<vmem>>, vector<1x32x128xf32>
    %44 = vector.shape_cast %43 : vector<1x32x128xf32> to vector<32x128xf32>
    %45 = arith.addf %42, %44 : vector<32x128xf32>
    %c0_20 = arith.constant 0 : index
    %c0_21 = arith.constant 0 : index
    %c0_22 = arith.constant 0 : index
    %46 = vector.load %arg7[%c0_20, %c0_21, %c0_22] : memref<1x32x128xf32, #tpu.memory_space<vmem>>, vector<1x32x128xf32>
    %47 = vector.shape_cast %46 : vector<1x32x128xf32> to vector<32x128xf32>
    %48 = vector.shape_cast %45 : vector<32x128xf32> to vector<1x32x128xf32>
    tpu.vector_store %arg7[%c0_20, %c0_21, %c0_22], %48 {strides = array<i32>} : memref<1x32x128xf32, #tpu.memory_space<vmem>>, vector<1x32x128xf32>,
    return
  }
  func.func @transform_0(%arg0: i32, %arg1: i32) -> (i32, i32, i32) {
    %c0_i32 = arith.constant 0 : i32
    %c0_i32_0 = arith.constant 0 : i32
    return %arg0, %arg1, %c0_i32 : i32, i32, i32
  }
  func.func @transform_1(%arg0: i32, %arg1: i32) -> (i32, i32, i32) {
    %c0_i32 = arith.constant 0 : i32
    %c0_i32_0 = arith.constant 0 : i32
    %c0_i32_1 = arith.constant 0 : i32
    return %arg0, %c0_i32, %c0_i32_0 : i32, i32, i32
  }
  func.func @transform_2(%arg0: i32, %arg1: i32) -> (i32, i32) {
    %c0_i32 = arith.constant 0 : i32
    %c0_i32_0 = arith.constant 0 : i32
    %c0_i32_1 = arith.constant 0 : i32
    return %c0_i32, %c0_i32_0 : i32, i32
  }
  func.func @transform_3(%arg0: i32, %arg1: i32) -> (i32, i32) {
    %c0_i32 = arith.constant 0 : i32
    %c0_i32_0 = arith.constant 0 : i32
    %c0_i32_1 = arith.constant 0 : i32
    return %c0_i32, %c0_i32_0 : i32, i32
  }
  func.func @transform_4(%arg0: i32, %arg1: i32) -> (i32, i32, i32) {
    %c0_i32 = arith.constant 0 : i32
    %c0_i32_0 = arith.constant 0 : i32
    return %arg0, %arg1, %c0_i32 : i32, i32, i32
  }
  func.func @transform_5(%arg0: i32, %arg1: i32) -> (i32, i32, i32) {
    %c0_i32 = arith.constant 0 : i32
    %c0_i32_0 = arith.constant 0 : i32
    return %arg0, %arg1, %c0_i32 : i32, i32, i32
  }
}

</mosaic_0001>

<llo_original>
// kernel: block_forward.6
$region0: #{block_forward.6}
  #allocation0 [shape = 'u32[]', space=smem, size = 0x4, offset = 0x4, fixed_abs, tag = 'smem constant byte address 0x4 - core index']
  #allocation1 [shape = 'u32[144,128]{1,0:T(1,128)}', space=vmem, size = 0x12000, scoped, tag = 'internal scratch']
  %s0 = inlined_call_operand.vmem [shape: f32[128,128], index: 0, kind: input, shape index: {}]
  %s1 = inlined_call_operand.vmem [shape: f32[1,128], index: 1, kind: input, shape index: {}]
  %s2 = inlined_call_operand.vmem [shape: f32[1,128], index: 2, kind: input, shape index: {}]
  %s3 = inlined_call_operand.vmem [shape: bf16[128,512], index: 3, kind: input, shape index: {}]
  %s4 = inlined_call_operand.vmem [shape: f32[1,512], index: 4, kind: input, shape index: {}]
  %s5 = inlined_call_operand.vmem [shape: bf16[128,512], index: 5, kind: output, shape index: {}]
  %s6 = sld [smem:[#allocation0]]
  $region53: #{block_forward.6} parent=0
    _
  %s8 = ssub.s32 1, %s6
  %s9 = scalar_select 0, %s8, %s6
  loop: start=0, step=1, limit=4
  $region2: #{block_forward.6} parent=0 // loop_pre_header
    _
  $region3: #{block_forward.6} parent=0 // loop_header
    %s11 = sphi 0, %s15
    %p12 = scmp.ge.s32.totalorder %s11, 4
    %s21 = sphi 0, %s23
    %s24 = sphi 0, %s21
    %s25 = sphi 0, %s24
    %s41 = sphi 0, %s25
    %s45 = sphi 0, %s45
    %s47 = sphi 0, %s45
    %s48 = sphi 0, %s47
    %s62 = sphi 0, %s48
    %s66 = sphi 0, %s66
    %s68 = sphi 0, %s66
    %s69 = sphi 0, %s68
    %s83 = sphi 0, %s69
    %s87 = sphi 0, %s87
    %s89 = sphi 0, %s87
    %s90 = sphi 0, %s89
    %s104 = sphi 0, %s90
    %s108 = sphi 0, %s108
    %s110 = sphi 0, %s108
    %s111 = sphi 0, %s110
    %s125 = sphi 0, %s111
    %s131 = sphi 0, %s133
    %s134 = sphi 0, %s131
    %s135 = sphi 0, %s134
    %s151 = sphi 0, %s135
  $region4: #{block_forward.6} parent=0 // loop_header_branch
    %14 = sbr.rel (%p12) target = $region8
  $region5: #{block_forward.6} parent=0 // loop_body
    %s16 = ssub.s32 %s11, 1
    %s17 = ssub.s32 %s11, 2
    %s18 = sadd.s32 %s11, 1
    %s19 = ssub.s32 %s11, %s18
    %p20 = scmp.eq.s32.totalorder %s19, 0
    %s22 = sadd.s32 %s21, 1
    %s23 = scalar_select %p20, %s21, %s22
    %p26 = pneg %p20
    %p27 = scmp.eq.s32.totalorder %s11, 1
    %p28 = por %p26, %p27
    %p29 = scmp.ne.s32.totalorder %s21, %s24
    %p30 = scmp.eq.s32.totalorder %s11, 0
    %p31 = por %p29, %p30
    %p32 = scmp.ne.s32.totalorder %s21, %s24
    %p33 = scmp.eq.s32.totalorder %s16, 1
    %p34 = por %p32, %p33
    %p35 = scmp.ne.s32.totalorder %s24, %s25
    %p36 = scmp.eq.s32.totalorder %s16, 0
    %p37 = por %p35, %p36
    %p38 = scmp.ne.s32.totalorder %s24, %s25
    %p39 = scmp.eq.s32.totalorder %s17, 1
    %p40 = por %p38, %p39
    %p42 = scmp.ne.s32.totalorder %s25, %s41
    %p43 = scmp.eq.s32.totalorder %s17, 0
    %p44 = por %p42, %p43
    %s46 = sadd.s32 %s45, 1
    %p49 = scmp.eq.s32.totalorder %s11, 1
    %p50 = scmp.ne.s32.totalorder %s45, %s47
    %p51 = scmp.eq.s32.totalorder %s11, 0
    %p52 = por %p50, %p51
    %p53 = scmp.ne.s32.totalorder %s45, %s47
    %p54 = scmp.eq.s32.totalorder %s16, 1
    %p55 = por %p53, %p54
    %p56 = scmp.ne.s32.totalorder %s47, %s48
    %p57 = scmp.eq.s32.totalorder %s16, 0
    %p58 = por %p56, %p57
    %p59 = scmp.ne.s32.totalorder %s47, %s48
    %p60 = scmp.eq.s32.totalorder %s17, 1
    %p61 = por %p59, %p60
    %p63 = scmp.ne.s32.totalorder %s48, %s62
    %p64 = scmp.eq.s32.totalorder %s17, 0
    %p65 = por %p63, %p64
    %s67 = sadd.s32 %s66, 1
    %p70 = scmp.eq.s32.totalorder %s11, 1
    %p71 = scmp.ne.s32.totalorder %s66, %s68
    %p72 = scmp.eq.s32.totalorder %s11, 0
    %p73 = por %p71, %p72
    %p74 = scmp.ne.s32.totalorder %s66, %s68
    %p75 = scmp.eq.s32.totalorder %s16, 1
    %p76 = por %p74, %p75
    %p77 = scmp.ne.s32.totalorder %s68, %s69
    %p78 = scmp.eq.s32.totalorder %s16, 0
    %p79 = por %p77, %p78
    %p80 = scmp.ne.s32.totalorder %s68, %s69
    %p81 = scmp.eq.s32.totalorder %s17, 1
    %p82 = por %p80, %p81
    %p84 = scmp.ne.s32.totalorder %s69, %s83
    %p85 = scmp.eq.s32.totalorder %s17, 0
    %p86 = por %p84, %p85
    %s88 = sadd.s32 %s87, 1
    %p91 = scmp.eq.s32.totalorder %s11, 1
    %p92 = scmp.ne.s32.totalorder %s87, %s89
    %p93 = scmp.eq.s32.totalorder %s11, 0
    %p94 = por %p92, %p93
    %p95 = scmp.ne.s32.totalorder %s87, %s89
    %p96 = scmp.eq.s32.totalorder %s16, 1
    %p97 = por %p95, %p96
    %p98 = scmp.ne.s32.totalorder %s89, %s90
    %p99 = scmp.eq.s32.totalorder %s16, 0
    %p100 = por %p98, %p99
    %p101 = scmp.ne.s32.totalorder %s89, %s90
    %p102 = scmp.eq.s32.totalorder %s17, 1
    %p103 = por %p101, %p102
    %p105 = scmp.ne.s32.totalorder %s90, %s104
    %p106 = scmp.eq.s32.totalorder %s17, 0
    %p107 = por %p105, %p106
    %s109 = sadd.s32 %s108, 1
    %p112 = scmp.eq.s32.totalorder %s11, 1
    %p113 = scmp.ne.s32.totalorder %s108, %s110
    %p114 = scmp.eq.s32.totalorder %s11, 0
    %p115 = por %p113, %p114
    %p116 = scmp.ne.s32.totalorder %s108, %s110
    %p117 = scmp.eq.s32.totalorder %s16, 1
    %p118 = por %p116, %p117
    %p119 = scmp.ne.s32.totalorder %s110, %s111
    %p120 = scmp.eq.s32.totalorder %s16, 0
    %p121 = por %p119, %p120
    %p122 = scmp.ne.s32.totalorder %s110, %s111
    %p123 = scmp.eq.s32.totalorder %s17, 1
    %p124 = por %p122, %p123
    %p126 = scmp.ne.s32.totalorder %s111, %s125
    %p127 = scmp.eq.s32.totalorder %s17, 0
    %p128 = por %p126, %p127
    %s129 = ssub.s32 %s11, %s18
    %p130 = scmp.eq.s32.totalorder %s129, 0
    %s132 = sadd.s32 %s131, 1
    %s133 = scalar_select %p130, %s131, %s132
    %p136 = pneg %p130
    %p137 = scmp.eq.s32.totalorder %s11, 1
    %p138 = por %p136, %p137
    %p139 = scmp.ne.s32.totalorder %s131, %s134
    %p140 = scmp.eq.s32.totalorder %s11, 0
    %p141 = por %p139, %p140
    %p142 = scmp.ne.s32.totalorder %s131, %s134
    %p143 = scmp.eq.s32.totalorder %s16, 1
    %p144 = por %p142, %p143
    %p145 = scmp.ne.s32.totalorder %s134, %s135
    %p146 = scmp.eq.s32.totalorder %s16, 0
    %p147 = por %p145, %p146
    %p148 = scmp.ne.s32.totalorder %s134, %s135
    %p149 = scmp.eq.s32.totalorder %s17, 1
    %p150 = por %p148, %p149
    %p152 = scmp.ne.s32.totalorder %s135, %s151
    %p153 = scmp.eq.s32.totalorder %s17, 0
    %p154 = por %p152, %p153
    %p155 = scmp.le.s32.totalorder 1, %s11
    %p156 = scmp.lt.s32.totalorder %s11, 3
    %p157 = pnand %p155, %p156
    %p158 = pneg %p157
    // Predicated region
    $region9: #{block_forward.6} parent=5 // pred_check
      _
    $region10: #{block_forward.6} parent=5 // pred_check_branch
      %160 = sbr.rel (%p157) target = $region12
    $region11: #{block_forward.6} parent=5 // pred_region
      %s161 = ssub.s32 %s11, 1
      // Predicated region
      $region13: #{block_forward.6} parent=11 // pred_check
        %p162 = pneg %p58
      $region14: #{block_forward.6} parent=11 // pred_check_branch
        %164 = sbr.rel (%p162) target = $region16
      $region15: #{block_forward.6} parent=11 // pred_region
        _
      $region16: #{block_forward.6} parent=11 // pred_fallthru
        _
      // Predicated region
      $region17: #{block_forward.6} parent=11 // pred_check
        %p165 = pneg %p79
      $region18: #{block_forward.6} parent=11 // pred_check_branch
        %167 = sbr.rel (%p165) target = $region20
      $region19: #{block_forward.6} parent=11 // pred_region
        _
      $region20: #{block_forward.6} parent=11 // pred_fallthru
        _
      // Predicated region
      $region21: #{block_forward.6} parent=11 // pred_check
        %p168 = pneg %p100
      $region22: #{block_forward.6} parent=11 // pred_check_branch
        %170 = sbr.rel (%p168) target = $region24
      $region23: #{block_forward.6} parent=11 // pred_region
        _
      $region24: #{block_forward.6} parent=11 // pred_fallthru
        _
      // Predicated region
      $region25: #{block_forward.6} parent=11 // pred_check
        %p171 = pneg %p121
      $region26: #{block_forward.6} parent=11 // pred_check_branch
        %173 = sbr.rel (%p171) target = $region28
      $region27: #{block_forward.6} parent=11 // pred_region
        _
      $region28: #{block_forward.6} parent=11 // pred_fallthru
        _
    $region12: #{block_forward.6} parent=5 // pred_fallthru
      _
    %p174 = scmp.lt.s32.totalorder %s11, 2
    // Predicated region
    $region29: #{block_forward.6} parent=5 // pred_check
      %p175 = pneg %p174
    $region30: #{block_forward.6} parent=5 // pred_check_branch
      %177 = sbr.rel (%p175) target = $region32
    $region31: #{block_forward.6} parent=5 // pred_region
      // Predicated region
      $region33: #{block_forward.6} parent=31 // pred_check
        %p178 = pneg %p31
      $region34: #{block_forward.6} parent=31 // pred_check_branch
        %180 = sbr.rel (%p178) target = $region36
      $region35: #{block_forward.6} parent=31 // pred_region
        %s181 = smul.u32 8, %s11
        %p182 = scmp.lt.s32.totalorder %s181, 15
        %s183 = scalar_select %p182, %s181, 15
        %s184 = smul.addr %s183, 8
        %s185 = scalar_lea.vmem %s0, %s184
        %s186 = smul.u32 8, %s11
      $region36: #{block_forward.6} parent=31 // pred_fallthru
        _
    $region32: #{block_forward.6} parent=5 // pred_fallthru
      _
    %p187 = scmp.le.s32.totalorder 1, %s11
    %p188 = scmp.lt.s32.totalorder %s11, 3
    %p189 = pnand %p187, %p188
    %p190 = pneg %p189
    // Predicated region
    $region37: #{block_forward.6} parent=5 // pred_check
      _
    $region38: #{block_forward.6} parent=5 // pred_check_branch
      %192 = sbr.rel (%p189) target = $region40
    $region39: #{block_forward.6} parent=5 // pred_region
      %s193 = ssub.s32 %s11, 1
      %s194 = smul.u32 8, %s16
      %p195 = scmp.lt.s32.totalorder %s194, 15
      %s196 = scalar_select %p195, %s194, 15
      %s197 = smul.addr %s196, 8
      %s198 = scalar_lea.vmem %s0, %s197
      %p199 = pneg %p37
      %p200 = pneg %p34
      %p201 = pneg %p58
      %p202 = pneg %p55
      %p203 = pneg %p79
      %p204 = pneg %p76
      %p205 = pneg %p100
      %p206 = pneg %p97
      %p207 = pneg %p121
      %p208 = pneg %p118
      %p209 = pneg %p147
      %p210 = pneg %p144
      %s211 = smul.u32 8, %s16
      %p212 = scmp.lt.s32.totalorder %s211, 15
      %s213 = scalar_select %p212, %s211, 15
      %s214 = smul.addr %s213, 4
      %s215 = smul.addr %s214, 4
      %s216 = scalar_lea.vmem %s5, %s215
      %s217 = smul.u32 8, %s16
      %p218 = scmp.lt.s32.totalorder %s217, 15
      %s219 = scalar_select %p218, %s217, 15
      %s220 = smul.addr %s219, 8
      %s221 = scalar_lea.vmem %s0, %s220
      %s222 = smul.u32 8, %s16
      %s223 = smul.u32 8, %s16
      %p224 = scmp.lt.s32.totalorder %s223, 15
      %s225 = scalar_select %p224, %s223, 15
      %s226 = smul.addr %s225, 4
      %s227 = smul.addr %s226, 4
      %s228 = scalar_lea.vmem %s5, %s227
      %s229 = smul.u32 8, %s16
      %v231 = vld [vmem:[%s221] sm:$0xff]
      %v232 = vld [vmem:[%s221 + $0x8] sm:$0xff]
      %v233 = vld [vmem:[%s221 + $0x10] sm:$0xff]
      %v234 = vld [vmem:[%s221 + $0x18] sm:$0xff]
      %v235 = vld [vmem:[%s221 + $0x20] sm:$0xff]
      %v236 = vld [vmem:[%s221 + $0x28] sm:$0xff]
      %v237 = vld [vmem:[%s221 + $0x30] sm:$0xff]
      %v238 = vld [vmem:[%s221 + $0x38] sm:$0xff]
      %v239 = vld [vmem:[%s1] sm:$0x1]
      %v240 = vld [vmem:[%s2] sm:$0x1]
      %241 = vadd.xlane.f32.xlu0 %v231
      %v242 = vpop.xlane.xlu0 %241
      %243 = vadd.xlane.f32.xlu0 %v232
      %v244 = vpop.xlane.xlu0 %243
      %245 = vadd.xlane.f32.xlu0 %v233
      %v246 = vpop.xlane.xlu0 %245
      %247 = vadd.xlane.f32.xlu0 %v234
      %v248 = vpop.xlane.xlu0 %247
      %249 = vadd.xlane.f32.xlu0 %v235
      %v250 = vpop.xlane.xlu0 %249
      %251 = vadd.xlane.f32.xlu0 %v236
      %v252 = vpop.xlane.xlu0 %251
      %253 = vadd.xlane.f32.xlu0 %v237
      %v254 = vpop.xlane.xlu0 %253
      %255 = vadd.xlane.f32.xlu0 %v238
      %v256 = vpop.xlane.xlu0 %255
      %v257 = vrcp.pop 128.0
      %v258 = vmul.f32 %v242, %v257
      %v259 = vmul.f32 %v244, %v257
      %v260 = vmul.f32 %v246, %v257
      %v261 = vmul.f32 %v248, %v257
      %v262 = vmul.f32 %v250, %v257
      %v263 = vmul.f32 %v252, %v257
      %v264 = vmul.f32 %v254, %v257
      %v265 = vmul.f32 %v256, %v257
      %v266 = vsub.f32 %v231, %v258
      %v267 = vsub.f32 %v232, %v259
      %v268 = vsub.f32 %v233, %v260
      %v269 = vsub.f32 %v234, %v261
      %v270 = vsub.f32 %v235, %v262
      %v271 = vsub.f32 %v236, %v263
      %v272 = vsub.f32 %v237, %v264
      %v273 = vsub.f32 %v238, %v265
      %v274 = vmul.f32 %v266, %v266
      %v275 = vmul.f32 %v267, %v267
      %v276 = vmul.f32 %v268, %v268
      %v277 = vmul.f32 %v269, %v269
      %v278 = vmul.f32 %v270, %v270
      %v279 = vmul.f32 %v271, %v271
      %v280 = vmul.f32 %v272, %v272
      %v281 = vmul.f32 %v273, %v273
      %282 = vadd.xlane.f32.xlu0 %v274
      %v283 = vpop.xlane.xlu0 %282
      %284 = vadd.xlane.f32.xlu0 %v275
      %v285 = vpop.xlane.xlu0 %284
      %286 = vadd.xlane.f32.xlu0 %v276
      %v287 = vpop.xlane.xlu0 %286
      %288 = vadd.xlane.f32.xlu0 %v277
      %v289 = vpop.xlane.xlu0 %288
      %290 = vadd.xlane.f32.xlu0 %v278
      %v291 = vpop.xlane.xlu0 %290
      %292 = vadd.xlane.f32.xlu0 %v279
      %v293 = vpop.xlane.xlu0 %292
      %294 = vadd.xlane.f32.xlu0 %v280
      %v295 = vpop.xlane.xlu0 %294
      %296 = vadd.xlane.f32.xlu0 %v281
      %v297 = vpop.xlane.xlu0 %296
      %v298 = vmul.f32 %v283, %v257
      %v299 = vmul.f32 %v285, %v257
      %v300 = vmul.f32 %v287, %v257
      %v301 = vmul.f32 %v289, %v257
      %v302 = vmul.f32 %v291, %v257
      %v303 = vmul.f32 %v293, %v257
      %v304 = vmul.f32 %v295, %v257
      %v305 = vmul.f32 %v297, %v257
      %v306 = vadd.f32 %v298, 1e-05
      %v307 = vadd.f32 %v299, 1e-05
      %v308 = vadd.f32 %v300, 1e-05
      %v309 = vadd.f32 %v301, 1e-05
      %v310 = vadd.f32 %v302, 1e-05
      %v311 = vadd.f32 %v303, 1e-05
      %v312 = vadd.f32 %v304, 1e-05
      %v313 = vadd.f32 %v305, 1e-05
      %v314 = vrsqrt.pop %v306
      %v315 = vrsqrt.pop %v307
      %v316 = vrsqrt.pop %v308
      %v317 = vrsqrt.pop %v309
      %v318 = vrsqrt.pop %v310
      %v319 = vrsqrt.pop %v311
      %v320 = vrsqrt.pop %v312
      %v321 = vrsqrt.pop %v313
      %v322 = vmul.f32 %v266, %v314
      %v323 = vmul.f32 %v267, %v315
      %v324 = vmul.f32 %v268, %v316
      %v325 = vmul.f32 %v269, %v317
      %v326 = vmul.f32 %v270, %v318
      %v327 = vmul.f32 %v271, %v319
      %v328 = vmul.f32 %v272, %v320
      %v329 = vmul.f32 %v273, %v321
      %v331 = vlaneseq
      %v332 = vshrl.u32 %v331, 7
      %v333 = vsub.s32 0, %v332
      %v334 = vrot.slane %v239, %v333
      %v336 = vmul.f32 %v322, %v334
      %v337 = vmul.f32 %v323, %v334
      %v338 = vmul.f32 %v324, %v334
      %v339 = vmul.f32 %v325, %v334
      %v340 = vmul.f32 %v326, %v334
      %v341 = vmul.f32 %v327, %v334
      %v342 = vmul.f32 %v328, %v334
      %v343 = vmul.f32 %v329, %v334
      %v345 = vlaneseq
      %v346 = vshrl.u32 %v345, 7
      %v347 = vsub.s32 0, %v346
      %v348 = vrot.slane %v240, %v347
      %v350 = vadd.f32 %v336, %v348
      %v351 = vadd.f32 %v337, %v348
      %v352 = vadd.f32 %v338, %v348
      %v353 = vadd.f32 %v339, %v348
      %v354 = vadd.f32 %v340, %v348
      %v355 = vadd.f32 %v341, %v348
      %v356 = vadd.f32 %v342, %v348
      %v357 = vadd.f32 %v343, %v348
      %v358 = vpack.c.bf16 %v351, %v350
      %v359 = vpack.c.bf16 %v353, %v352
      %v360 = vpack.c.bf16 %v355, %v354
      %v361 = vpack.c.bf16 %v357, %v356
      %v362 = vld [vmem:[%s3] sm:$0xff]
      %v363 = vld [vmem:[%s3 + $0x8] sm:$0xff]
      %v364 = vld [vmem:[%s3 + $0x10] sm:$0xff]
      %v365 = vld [vmem:[%s3 + $0x18] sm:$0xff]
      %v366 = vld [vmem:[%s3 + $0x20] sm:$0xff]
      %v367 = vld [vmem:[%s3 + $0x28] sm:$0xff]
      %v368 = vld [vmem:[%s3 + $0x30] sm:$0xff]
      %v369 = vld [vmem:[%s3 + $0x38] sm:$0xff]
      %v370 = vld [vmem:[%s3 + $0x40] sm:$0xff]
      %v371 = vld [vmem:[%s3 + $0x48] sm:$0xff]
      %v372 = vld [vmem:[%s3 + $0x50] sm:$0xff]
      %v373 = vld [vmem:[%s3 + $0x58] sm:$0xff]
      %v374 = vld [vmem:[%s3 + $0x60] sm:$0xff]
      %v375 = vld [vmem:[%s3 + $0x68] sm:$0xff]
      %v376 = vld [vmem:[%s3 + $0x70] sm:$0xff]
      %v377 = vld [vmem:[%s3 + $0x78] sm:$0xff]
      %v378 = vld [vmem:[%s3 + $0x80] sm:$0xff]
      %v379 = vld [vmem:[%s3 + $0x88] sm:$0xff]
      %v380 = vld [vmem:[%s3 + $0x90] sm:$0xff]
      %v381 = vld [vmem:[%s3 + $0x98] sm:$0xff]
      %v382 = vld [vmem:[%s3 + $0xa0] sm:$0xff]
      %v383 = vld [vmem:[%s3 + $0xa8] sm:$0xff]
      %v384 = vld [vmem:[%s3 + $0xb0] sm:$0xff]
      %v385 = vld [vmem:[%s3 + $0xb8] sm:$0xff]
      %v386 = vld [vmem:[%s3 + $0xc0] sm:$0xff]
      %v387 = vld [vmem:[%s3 + $0xc8] sm:$0xff]
      %v388 = vld [vmem:[%s3 + $0xd0] sm:$0xff]
      %v389 = vld [vmem:[%s3 + $0xd8] sm:$0xff]
      %v390 = vld [vmem:[%s3 + $0xe0] sm:$0xff]
      %v391 = vld [vmem:[%s3 + $0xe8] sm:$0xff]
      %v392 = vld [vmem:[%s3 + $0xf0] sm:$0xff]
      %v393 = vld [vmem:[%s3 + $0xf8] sm:$0xff]
      %v394 = vld [vmem:[%s4] sm:$0xf]
      %v396 = vlaneseq
      %v397 = vshrl.u32 %v396, 7
      %v398 = vsub.s32 0, %v397
      %v399 = vrot.slane %v394, %v398
      %v400 = vlaneseq
      %v401 = vshrl.u32 %v400, 7
      %v402 = vsub.s32 1, %v401
      %v403 = vrot.slane %v394, %v402
      %v404 = vlaneseq
      %v405 = vshrl.u32 %v404, 7
      %v406 = vsub.s32 2, %v405
      %v407 = vrot.slane %v394, %v406
      %v408 = vlaneseq
      %v409 = vshrl.u32 %v408, 7
      %v410 = vsub.s32 3, %v409
      %v411 = vrot.slane %v394, %v410
      %v448 = vunpack.c.l.b16 %v362
      %v449 = vunpack.c.h.b16 %v362
      %v450 = vunpack.c.l.b16 %v363
      %v451 = vunpack.c.h.b16 %v363
      %v452 = vunpack.c.l.b16 %v364
      %v453 = vunpack.c.h.b16 %v364
      %v454 = vunpack.c.l.b16 %v365
      %v455 = vunpack.c.h.b16 %v365
      %v456 = vunpack.c.l.b16 %v366
      %v457 = vunpack.c.h.b16 %v366
      %v458 = vunpack.c.l.b16 %v367
      %v459 = vunpack.c.h.b16 %v367
      %v460 = vunpack.c.l.b16 %v368
      %v461 = vunpack.c.h.b16 %v368
      %v462 = vunpack.c.l.b16 %v369
      %v463 = vunpack.c.h.b16 %v369
      %v464 = vunpack.c.l.b16 %v370
      %v465 = vunpack.c.h.b16 %v370
      %v466 = vunpack.c.l.b16 %v371
      %v467 = vunpack.c.h.b16 %v371
      %v468 = vunpack.c.l.b16 %v372
      %v469 = vunpack.c.h.b16 %v372
      %v470 = vunpack.c.l.b16 %v373
      %v471 = vunpack.c.h.b16 %v373
      %v472 = vunpack.c.l.b16 %v374
      %v473 = vunpack.c.h.b16 %v374
      %v474 = vunpack.c.l.b16 %v375
      %v475 = vunpack.c.h.b16 %v375
      %v476 = vunpack.c.l.b16 %v376
      %v477 = vunpack.c.h.b16 %v376
      %v478 = vunpack.c.l.b16 %v377
      %v479 = vunpack.c.h.b16 %v377
      %v480 = vunpack.c.l.b16 %v378
      %v481 = vunpack.c.h.b16 %v378
      %v482 = vunpack.c.l.b16 %v379
      %v483 = vunpack.c.h.b16 %v379
      %v484 = vunpack.c.l.b16 %v380
      %v485 = vunpack.c.h.b16 %v380
      %v486 = vunpack.c.l.b16 %v381
      %v487 = vunpack.c.h.b16 %v381
      %v488 = vunpack.c.l.b16 %v382
      %v489 = vunpack.c.h.b16 %v382
      %v490 = vunpack.c.l.b16 %v383
      %v491 = vunpack.c.h.b16 %v383
      %v492 = vunpack.c.l.b16 %v384
      %v493 = vunpack.c.h.b16 %v384
      %v494 = vunpack.c.l.b16 %v385
      %v495 = vunpack.c.h.b16 %v385
      %v496 = vunpack.c.l.b16 %v386
      %v497 = vunpack.c.h.b16 %v386
      %v498 = vunpack.c.l.b16 %v387
      %v499 = vunpack.c.h.b16 %v387
      %v500 = vunpack.c.l.b16 %v388
      %v501 = vunpack.c.h.b16 %v388
      %v502 = vunpack.c.l.b16 %v389
      %v503 = vunpack.c.h.b16 %v389
      %v504 = vunpack.c.l.b16 %v390
      %v505 = vunpack.c.h.b16 %v390
      %v506 = vunpack.c.l.b16 %v391
      %v507 = vunpack.c.h.b16 %v391
      %v508 = vunpack.c.l.b16 %v392
      %v509 = vunpack.c.h.b16 %v392
      %v510 = vunpack.c.l.b16 %v393
      %v511 = vunpack.c.h.b16 %v393
      %v512 = vpack.c.b16 %v452, %v448
      %v513 = vpack.c.b16 %v453, %v449
      %v514 = vpack.c.b16 %v454, %v450
      %v515 = vpack.c.b16 %v455, %v451
      %v516 = vpack.c.b16 %v460, %v456
      %v517 = vpack.c.b16 %v461, %v457
      %v518 = vpack.c.b16 %v462, %v458
      %v519 = vpack.c.b16 %v463, %v459
      %v520 = vpack.c.b16 %v468, %v464
      %v521 = vpack.c.b16 %v469, %v465
      %v522 = vpack.c.b16 %v470, %v466
      %v523 = vpack.c.b16 %v471, %v467
      %v524 = vpack.c.b16 %v476, %v472
      %v525 = vpack.c.b16 %v477, %v473
      %v526 = vpack.c.b16 %v478, %v474
      %v527 = vpack.c.b16 %v479, %v475
      %v528 = vpack.c.b16 %v484, %v480
      %v529 = vpack.c.b16 %v485, %v481
      %v530 = vpack.c.b16 %v486, %v482
      %v531 = vpack.c.b16 %v487, %v483
      %v532 = vpack.c.b16 %v492, %v488
      %v533 = vpack.c.b16 %v493, %v489
      %v534 = vpack.c.b16 %v494, %v490
      %v535 = vpack.c.b16 %v495, %v491
      %v536 = vpack.c.b16 %v500, %v496
      %v537 = vpack.c.b16 %v501, %v497
      %v538 = vpack.c.b16 %v502, %v498
      %v539 = vpack.c.b16 %v503, %v499
      %v540 = vpack.c.b16 %v508, %v504
      %v541 = vpack.c.b16 %v509, %v505
      %v542 = vpack.c.b16 %v510, %v506
      %v543 = vpack.c.b16 %v511, %v507
      %576 = vmatprep.subr.bf16.mxu0 %v513
      %577 = vmatpush1.bf16.msra.mxu0 %v512
      %578 = vmatprep.subr.bf16.mxu0 %v517
      %579 = vmatpush1.bf16.msra.mxu0 %v516
      %580 = vmatprep.subr.bf16.mxu0 %v521
      %581 = vmatpush1.bf16.msra.mxu0 %v520
      %582 = vmatprep.subr.bf16.mxu0 %v525
      %583 = vmatpush1.bf16.msra.mxu0 %v524
      %584 = vmatprep.subr.bf16.mxu0 %v529
      %585 = vmatpush1.bf16.msra.mxu0 %v528
      %586 = vmatprep.subr.bf16.mxu0 %v533
      %587 = vmatpush1.bf16.msra.mxu0 %v532
      %588 = vmatprep.subr.bf16.mxu0 %v537
      %589 = vmatpush1.bf16.msra.mxu0 %v536
      %590 = vmatprep.subr.bf16.mxu0 %v541
      %591 = vmatpush1.bf16.msra.mxu0 %v540
      %592 = vmatprep.subr.bf16.mxu0 0
      %593 = vmatpush1.bf16.msra.mxu0 0
      %594 = vmatprep.subr.bf16.mxu0 0
      %595 = vmatpush1.bf16.msra.mxu0 0
      %596 = vmatprep.subr.bf16.mxu0 0
      %597 = vmatpush1.bf16.msra.mxu0 0
      %598 = vmatprep.subr.bf16.mxu0 0
      %599 = vmatpush1.bf16.msra.mxu0 0
      %600 = vmatprep.subr.bf16.mxu0 0
      %601 = vmatpush1.bf16.msra.mxu0 0
      %602 = vmatprep.subr.bf16.mxu0 0
      %603 = vmatpush1.bf16.msra.mxu0 0
      %604 = vmatprep.subr.bf16.mxu0 0
      %605 = vmatpush1.bf16.msra.mxu0 0
      %606 = vmatprep.subr.bf16.mxu0 0
      %607 = vmatpush1.bf16.msra.mxu0 0
      %608 = vmatprep.mubr.bf16.mxu0 0
      %609 = vmatmul.mubr.bf16.gmra.mrb[0].mxu0 %v358
      %v610 = vpop.f32.mrb[0].mxu0
      %v611 = vadd.f32 %v399, %v610
      %v612 = vpop.f32.mrb[0].mxu0
      %v613 = vadd.f32 %v403, %v612
      %v614 = vpop.f32.mrb[0].mxu0
      %v615 = vadd.f32 %v399, %v614
      %v616 = vpop.f32.mrb[0].mxu0
      %v617 = vadd.f32 %v403, %v616
      %618 = vmatprep.mubr.bf16.mxu0 0
      %619 = vmatmul.mubr.bf16.gmra.mrb[0].mxu0 %v359
      %v620 = vpop.f32.mrb[0].mxu0
      %v621 = vadd.f32 %v399, %v620
      %v622 = vpop.f32.mrb[0].mxu0
      %v623 = vadd.f32 %v403, %v622
      %v624 = vpop.f32.mrb[0].mxu0
      %v625 = vadd.f32 %v399, %v624
      %v626 = vpop.f32.mrb[0].mxu0
      %v627 = vadd.f32 %v403, %v626
      %628 = vmatprep.mubr.bf16.mxu0 0
      %629 = vmatmul.mubr.bf16.gmra.mrb[0].mxu0 %v360
      %v630 = vpop.f32.mrb[0].mxu0
      %v631 = vadd.f32 %v399, %v630
      %v632 = vpop.f32.mrb[0].mxu0
      %v633 = vadd.f32 %v403, %v632
      %v634 = vpop.f32.mrb[0].mxu0
      %v635 = vadd.f32 %v399, %v634
      %v636 = vpop.f32.mrb[0].mxu0
      %v637 = vadd.f32 %v403, %v636
      %638 = vmatprep.mubr.bf16.mxu0 0
      %639 = vmatmul.mubr.bf16.gmra.mrb[0].mxu0 %v361
      %v640 = vpop.f32.mrb[0].mxu0
      %v641 = vadd.f32 %v399, %v640
      %v642 = vpop.f32.mrb[0].mxu0
      %v643 = vadd.f32 %v403, %v642
      %v644 = vpop.f32.mrb[0].mxu0
      %v645 = vadd.f32 %v399, %v644
      %v646 = vpop.f32.mrb[0].mxu0
      %v647 = vadd.f32 %v403, %v646
      %648 = vdwg.mxu0
      %649 = vmatprep.subr.bf16.mxu0 %v515
      %650 = vmatpush1.bf16.msra.mxu0 %v514
      %651 = vmatprep.subr.bf16.mxu0 %v519
      %652 = vmatpush1.bf16.msra.mxu0 %v518
      %653 = vmatprep.subr.bf16.mxu0 %v523
      %654 = vmatpush1.bf16.msra.mxu0 %v522
      %655 = vmatprep.subr.bf16.mxu0 %v527
      %656 = vmatpush1.bf16.msra.mxu0 %v526
      %657 = vmatprep.subr.bf16.mxu0 %v531
      %658 = vmatpush1.bf16.msra.mxu0 %v530
      %659 = vmatprep.subr.bf16.mxu0 %v535
      %660 = vmatpush1.bf16.msra.mxu0 %v534
      %661 = vmatprep.subr.bf16.mxu0 %v539
      %662 = vmatpush1.bf16.msra.mxu0 %v538
      %663 = vmatprep.subr.bf16.mxu0 %v543
      %664 = vmatpush1.bf16.msra.mxu0 %v542
      %665 = vmatprep.subr.bf16.mxu0 0
      %666 = vmatpush1.bf16.msra.mxu0 0
      %667 = vmatprep.subr.bf16.mxu0 0
      %668 = vmatpush1.bf16.msra.mxu0 0
      %669 = vmatprep.subr.bf16.mxu0 0
      %670 = vmatpush1.bf16.msra.mxu0 0
      %671 = vmatprep.subr.bf16.mxu0 0
      %672 = vmatpush1.bf16.msra.mxu0 0
      %673 = vmatprep.subr.bf16.mxu0 0
      %674 = vmatpush1.bf16.msra.mxu0 0
      %675 = vmatprep.subr.bf16.mxu0 0
      %676 = vmatpush1.bf16.msra.mxu0 0
      %677 = vmatprep.subr.bf16.mxu0 0
      %678 = vmatpush1.bf16.msra.mxu0 0
      %679 = vmatprep.subr.bf16.mxu0 0
      %680 = vmatpush1.bf16.msra.mxu0 0
      %681 = vmatprep.mubr.bf16.mxu0 0
      %682 = vmatmul.mubr.bf16.gmra.mrb[0].mxu0 %v358
      %v683 = vpop.f32.mrb[0].mxu0
      %v684 = vadd.f32 %v407, %v683
      %v685 = vpop.f32.mrb[0].mxu0
      %v686 = vadd.f32 %v411, %v685
      %v687 = vpop.f32.mrb[0].mxu0
      %v688 = vadd.f32 %v407, %v687
      %v689 = vpop.f32.mrb[0].mxu0
      %v690 = vadd.f32 %v411, %v689
      %691 = vmatprep.mubr.bf16.mxu0 0
      %692 = vmatmul.mubr.bf16.gmra.mrb[0].mxu0 %v359
      %v693 = vpop.f32.mrb[0].mxu0
      %v694 = vadd.f32 %v407, %v693
      %v695 = vpop.f32.mrb[0].mxu0
      %v696 = vadd.f32 %v411, %v695
      %v697 = vpop.f32.mrb[0].mxu0
      %v698 = vadd.f32 %v407, %v697
      %v699 = vpop.f32.mrb[0].mxu0
      %v700 = vadd.f32 %v411, %v699
      %701 = vmatprep.mubr.bf16.mxu0 0
      %702 = vmatmul.mubr.bf16.gmra.mrb[0].mxu0 %v360
      %v703 = vpop.f32.mrb[0].mxu0
      %v704 = vadd.f32 %v407, %v703
      %v705 = vpop.f32.mrb[0].mxu0
      %v706 = vadd.f32 %v411, %v705
      %v707 = vpop.f32.mrb[0].mxu0
      %v708 = vadd.f32 %v407, %v707
      %v709 = vpop.f32.mrb[0].mxu0
      %v710 = vadd.f32 %v411, %v709
      %711 = vmatprep.mubr.bf16.mxu0 0
      %712 = vmatmul.mubr.bf16.gmra.mrb[0].mxu0 %v361
      %v713 = vpop.f32.mrb[0].mxu0
      %v714 = vadd.f32 %v407, %v713
      %v715 = vpop.f32.mrb[0].mxu0
      %v716 = vadd.f32 %v411, %v715
      %v717 = vpop.f32.mrb[0].mxu0
      %v718 = vadd.f32 %v407, %v717
      %v719 = vpop.f32.mrb[0].mxu0
      %v720 = vadd.f32 %v411, %v719
      %721 = vdwg.mxu0
      %v722 = vpack.c.bf16 %v615, %v611
      %v723 = vpack.c.bf16 %v617, %v613
      %v724 = vpack.c.bf16 %v688, %v684
      %v725 = vpack.c.bf16 %v690, %v686
      %v726 = vpack.c.bf16 %v625, %v621
      %v727 = vpack.c.bf16 %v627, %v623
      %v728 = vpack.c.bf16 %v698, %v694
      %v729 = vpack.c.bf16 %v700, %v696
      %v730 = vpack.c.bf16 %v635, %v631
      %v731 = vpack.c.bf16 %v637, %v633
      %v732 = vpack.c.bf16 %v708, %v704
      %v733 = vpack.c.bf16 %v710, %v706
      %v734 = vpack.c.bf16 %v645, %v641
      %v735 = vpack.c.bf16 %v647, %v643
      %v736 = vpack.c.bf16 %v718, %v714
      %v737 = vpack.c.bf16 %v720, %v716
      %v754 = vunpack.c.l.b16 %v722
      %v755 = vunpack.c.l.b16 %v723
      %v756 = vunpack.c.l.b16 %v724
      %v757 = vunpack.c.l.b16 %v725
      %v758 = vunpack.c.h.b16 %v722
      %v759 = vunpack.c.h.b16 %v723
      %v760 = vunpack.c.h.b16 %v724
      %v761 = vunpack.c.h.b16 %v725
      %v762 = vunpack.c.l.b16 %v726
      %v763 = vunpack.c.l.b16 %v727
      %v764 = vunpack.c.l.b16 %v728
      %v765 = vunpack.c.l.b16 %v729
      %v766 = vunpack.c.h.b16 %v726
      %v767 = vunpack.c.h.b16 %v727
      %v768 = vunpack.c.h.b16 %v728
      %v769 = vunpack.c.h.b16 %v729
      %v770 = vunpack.c.l.b16 %v730
      %v771 = vunpack.c.l.b16 %v731
      %v772 = vunpack.c.l.b16 %v732
      %v773 = vunpack.c.l.b16 %v733
      %v774 = vunpack.c.h.b16 %v730
      %v775 = vunpack.c.h.b16 %v731
      %v776 = vunpack.c.h.b16 %v732
      %v777 = vunpack.c.h.b16 %v733
      %v778 = vunpack.c.l.b16 %v734
      %v779 = vunpack.c.l.b16 %v735
      %v780 = vunpack.c.l.b16 %v736
      %v781 = vunpack.c.l.b16 %v737
      %v782 = vunpack.c.h.b16 %v734
      %v783 = vunpack.c.h.b16 %v735
      %v784 = vunpack.c.h.b16 %v736
      %v785 = vunpack.c.h.b16 %v737
      %v786 = vpack.c.b16 %v755, %v754
      %v787 = vpack.c.b16 %v757, %v756
      %v788 = vpack.c.b16 %v759, %v758
      %v789 = vpack.c.b16 %v761, %v760
      %v790 = vpack.c.b16 %v763, %v762
      %v791 = vpack.c.b16 %v765, %v764
      %v792 = vpack.c.b16 %v767, %v766
      %v793 = vpack.c.b16 %v769, %v768
      %v794 = vpack.c.b16 %v771, %v770
      %v795 = vpack.c.b16 %v773, %v772
      %v796 = vpack.c.b16 %v775, %v774
      %v797 = vpack.c.b16 %v777, %v776
      %v798 = vpack.c.b16 %v779, %v778
      %v799 = vpack.c.b16 %v781, %v780
      %v800 = vpack.c.b16 %v783, %v782
      %v801 = vpack.c.b16 %v785, %v784
      %818 = vst [vmem:[%s228] sm:$0xff] %v786
      %819 = vst [vmem:[%s228 + $0x8] sm:$0xff] %v787
      %820 = vst [vmem:[%s228 + $0x10] sm:$0xff] %v788
      %821 = vst [vmem:[%s228 + $0x18] sm:$0xff] %v789
      %822 = vst [vmem:[%s228 + $0x20] sm:$0xff] %v790
      %823 = vst [vmem:[%s228 + $0x28] sm:$0xff] %v791
      %824 = vst [vmem:[%s228 + $0x30] sm:$0xff] %v792
      %825 = vst [vmem:[%s228 + $0x38] sm:$0xff] %v793
      %826 = vst [vmem:[%s228 + $0x40] sm:$0xff] %v794
      %827 = vst [vmem:[%s228 + $0x48] sm:$0xff] %v795
      %828 = vst [vmem:[%s228 + $0x50] sm:$0xff] %v796
      %829 = vst [vmem:[%s228 + $0x58] sm:$0xff] %v797
      %830 = vst [vmem:[%s228 + $0x60] sm:$0xff] %v798
      %831 = vst [vmem:[%s228 + $0x68] sm:$0xff] %v799
      %832 = vst [vmem:[%s228 + $0x70] sm:$0xff] %v800
      %833 = vst [vmem:[%s228 + $0x78] sm:$0xff] %v801
      %s834 = smul.u32 8, %s16
      %p835 = scmp.lt.s32.totalorder %s834, 15
      %s836 = scalar_select %p835, %s834, 15
      %s837 = smul.addr %s836, 4
      %s838 = smul.addr %s837, 4
      %s839 = scalar_lea.vmem %s5, %s838
      // Predicated region
      $region41: #{block_forward.6} parent=39 // pred_check
        %p840 = pneg %p144
      $region42: #{block_forward.6} parent=39 // pred_check_branch
        %842 = sbr.rel (%p840) target = $region44
      $region43: #{block_forward.6} parent=39 // pred_region
        %s843 = smul.u32 8, %s16
      $region44: #{block_forward.6} parent=39 // pred_fallthru
        _
    $region40: #{block_forward.6} parent=5 // pred_fallthru
      _
    %p844 = scmp.le.s32.totalorder 2, %s11
    // Predicated region
    $region45: #{block_forward.6} parent=5 // pred_check
      %p845 = pneg %p844
    $region46: #{block_forward.6} parent=5 // pred_check_branch
      %847 = sbr.rel (%p845) target = $region48
    $region47: #{block_forward.6} parent=5 // pred_region
      %s848 = ssub.s32 %s11, 2
      // Predicated region
      $region49: #{block_forward.6} parent=47 // pred_check
        %p849 = pneg %p150
      $region50: #{block_forward.6} parent=47 // pred_check_branch
        %851 = sbr.rel (%p849) target = $region52
      $region51: #{block_forward.6} parent=47 // pred_region
        %s852 = smul.u32 8, %s17
        %p853 = scmp.lt.s32.totalorder %s852, 15
        %s854 = scalar_select %p853, %s852, 15
        %s855 = smul.addr %s854, 4
        %s856 = smul.addr %s855, 4
        %s857 = scalar_lea.vmem %s5, %s856
      $region52: #{block_forward.6} parent=47 // pred_fallthru
        _
    $region48: #{block_forward.6} parent=5 // pred_fallthru
      _
  $region6: #{block_forward.6} parent=0 // loop_footer
    %s15 = sadd.s32 1, %s11
  $region7: #{block_forward.6} parent=0 // loop_footer_branch
    %10 = sbr.rel target = $region3
  $region8: #{block_forward.6} parent=0 // loop_exit
    _

// kernel: block_forward.5
$region0: #{block_forward.5}
  #allocation0 [shape = 'u32[]', space=smem, size = 0x4, offset = 0x4, fixed_abs, tag = 'smem constant byte address 0x4 - core index']
  #allocation1 [shape = 'u32[144,128]{1,0:T(1,128)}', space=vmem, size = 0x12000, scoped, tag = 'internal scratch']
  %s0 = inlined_call_operand.vmem [shape: bf16[2,64,128], index: 0, kind: input, shape index: {}]
  %s1 = inlined_call_operand.vmem [shape: bf16[2,64,256], index: 1, kind: input, shape index: {}]
  %s2 = inlined_call_operand.vmem [shape: bf16[128,128], index: 2, kind: input, shape index: {}]
  %s3 = inlined_call_operand.vmem [shape: f32[1,128], index: 3, kind: input, shape index: {}]
  %s4 = inlined_call_operand.vmem [shape: f32[2,64,128], index: 4, kind: input, shape index: {}]
  %s5 = inlined_call_operand.vmem [shape: f32[2,64,128], index: 5, kind: output, shape index: {}]
  %s6 = sld [smem:[#allocation0]]
  $region53: #{block_forward.5} parent=0
    _
  %s8 = ssub.s32 1, %s6
  %s9 = scalar_select 0, %s8, %s6
  loop: start=0, step=1, limit=6
  $region2: #{block_forward.5} parent=0 // loop_pre_header
    _
  $region3: #{block_forward.5} parent=0 // loop_header
    %s11 = sphi 0, %s15
    %p12 = scmp.ge.s32.totalorder %s11, 6
    %s18 = sphi 0, %s30
    %s19 = sphi 0, %s26
    %s20 = sphi 0, %s18
    %s21 = sphi 0, %s19
    %s22 = sphi 0, %s20
    %s23 = sphi 0, %s21
    %s35 = sphi 0, %s37
    %s38 = sphi 0, %s35
    %s39 = sphi 0, %s38
    %s55 = sphi 0, %s39
    %s61 = sphi 0, %s63
    %s64 = sphi 0, %s61
    %s65 = sphi 0, %s64
    %s81 = sphi 0, %s65
    %s85 = sphi 0, %s85
    %s87 = sphi 0, %s85
    %s88 = sphi 0, %s87
    %s102 = sphi 0, %s88
    %s106 = sphi 0, %s106
    %s108 = sphi 0, %s106
    %s109 = sphi 0, %s108
    %s123 = sphi 0, %s109
    %s131 = sphi 0, %s133
    %s134 = sphi 0, %s131
    %s135 = sphi 0, %s134
    %s151 = sphi 0, %s135
    %s159 = sphi 0, %s161
    %s162 = sphi 0, %s159
    %s163 = sphi 0, %s162
    %s179 = sphi 0, %s163
  $region4: #{block_forward.5} parent=0 // loop_header_branch
    %14 = sbr.rel (%p12) target = $region8
  $region5: #{block_forward.5} parent=0 // loop_body
    %s16 = ssub.s32 %s11, 1
    %s17 = ssub.s32 %s11, 2
    %s24 = sadd.s32 1, %s19
    %p25 = scmp.ge.s32.totalorder %s24, 2
    %s26 = scalar_select %p25, 0, %s24
    %s27 = sadd.s32 1, %s18
    %s28 = scalar_select %p25, %s27, %s18
    %p29 = scmp.ge.s32.totalorder %s28, 2
    %s30 = scalar_select %p29, 0, %s28
    %s31 = ssub.s32 %s18, %s30
    %s32 = ssub.s32 %s19, %s26
    %s33 = sor.u32 %s31, %s32
    %p34 = scmp.eq.s32.totalorder %s33, 0
    %s36 = sadd.s32 %s35, 1
    %s37 = scalar_select %p34, %s35, %s36
    %p40 = pneg %p34
    %p41 = scmp.eq.s32.totalorder %s11, 3
    %p42 = por %p40, %p41
    %p43 = scmp.ne.s32.totalorder %s35, %s38
    %p44 = scmp.eq.s32.totalorder %s11, 0
    %p45 = por %p43, %p44
    %p46 = scmp.ne.s32.totalorder %s35, %s38
    %p47 = scmp.eq.s32.totalorder %s16, 3
    %p48 = por %p46, %p47
    %p49 = scmp.ne.s32.totalorder %s38, %s39
    %p50 = scmp.eq.s32.totalorder %s16, 0
    %p51 = por %p49, %p50
    %p52 = scmp.ne.s32.totalorder %s38, %s39
    %p53 = scmp.eq.s32.totalorder %s17, 3
    %p54 = por %p52, %p53
    %p56 = scmp.ne.s32.totalorder %s39, %s55
    %p57 = scmp.eq.s32.totalorder %s17, 0
    %p58 = por %p56, %p57
    %s59 = ssub.s32 %s18, %s30
    %p60 = scmp.eq.s32.totalorder %s59, 0
    %s62 = sadd.s32 %s61, 1
    %s63 = scalar_select %p60, %s61, %s62
    %p66 = pneg %p60
    %p67 = scmp.eq.s32.totalorder %s11, 3
    %p68 = por %p66, %p67
    %p69 = scmp.ne.s32.totalorder %s61, %s64
    %p70 = scmp.eq.s32.totalorder %s11, 0
    %p71 = por %p69, %p70
    %p72 = scmp.ne.s32.totalorder %s61, %s64
    %p73 = scmp.eq.s32.totalorder %s16, 3
    %p74 = por %p72, %p73
    %p75 = scmp.ne.s32.totalorder %s64, %s65
    %p76 = scmp.eq.s32.totalorder %s16, 0
    %p77 = por %p75, %p76
    %p78 = scmp.ne.s32.totalorder %s64, %s65
    %p79 = scmp.eq.s32.totalorder %s17, 3
    %p80 = por %p78, %p79
    %p82 = scmp.ne.s32.totalorder %s65, %s81
    %p83 = scmp.eq.s32.totalorder %s17, 0
    %p84 = por %p82, %p83
    %s86 = sadd.s32 %s85, 1
    %p89 = scmp.eq.s32.totalorder %s11, 3
    %p90 = scmp.ne.s32.totalorder %s85, %s87
    %p91 = scmp.eq.s32.totalorder %s11, 0
    %p92 = por %p90, %p91
    %p93 = scmp.ne.s32.totalorder %s85, %s87
    %p94 = scmp.eq.s32.totalorder %s16, 3
    %p95 = por %p93, %p94
    %p96 = scmp.ne.s32.totalorder %s87, %s88
    %p97 = scmp.eq.s32.totalorder %s16, 0
    %p98 = por %p96, %p97
    %p99 = scmp.ne.s32.totalorder %s87, %s88
    %p100 = scmp.eq.s32.totalorder %s17, 3
    %p101 = por %p99, %p100
    %p103 = scmp.ne.s32.totalorder %s88, %s102
    %p104 = scmp.eq.s32.totalorder %s17, 0
    %p105 = por %p103, %p104
    %s107 = sadd.s32 %s106, 1
    %p110 = scmp.eq.s32.totalorder %s11, 3
    %p111 = scmp.ne.s32.totalorder %s106, %s108
    %p112 = scmp.eq.s32.totalorder %s11, 0
    %p113 = por %p111, %p112
    %p114 = scmp.ne.s32.totalorder %s106, %s108
    %p115 = scmp.eq.s32.totalorder %s16, 3
    %p116 = por %p114, %p115
    %p117 = scmp.ne.s32.totalorder %s108, %s109
    %p118 = scmp.eq.s32.totalorder %s16, 0
    %p119 = por %p117, %p118
    %p120 = scmp.ne.s32.totalorder %s108, %s109
    %p121 = scmp.eq.s32.totalorder %s17, 3
    %p122 = por %p120, %p121
    %p124 = scmp.ne.s32.totalorder %s109, %s123
    %p125 = scmp.eq.s32.totalorder %s17, 0
    %p126 = por %p124, %p125
    %s127 = ssub.s32 %s18, %s30
    %s128 = ssub.s32 %s19, %s26
    %s129 = sor.u32 %s127, %s128
    %p130 = scmp.eq.s32.totalorder %s129, 0
    %s132 = sadd.s32 %s131, 1
    %s133 = scalar_select %p130, %s131, %s132
    %p136 = pneg %p130
    %p137 = scmp.eq.s32.totalorder %s11, 3
    %p138 = por %p136, %p137
    %p139 = scmp.ne.s32.totalorder %s131, %s134
    %p140 = scmp.eq.s32.totalorder %s11, 0
    %p141 = por %p139, %p140
    %p142 = scmp.ne.s32.totalorder %s131, %s134
    %p143 = scmp.eq.s32.totalorder %s16, 3
    %p144 = por %p142, %p143
    %p145 = scmp.ne.s32.totalorder %s134, %s135
    %p146 = scmp.eq.s32.totalorder %s16, 0
    %p147 = por %p145, %p146
    %p148 = scmp.ne.s32.totalorder %s134, %s135
    %p149 = scmp.eq.s32.totalorder %s17, 3
    %p150 = por %p148, %p149
    %p152 = scmp.ne.s32.totalorder %s135, %s151
    %p153 = scmp.eq.s32.totalorder %s17, 0
    %p154 = por %p152, %p153
    %s155 = ssub.s32 %s18, %s30
    %s156 = ssub.s32 %s19, %s26
    %s157 = sor.u32 %s155, %s156
    %p158 = scmp.eq.s32.totalorder %s157, 0
    %s160 = sadd.s32 %s159, 1
    %s161 = scalar_select %p158, %s159, %s160
    %p164 = pneg %p158
    %p165 = scmp.eq.s32.totalorder %s11, 3
    %p166 = por %p164, %p165
    %p167 = scmp.ne.s32.totalorder %s159, %s162
    %p168 = scmp.eq.s32.totalorder %s11, 0
    %p169 = por %p167, %p168
    %p170 = scmp.ne.s32.totalorder %s159, %s162
    %p171 = scmp.eq.s32.totalorder %s16, 3
    %p172 = por %p170, %p171
    %p173 = scmp.ne.s32.totalorder %s162, %s163
    %p174 = scmp.eq.s32.totalorder %s16, 0
    %p175 = por %p173, %p174
    %p176 = scmp.ne.s32.totalorder %s162, %s163
    %p177 = scmp.eq.s32.totalorder %s17, 3
    %p178 = por %p176, %p177
    %p180 = scmp.ne.s32.totalorder %s163, %s179
    %p181 = scmp.eq.s32.totalorder %s17, 0
    %p182 = por %p180, %p181
    %p183 = scmp.le.s32.totalorder 1, %s11
    %p184 = scmp.lt.s32.totalorder %s11, 5
    %p185 = pnand %p183, %p184
    %p186 = pneg %p185
    // Predicated region
    $region9: #{block_forward.5} parent=5 // pred_check
      _
    $region10: #{block_forward.5} parent=5 // pred_check_branch
      %188 = sbr.rel (%p185) target = $region12
    $region11: #{block_forward.5} parent=5 // pred_region
      %s189 = ssub.s32 %s11, 1
      // Predicated region
      $region13: #{block_forward.5} parent=11 // pred_check
        %p190 = pneg %p98
      $region14: #{block_forward.5} parent=11 // pred_check_branch
        %192 = sbr.rel (%p190) target = $region16
      $region15: #{block_forward.5} parent=11 // pred_region
        _
      $region16: #{block_forward.5} parent=11 // pred_fallthru
        _
      // Predicated region
      $region17: #{block_forward.5} parent=11 // pred_check
        %p193 = pneg %p119
      $region18: #{block_forward.5} parent=11 // pred_check_branch
        %195 = sbr.rel (%p193) target = $region20
      $region19: #{block_forward.5} parent=11 // pred_region
        _
      $region20: #{block_forward.5} parent=11 // pred_fallthru
        _
    $region12: #{block_forward.5} parent=5 // pred_fallthru
      _
    %p196 = scmp.lt.s32.totalorder %s11, 4
    // Predicated region
    $region21: #{block_forward.5} parent=5 // pred_check
      %p197 = pneg %p196
    $region22: #{block_forward.5} parent=5 // pred_check_branch
      %199 = sbr.rel (%p197) target = $region24
    $region23: #{block_forward.5} parent=5 // pred_region
      // Predicated region
      $region25: #{block_forward.5} parent=23 // pred_check
        %p200 = pneg %p45
      $region26: #{block_forward.5} parent=23 // pred_check_branch
        %202 = sbr.rel (%p200) target = $region28
      $region27: #{block_forward.5} parent=23 // pred_region
        %s203 = smul.u32 4, %s19
        %p204 = scmp.lt.s32.totalorder %s18, 1
        %s205 = scalar_select %p204, %s18, 1
        %p206 = scmp.lt.s32.totalorder %s203, 7
        %s207 = scalar_select %p206, %s203, 7
        %s208 = smul.addr %s205, 8
        %s209 = sadd.s32 %s207, %s208
        %s210 = smul.addr %s209, 4
        %s211 = scalar_lea.vmem %s0, %s210
        %s212 = smul.u32 4, %s19
      $region28: #{block_forward.5} parent=23 // pred_fallthru
        _
      // Predicated region
      $region29: #{block_forward.5} parent=23 // pred_check
        %p213 = pneg %p71
      $region30: #{block_forward.5} parent=23 // pred_check_branch
        %215 = sbr.rel (%p213) target = $region32
      $region31: #{block_forward.5} parent=23 // pred_region
        %p216 = scmp.lt.s32.totalorder %s18, 1
        %s217 = scalar_select %p216, %s18, 1
        %s218 = smul.addr %s217, 16
        %s219 = smul.addr %s218, 4
        %s220 = scalar_lea.vmem %s1, %s219
      $region32: #{block_forward.5} parent=23 // pred_fallthru
        _
      // Predicated region
      $region33: #{block_forward.5} parent=23 // pred_check
        %p221 = pneg %p141
      $region34: #{block_forward.5} parent=23 // pred_check_branch
        %223 = sbr.rel (%p221) target = $region36
      $region35: #{block_forward.5} parent=23 // pred_region
        %s224 = smul.u32 4, %s19
        %p225 = scmp.lt.s32.totalorder %s18, 1
        %s226 = scalar_select %p225, %s18, 1
        %p227 = scmp.lt.s32.totalorder %s224, 7
        %s228 = scalar_select %p227, %s224, 7
        %s229 = smul.addr %s226, 8
        %s230 = sadd.s32 %s228, %s229
        %s231 = smul.addr %s230, 8
        %s232 = scalar_lea.vmem %s4, %s231
        %s233 = smul.u32 4, %s19
      $region36: #{block_forward.5} parent=23 // pred_fallthru
        _
    $region24: #{block_forward.5} parent=5 // pred_fallthru
      _
    %p234 = scmp.le.s32.totalorder 1, %s11
    %p235 = scmp.lt.s32.totalorder %s11, 5
    %p236 = pnand %p234, %p235
    %p237 = pneg %p236
    // Predicated region
    $region37: #{block_forward.5} parent=5 // pred_check
      _
    $region38: #{block_forward.5} parent=5 // pred_check_branch
      %239 = sbr.rel (%p236) target = $region40
    $region39: #{block_forward.5} parent=5 // pred_region
      %s240 = ssub.s32 %s11, 1
      %s241 = smul.u32 4, %s21
      %p242 = scmp.lt.s32.totalorder %s20, 1
      %s243 = scalar_select %p242, %s20, 1
      %p244 = scmp.lt.s32.totalorder %s241, 7
      %s245 = scalar_select %p244, %s241, 7
      %s246 = smul.addr %s243, 8
      %s247 = sadd.s32 %s245, %s246
      %s248 = smul.addr %s247, 4
      %s249 = scalar_lea.vmem %s0, %s248
      %p250 = pneg %p51
      %p251 = pneg %p48
      %p252 = scmp.lt.s32.totalorder %s20, 1
      %s253 = scalar_select %p252, %s20, 1
      %s254 = smul.addr %s253, 16
      %s255 = smul.addr %s254, 4
      %s256 = scalar_lea.vmem %s1, %s255
      %p257 = pneg %p77
      %p258 = pneg %p74
      %p259 = pneg %p98
      %p260 = pneg %p95
      %p261 = pneg %p119
      %p262 = pneg %p116
      %s263 = smul.u32 4, %s21
      %p264 = scmp.lt.s32.totalorder %s20, 1
      %s265 = scalar_select %p264, %s20, 1
      %p266 = scmp.lt.s32.totalorder %s263, 7
      %s267 = scalar_select %p266, %s263, 7
      %s268 = smul.addr %s265, 8
      %s269 = sadd.s32 %s267, %s268
      %s270 = smul.addr %s269, 8
      %s271 = scalar_lea.vmem %s4, %s270
      %p272 = pneg %p147
      %p273 = pneg %p144
      %p274 = pneg %p175
      %p275 = pneg %p172
      %s276 = smul.u32 4, %s21
      %p277 = scmp.lt.s32.totalorder %s20, 1
      %s278 = scalar_select %p277, %s20, 1
      %p279 = scmp.lt.s32.totalorder %s276, 7
      %s280 = scalar_select %p279, %s276, 7
      %s281 = smul.addr %s278, 8
      %s282 = sadd.s32 %s280, %s281
      %s283 = smul.addr %s282, 8
      %s284 = scalar_lea.vmem %s5, %s283
      %s285 = smul.u32 4, %s21
      %p286 = scmp.lt.s32.totalorder %s20, 1
      %s287 = scalar_select %p286, %s20, 1
      %p288 = scmp.lt.s32.totalorder %s285, 7
      %s289 = scalar_select %p288, %s285, 7
      %s290 = smul.addr %s287, 8
      %s291 = sadd.s32 %s289, %s290
      %s292 = smul.addr %s291, 4
      %s293 = scalar_lea.vmem %s0, %s292
      %s294 = smul.u32 4, %s21
      %p295 = scmp.lt.s32.totalorder %s20, 1
      %s296 = scalar_select %p295, %s20, 1
      %s297 = smul.addr %s296, 16
      %s298 = smul.addr %s297, 4
      %s299 = scalar_lea.vmem %s1, %s298
      %s300 = smul.u32 4, %s21
      %p301 = scmp.lt.s32.totalorder %s20, 1
      %s302 = scalar_select %p301, %s20, 1
      %p303 = scmp.lt.s32.totalorder %s300, 7
      %s304 = scalar_select %p303, %s300, 7
      %s305 = smul.addr %s302, 8
      %s306 = sadd.s32 %s304, %s305
      %s307 = smul.addr %s306, 8
      %s308 = scalar_lea.vmem %s4, %s307
      %s309 = smul.u32 4, %s21
      %s310 = smul.u32 4, %s21
      %p311 = scmp.lt.s32.totalorder %s20, 1
      %s312 = scalar_select %p311, %s20, 1
      %p313 = scmp.lt.s32.totalorder %s310, 7
      %s314 = scalar_select %p313, %s310, 7
      %s315 = smul.addr %s312, 8
      %s316 = sadd.s32 %s314, %s315
      %s317 = smul.addr %s316, 8
      %s318 = scalar_lea.vmem %s5, %s317
      %s319 = smul.u32 4, %s21
      %v321 = vld [vmem:[%s293] sm:$0xf]
      %v322 = vld [vmem:[%s293 + $0x4] sm:$0xf]
      %v323 = vld [vmem:[%s293 + $0x8] sm:$0xf]
      %v324 = vld [vmem:[%s293 + $0xc] sm:$0xf]
      %v325 = vld [vmem:[%s299] sm:$0xff]
      %v326 = vld [vmem:[%s299 + $0x8] sm:$0xff]
      %v327 = vld [vmem:[%s299 + $0x10] sm:$0xff]
      %v328 = vld [vmem:[%s299 + $0x18] sm:$0xff]
      %v329 = vld [vmem:[%s299 + $0x20] sm:$0xff]
      %v330 = vld [vmem:[%s299 + $0x28] sm:$0xff]
      %v331 = vld [vmem:[%s299 + $0x30] sm:$0xff]
      %v332 = vld [vmem:[%s299 + $0x38] sm:$0xff]
      %v337 = vunpack.c.l.b16 %v321
      %v338 = vunpack.c.l.b16 %v322
      %v339 = vunpack.c.l.b16 %v323
      %v340 = vunpack.c.l.b16 %v324
      %v341 = vpack.c.b16 %v338, %v337
      %v342 = vpack.c.b16 %v340, %v339
      %v351 = vunpack.c.l.b16 %v325
      %v352 = vunpack.c.l.b16 %v326
      %v353 = vunpack.c.l.b16 %v327
      %v354 = vunpack.c.l.b16 %v328
      %v355 = vunpack.c.l.b16 %v329
      %v356 = vunpack.c.l.b16 %v330
      %v357 = vunpack.c.l.b16 %v331
      %v358 = vunpack.c.l.b16 %v332
      %v359 = vpack.c.b16 %v352, %v351
      %v360 = vpack.c.b16 %v354, %v353
      %v361 = vpack.c.b16 %v356, %v355
      %v362 = vpack.c.b16 %v358, %v357
      %vm363 = vcmask 523264
      %v365 = vsel %vm363, %v341, 0
      %v368 = vsel %vm363, %v342, 0
      %v371 = vsel %vm363, %v359, 0
      %v374 = vsel %vm363, %v360, 0
      %v377 = vsel %vm363, %v361, 0
      %v380 = vsel %vm363, %v362, 0
      %382 = vmatprep.subr.bf16.mxu0 0
      %383 = vmatpush1.bf16.xpose.msra.mxu0 %v371
      %384 = vmatprep.subr.bf16.mxu0 0
      %385 = vmatpush1.bf16.xpose.msra.mxu0 %v374
      %386 = vmatprep.subr.bf16.mxu0 0
      %387 = vmatpush1.bf16.xpose.msra.mxu0 %v377
      %388 = vmatprep.subr.bf16.mxu0 0
      %389 = vmatpush1.bf16.xpose.msra.mxu0 %v380
      %390 = vmatprep.subr.bf16.mxu0 0
      %391 = vmatpush1.bf16.xpose.msra.mxu0 0
      %392 = vmatprep.subr.bf16.mxu0 0
      %393 = vmatpush1.bf16.xpose.msra.mxu0 0
      %394 = vmatprep.subr.bf16.mxu0 0
      %395 = vmatpush1.bf16.xpose.msra.mxu0 0
      %396 = vmatprep.subr.bf16.mxu0 0
      %397 = vmatpush1.bf16.xpose.msra.mxu0 0
      %398 = vmatprep.subr.bf16.mxu0 0
      %399 = vmatpush1.bf16.xpose.msra.mxu0 0
      %400 = vmatprep.subr.bf16.mxu0 0
      %401 = vmatpush1.bf16.xpose.msra.mxu0 0
      %402 = vmatprep.subr.bf16.mxu0 0
      %403 = vmatpush1.bf16.xpose.msra.mxu0 0
      %404 = vmatprep.subr.bf16.mxu0 0
      %405 = vmatpush1.bf16.xpose.msra.mxu0 0
      %406 = vmatprep.subr.bf16.mxu0 0
      %407 = vmatpush1.bf16.xpose.msra.mxu0 0
      %408 = vmatprep.subr.bf16.mxu0 0
      %409 = vmatpush1.bf16.xpose.msra.mxu0 0
      %410 = vmatprep.subr.bf16.mxu0 0
      %411 = vmatpush1.bf16.xpose.msra.mxu0 0
      %412 = vmatprep.subr.bf16.mxu0 0
      %413 = vmatpush1.bf16.xpose.msra.mxu0 0
      %414 = vmatprep.mubr.bf16.mxu0 0
      %415 = vmatmul.mubr.bf16.gmra.mrb[0].mxu0 %v365
      %v416 = vpop.f32.mrb[0].mxu0
      %v417 = vadd.f32 0.0, %v416
      %v418 = vpop.f32.mrb[0].mxu0
      %v419 = vpop.f32.mrb[0].mxu0
      %v420 = vadd.f32 0.0, %v419
      %v421 = vpop.f32.mrb[0].mxu0
      %422 = vmatprep.mubr.bf16.mxu0 0
      %423 = vmatmul.mubr.bf16.gmra.mrb[0].mxu0 %v368
      %v424 = vpop.f32.mrb[0].mxu0
      %v425 = vadd.f32 0.0, %v424
      %v426 = vpop.f32.mrb[0].mxu0
      %v427 = vpop.f32.mrb[0].mxu0
      %v428 = vadd.f32 0.0, %v427
      %v429 = vpop.f32.mrb[0].mxu0
      %430 = vdwg.mxu0
      %v431 = vsel %vm363, %v417, -inf
      %432 = vmax.xlane.f32.xlu0 %v431
      %v433 = vpop.xlane.xlu0 %432
      %v434 = vsel %vm363, %v420, -inf
      %435 = vmax.xlane.f32.xlu0 %v434
      %v436 = vpop.xlane.xlu0 %435
      %v437 = vsel %vm363, %v425, -inf
      %438 = vmax.xlane.f32.xlu0 %v437
      %v439 = vpop.xlane.xlu0 %438
      %v440 = vsel %vm363, %v428, -inf
      %441 = vmax.xlane.f32.xlu0 %v440
      %v442 = vpop.xlane.xlu0 %441
      %v443 = vsub.f32 %v417, %v433
      %v444 = vsub.f32 %v420, %v436
      %v445 = vsub.f32 %v425, %v439
      %v446 = vsub.f32 %v428, %v442
      %v447 = vmul.f32 %v443, 1.442695
      %v448 = vpow.pop %v447
      %v449 = vmul.f32 %v444, 1.442695
      %v450 = vpow.pop %v449
      %v451 = vmul.f32 %v445, 1.442695
      %v452 = vpow.pop %v451
      %v453 = vmul.f32 %v446, 1.442695
      %v454 = vpow.pop %v453
      %v455 = vsel %vm363, %v448, 0.0
      %456 = vadd.xlane.f32.xlu0 %v455
      %v457 = vpop.xlane.xlu0 %456
      %v458 = vsel %vm363, %v450, 0.0
      %459 = vadd.xlane.f32.xlu0 %v458
      %v460 = vpop.xlane.xlu0 %459
      %v461 = vsel %vm363, %v452, 0.0
      %462 = vadd.xlane.f32.xlu0 %v461
      %v463 = vpop.xlane.xlu0 %462
      %v464 = vsel %vm363, %v454, 0.0
      %465 = vadd.xlane.f32.xlu0 %v464
      %v466 = vpop.xlane.xlu0 %465
      %v467 = vrcp.pop %v457
      %v468 = vrcp.pop %v460
      %v469 = vrcp.pop %v463
      %v470 = vrcp.pop %v466
      %v471 = vmul.f32 %v448, %v467
      %v472 = vmul.f32 %v450, %v468
      %v473 = vmul.f32 %v452, %v469
      %v474 = vmul.f32 %v454, %v470
      %v475 = vpack.c.bf16 %v472, %v471
      %v476 = vpack.c.bf16 %v474, %v473
      %v477 = vunpack.c.h.b16 %v325
      %v478 = vunpack.c.h.b16 %v326
      %v479 = vunpack.c.h.b16 %v327
      %v480 = vunpack.c.h.b16 %v328
      %v481 = vunpack.c.h.b16 %v329
      %v482 = vunpack.c.h.b16 %v330
      %v483 = vunpack.c.h.b16 %v331
      %v484 = vunpack.c.h.b16 %v332
      %v485 = vpack.c.b16 %v478, %v477
      %v486 = vpack.c.b16 %v480, %v479
      %v487 = vpack.c.b16 %v482, %v481
      %v488 = vpack.c.b16 %v484, %v483
      %v494 = vsel %vm363, %v475, 0
      %v497 = vsel %vm363, %v476, 0
      %499 = vmatprep.subr.bf16.mxu0 0
      %500 = vmatpush1.bf16.msra.mxu0 %v485
      %501 = vmatprep.subr.bf16.mxu0 0
      %502 = vmatpush1.bf16.msra.mxu0 %v486
      %503 = vmatprep.subr.bf16.mxu0 0
      %504 = vmatpush1.bf16.msra.mxu0 %v487
      %505 = vmatprep.subr.bf16.mxu0 0
      %506 = vmatpush1.bf16.msra.mxu0 %v488
      %507 = vmatprep.subr.bf16.mxu0 0
      %508 = vmatpush1.bf16.msra.mxu0 0
      %509 = vmatprep.subr.bf16.mxu0 0
      %510 = vmatpush1.bf16.msra.mxu0 0
      %511 = vmatprep.subr.bf16.mxu0 0
      %512 = vmatpush1.bf16.msra.mxu0 0
      %513 = vmatprep.subr.bf16.mxu0 0
      %514 = vmatpush1.bf16.msra.mxu0 0
      %515 = vmatprep.subr.bf16.mxu0 0
      %516 = vmatpush1.bf16.msra.mxu0 0
      %517 = vmatprep.subr.bf16.mxu0 0
      %518 = vmatpush1.bf16.msra.mxu0 0
      %519 = vmatprep.subr.bf16.mxu0 0
      %520 = vmatpush1.bf16.msra.mxu0 0
      %521 = vmatprep.subr.bf16.mxu0 0
      %522 = vmatpush1.bf16.msra.mxu0 0
      %523 = vmatprep.subr.bf16.mxu0 0
      %524 = vmatpush1.bf16.msra.mxu0 0
      %525 = vmatprep.subr.bf16.mxu0 0
      %526 = vmatpush1.bf16.msra.mxu0 0
      %527 = vmatprep.subr.bf16.mxu0 0
      %528 = vmatpush1.bf16.msra.mxu0 0
      %529 = vmatprep.subr.bf16.mxu0 0
      %530 = vmatpush1.bf16.msra.mxu0 0
      %531 = vmatprep.mubr.bf16.mxu0 0
      %532 = vmatmul.mubr.bf16.gmra.mrb[0].mxu0 %v494
      %v533 = vpop.f32.mrb[0].mxu0
      %v534 = vadd.f32 0.0, %v533
      %v535 = vpop.f32.mrb[0].mxu0
      %v536 = vpop.f32.mrb[0].mxu0
      %v537 = vadd.f32 0.0, %v536
      %v538 = vpop.f32.mrb[0].mxu0
      %539 = vmatprep.mubr.bf16.mxu0 0
      %540 = vmatmul.mubr.bf16.gmra.mrb[0].mxu0 %v497
      %v541 = vpop.f32.mrb[0].mxu0
      %v542 = vadd.f32 0.0, %v541
      %v543 = vpop.f32.mrb[0].mxu0
      %v544 = vpop.f32.mrb[0].mxu0
      %v545 = vadd.f32 0.0, %v544
      %v546 = vpop.f32.mrb[0].mxu0
      %547 = vdwg.mxu0
      %548 = vrot.lane.b32.xlu0 %v341, 64
      %v549 = vpop.permute.xlu0 %548
      %550 = vrot.lane.b32.xlu0 %v342, 64
      %v551 = vpop.permute.xlu0 %550
      %552 = vrot.lane.b32.xlu0 %v359, 64
      %v553 = vpop.permute.xlu0 %552
      %554 = vrot.lane.b32.xlu0 %v360, 64
      %v555 = vpop.permute.xlu0 %554
      %556 = vrot.lane.b32.xlu0 %v361, 64
      %v557 = vpop.permute.xlu0 %556
      %558 = vrot.lane.b32.xlu0 %v362, 64
      %v559 = vpop.permute.xlu0 %558
      %v561 = vsel %vm363, %v549, 0
      %v564 = vsel %vm363, %v551, 0
      %v567 = vsel %vm363, %v553, 0
      %v570 = vsel %vm363, %v555, 0
      %v573 = vsel %vm363, %v557, 0
      %v576 = vsel %vm363, %v559, 0
      %578 = vmatprep.subr.bf16.mxu0 0
      %579 = vmatpush1.bf16.xpose.msra.mxu0 %v567
      %580 = vmatprep.subr.bf16.mxu0 0
      %581 = vmatpush1.bf16.xpose.msra.mxu0 %v570
      %582 = vmatprep.subr.bf16.mxu0 0
      %583 = vmatpush1.bf16.xpose.msra.mxu0 %v573
      %584 = vmatprep.subr.bf16.mxu0 0
      %585 = vmatpush1.bf16.xpose.msra.mxu0 %v576
      %586 = vmatprep.subr.bf16.mxu0 0
      %587 = vmatpush1.bf16.xpose.msra.mxu0 0
      %588 = vmatprep.subr.bf16.mxu0 0
      %589 = vmatpush1.bf16.xpose.msra.mxu0 0
      %590 = vmatprep.subr.bf16.mxu0 0
      %591 = vmatpush1.bf16.xpose.msra.mxu0 0
      %592 = vmatprep.subr.bf16.mxu0 0
      %593 = vmatpush1.bf16.xpose.msra.mxu0 0
      %594 = vmatprep.subr.bf16.mxu0 0
      %595 = vmatpush1.bf16.xpose.msra.mxu0 0
      %596 = vmatprep.subr.bf16.mxu0 0
      %597 = vmatpush1.bf16.xpose.msra.mxu0 0
      %598 = vmatprep.subr.bf16.mxu0 0
      %599 = vmatpush1.bf16.xpose.msra.mxu0 0
      %600 = vmatprep.subr.bf16.mxu0 0
      %601 = vmatpush1.bf16.xpose.msra.mxu0 0
      %602 = vmatprep.subr.bf16.mxu0 0
      %603 = vmatpush1.bf16.xpose.msra.mxu0 0
      %604 = vmatprep.subr.bf16.mxu0 0
      %605 = vmatpush1.bf16.xpose.msra.mxu0 0
      %606 = vmatprep.subr.bf16.mxu0 0
      %607 = vmatpush1.bf16.xpose.msra.mxu0 0
      %608 = vmatprep.subr.bf16.mxu0 0
      %609 = vmatpush1.bf16.xpose.msra.mxu0 0
      %610 = vmatprep.mubr.bf16.mxu0 0
      %611 = vmatmul.mubr.bf16.gmra.mrb[0].mxu0 %v561
      %v612 = vpop.f32.mrb[0].mxu0
      %v613 = vadd.f32 0.0, %v612
      %v614 = vpop.f32.mrb[0].mxu0
      %v615 = vpop.f32.mrb[0].mxu0
      %v616 = vadd.f32 0.0, %v615
      %v617 = vpop.f32.mrb[0].mxu0
      %618 = vmatprep.mubr.bf16.mxu0 0
      %619 = vmatmul.mubr.bf16.gmra.mrb[0].mxu0 %v564
      %v620 = vpop.f32.mrb[0].mxu0
      %v621 = vadd.f32 0.0, %v620
      %v622 = vpop.f32.mrb[0].mxu0
      %v623 = vpop.f32.mrb[0].mxu0
      %v624 = vadd.f32 0.0, %v623
      %v625 = vpop.f32.mrb[0].mxu0
      %626 = vdwg.mxu0
      %v627 = vsel %vm363, %v613, -inf
      %628 = vmax.xlane.f32.xlu0 %v627
      %v629 = vpop.xlane.xlu0 %628
      %v630 = vsel %vm363, %v616, -inf
      %631 = vmax.xlane.f32.xlu0 %v630
      %v632 = vpop.xlane.xlu0 %631
      %v633 = vsel %vm363, %v621, -inf
      %634 = vmax.xlane.f32.xlu0 %v633
      %v635 = vpop.xlane.xlu0 %634
      %v636 = vsel %vm363, %v624, -inf
      %637 = vmax.xlane.f32.xlu0 %v636
      %v638 = vpop.xlane.xlu0 %637
      %v639 = vsub.f32 %v613, %v629
      %v640 = vsub.f32 %v616, %v632
      %v641 = vsub.f32 %v621, %v635
      %v642 = vsub.f32 %v624, %v638
      %v643 = vmul.f32 %v639, 1.442695
      %v644 = vpow.pop %v643
      %v645 = vmul.f32 %v640, 1.442695
      %v646 = vpow.pop %v645
      %v647 = vmul.f32 %v641, 1.442695
      %v648 = vpow.pop %v647
      %v649 = vmul.f32 %v642, 1.442695
      %v650 = vpow.pop %v649
      %v651 = vsel %vm363, %v644, 0.0
      %652 = vadd.xlane.f32.xlu0 %v651
      %v653 = vpop.xlane.xlu0 %652
      %v654 = vsel %vm363, %v646, 0.0
      %655 = vadd.xlane.f32.xlu0 %v654
      %v656 = vpop.xlane.xlu0 %655
      %v657 = vsel %vm363, %v648, 0.0
      %658 = vadd.xlane.f32.xlu0 %v657
      %v659 = vpop.xlane.xlu0 %658
      %v660 = vsel %vm363, %v650, 0.0
      %661 = vadd.xlane.f32.xlu0 %v660
      %v662 = vpop.xlane.xlu0 %661
      %v663 = vrcp.pop %v653
      %v664 = vrcp.pop %v656
      %v665 = vrcp.pop %v659
      %v666 = vrcp.pop %v662
      %v667 = vmul.f32 %v644, %v663
      %v668 = vmul.f32 %v646, %v664
      %v669 = vmul.f32 %v648, %v665
      %v670 = vmul.f32 %v650, %v666
      %v671 = vpack.c.bf16 %v668, %v667
      %v672 = vpack.c.bf16 %v670, %v669
      %673 = vrot.lane.b32.xlu0 %v485, 64
      %v674 = vpop.permute.xlu0 %673
      %675 = vrot.lane.b32.xlu0 %v486, 64
      %v676 = vpop.permute.xlu0 %675
      %677 = vrot.lane.b32.xlu0 %v487, 64
      %v678 = vpop.permute.xlu0 %677
      %679 = vrot.lane.b32.xlu0 %v488, 64
      %v680 = vpop.permute.xlu0 %679
      %v686 = vsel %vm363, %v671, 0
      %v689 = vsel %vm363, %v672, 0
      %691 = vmatprep.subr.bf16.mxu0 0
      %692 = vmatpush1.bf16.msra.mxu0 %v674
      %693 = vmatprep.subr.bf16.mxu0 0
      %694 = vmatpush1.bf16.msra.mxu0 %v676
      %695 = vmatprep.subr.bf16.mxu0 0
      %696 = vmatpush1.bf16.msra.mxu0 %v678
      %697 = vmatprep.subr.bf16.mxu0 0
      %698 = vmatpush1.bf16.msra.mxu0 %v680
      %699 = vmatprep.subr.bf16.mxu0 0
      %700 = vmatpush1.bf16.msra.mxu0 0
      %701 = vmatprep.subr.bf16.mxu0 0
      %702 = vmatpush1.bf16.msra.mxu0 0
      %703 = vmatprep.subr.bf16.mxu0 0
      %704 = vmatpush1.bf16.msra.mxu0 0
      %705 = vmatprep.subr.bf16.mxu0 0
      %706 = vmatpush1.bf16.msra.mxu0 0
      %707 = vmatprep.subr.bf16.mxu0 0
      %708 = vmatpush1.bf16.msra.mxu0 0
      %709 = vmatprep.subr.bf16.mxu0 0
      %710 = vmatpush1.bf16.msra.mxu0 0
      %711 = vmatprep.subr.bf16.mxu0 0
      %712 = vmatpush1.bf16.msra.mxu0 0
      %713 = vmatprep.subr.bf16.mxu0 0
      %714 = vmatpush1.bf16.msra.mxu0 0
      %715 = vmatprep.subr.bf16.mxu0 0
      %716 = vmatpush1.bf16.msra.mxu0 0
      %717 = vmatprep.subr.bf16.mxu0 0
      %718 = vmatpush1.bf16.msra.mxu0 0
      %719 = vmatprep.subr.bf16.mxu0 0
      %720 = vmatpush1.bf16.msra.mxu0 0
      %721 = vmatprep.subr.bf16.mxu0 0
      %722 = vmatpush1.bf16.msra.mxu0 0
      %723 = vmatprep.mubr.bf16.mxu0 0
      %724 = vmatmul.mubr.bf16.gmra.mrb[0].mxu0 %v686
      %v725 = vpop.f32.mrb[0].mxu0
      %v726 = vadd.f32 0.0, %v725
      %v727 = vpop.f32.mrb[0].mxu0
      %v728 = vpop.f32.mrb[0].mxu0
      %v729 = vadd.f32 0.0, %v728
      %v730 = vpop.f32.mrb[0].mxu0
      %731 = vmatprep.mubr.bf16.mxu0 0
      %732 = vmatmul.mubr.bf16.gmra.mrb[0].mxu0 %v689
      %v733 = vpop.f32.mrb[0].mxu0
      %v734 = vadd.f32 0.0, %v733
      %v735 = vpop.f32.mrb[0].mxu0
      %v736 = vpop.f32.mrb[0].mxu0
      %v737 = vadd.f32 0.0, %v736
      %v738 = vpop.f32.mrb[0].mxu0
      %739 = vdwg.mxu0
      %744 = vrot.lane.b32.xlu0 %v726, 64
      %v745 = vpop.permute.xlu0 %744
      %746 = vrot.lane.b32.xlu0 %v729, 64
      %v747 = vpop.permute.xlu0 %746
      %748 = vrot.lane.b32.xlu0 %v734, 64
      %v749 = vpop.permute.xlu0 %748
      %750 = vrot.lane.b32.xlu0 %v737, 64
      %v751 = vpop.permute.xlu0 %750
      %v756 = vsel %vm363, %v534, %v745
      %v757 = vsel %vm363, %v537, %v747
      %v758 = vsel %vm363, %v542, %v749
      %v759 = vsel %vm363, %v545, %v751
      %v760 = vpack.c.bf16 %v757, %v756
      %v761 = vpack.c.bf16 %v759, %v758
      %v762 = vld [vmem:[%s2] sm:$0xf]
      %v763 = vld [vmem:[%s2 + $0x4] sm:$0xf]
      %v764 = vld [vmem:[%s2 + $0x8] sm:$0xf]
      %v765 = vld [vmem:[%s2 + $0xc] sm:$0xf]
      %v766 = vld [vmem:[%s2 + $0x10] sm:$0xf]
      %v767 = vld [vmem:[%s2 + $0x14] sm:$0xf]
      %v768 = vld [vmem:[%s2 + $0x18] sm:$0xf]
      %v769 = vld [vmem:[%s2 + $0x1c] sm:$0xf]
      %v770 = vld [vmem:[%s2 + $0x20] sm:$0xf]
      %v771 = vld [vmem:[%s2 + $0x24] sm:$0xf]
      %v772 = vld [vmem:[%s2 + $0x28] sm:$0xf]
      %v773 = vld [vmem:[%s2 + $0x2c] sm:$0xf]
      %v774 = vld [vmem:[%s2 + $0x30] sm:$0xf]
      %v775 = vld [vmem:[%s2 + $0x34] sm:$0xf]
      %v776 = vld [vmem:[%s2 + $0x38] sm:$0xf]
      %v777 = vld [vmem:[%s2 + $0x3c] sm:$0xf]
      %v778 = vld [vmem:[%s3] sm:$0x1]
      %v780 = vlaneseq
      %v781 = vshrl.u32 %v780, 7
      %v782 = vsub.s32 0, %v781
      %v783 = vrot.slane %v778, %v782
      %v801 = vunpack.c.l.b16 %v762
      %v802 = vunpack.c.l.b16 %v763
      %v803 = vunpack.c.l.b16 %v764
      %v804 = vunpack.c.l.b16 %v765
      %v805 = vunpack.c.l.b16 %v766
      %v806 = vunpack.c.l.b16 %v767
      %v807 = vunpack.c.l.b16 %v768
      %v808 = vunpack.c.l.b16 %v769
      %v809 = vunpack.c.l.b16 %v770
      %v810 = vunpack.c.l.b16 %v771
      %v811 = vunpack.c.l.b16 %v772
      %v812 = vunpack.c.l.b16 %v773
      %v813 = vunpack.c.l.b16 %v774
      %v814 = vunpack.c.l.b16 %v775
      %v815 = vunpack.c.l.b16 %v776
      %v816 = vunpack.c.l.b16 %v777
      %v817 = vpack.c.b16 %v802, %v801
      %v818 = vpack.c.b16 %v804, %v803
      %v819 = vpack.c.b16 %v806, %v805
      %v820 = vpack.c.b16 %v808, %v807
      %v821 = vpack.c.b16 %v810, %v809
      %v822 = vpack.c.b16 %v812, %v811
      %v823 = vpack.c.b16 %v814, %v813
      %v824 = vpack.c.b16 %v816, %v815
      %833 = vmatprep.subr.bf16.mxu0 0
      %834 = vmatpush1.bf16.msra.mxu0 %v817
      %835 = vmatprep.subr.bf16.mxu0 0
      %836 = vmatpush1.bf16.msra.mxu0 %v818
      %837 = vmatprep.subr.bf16.mxu0 0
      %838 = vmatpush1.bf16.msra.mxu0 %v819
      %839 = vmatprep.subr.bf16.mxu0 0
      %840 = vmatpush1.bf16.msra.mxu0 %v820
      %841 = vmatprep.subr.bf16.mxu0 0
      %842 = vmatpush1.bf16.msra.mxu0 %v821
      %843 = vmatprep.subr.bf16.mxu0 0
      %844 = vmatpush1.bf16.msra.mxu0 %v822
      %845 = vmatprep.subr.bf16.mxu0 0
      %846 = vmatpush1.bf16.msra.mxu0 %v823
      %847 = vmatprep.subr.bf16.mxu0 0
      %848 = vmatpush1.bf16.msra.mxu0 %v824
      %849 = vmatprep.subr.bf16.mxu0 0
      %850 = vmatpush1.bf16.msra.mxu0 0
      %851 = vmatprep.subr.bf16.mxu0 0
      %852 = vmatpush1.bf16.msra.mxu0 0
      %853 = vmatprep.subr.bf16.mxu0 0
      %854 = vmatpush1.bf16.msra.mxu0 0
      %855 = vmatprep.subr.bf16.mxu0 0
      %856 = vmatpush1.bf16.msra.mxu0 0
      %857 = vmatprep.subr.bf16.mxu0 0
      %858 = vmatpush1.bf16.msra.mxu0 0
      %859 = vmatprep.subr.bf16.mxu0 0
      %860 = vmatpush1.bf16.msra.mxu0 0
      %861 = vmatprep.subr.bf16.mxu0 0
      %862 = vmatpush1.bf16.msra.mxu0 0
      %863 = vmatprep.subr.bf16.mxu0 0
      %864 = vmatpush1.bf16.msra.mxu0 0
      %865 = vmatprep.mubr.bf16.mxu0 0
      %866 = vmatmul.mubr.bf16.gmra.mrb[0].mxu0 %v760
      %v867 = vpop.f32.mrb[0].mxu0
      %v868 = vadd.f32 %v783, %v867
      %v869 = vpop.f32.mrb[0].mxu0
      %v870 = vpop.f32.mrb[0].mxu0
      %v871 = vadd.f32 %v783, %v870
      %v872 = vpop.f32.mrb[0].mxu0
      %873 = vmatprep.mubr.bf16.mxu0 0
      %874 = vmatmul.mubr.bf16.gmra.mrb[0].mxu0 %v761
      %v875 = vpop.f32.mrb[0].mxu0
      %v876 = vadd.f32 %v783, %v875
      %v877 = vpop.f32.mrb[0].mxu0
      %v878 = vpop.f32.mrb[0].mxu0
      %v879 = vadd.f32 %v783, %v878
      %v880 = vpop.f32.mrb[0].mxu0
      %881 = vdwg.mxu0
      %v882 = vld [vmem:[%s308] sm:$0xff]
      %v883 = vld [vmem:[%s308 + $0x8] sm:$0xff]
      %v884 = vld [vmem:[%s308 + $0x10] sm:$0xff]
      %v885 = vld [vmem:[%s308 + $0x18] sm:$0xff]
      %v886 = vadd.f32 %v868, %v882
      %v887 = vadd.f32 %v871, %v883
      %v888 = vadd.f32 %v876, %v884
      %v889 = vadd.f32 %v879, %v885
      %890 = vst [vmem:[%s318] sm:$0xff] %v886
      %891 = vst [vmem:[%s318 + $0x8] sm:$0xff] %v887
      %892 = vst [vmem:[%s318 + $0x10] sm:$0xff] %v888
      %893 = vst [vmem:[%s318 + $0x18] sm:$0xff] %v889
      %s894 = smul.u32 4, %s21
      %p895 = scmp.lt.s32.totalorder %s20, 1
      %s896 = scalar_select %p895, %s20, 1
      %p897 = scmp.lt.s32.totalorder %s894, 7
      %s898 = scalar_select %p897, %s894, 7
      %s899 = smul.addr %s896, 8
      %s900 = sadd.s32 %s898, %s899
      %s901 = smul.addr %s900, 8
      %s902 = scalar_lea.vmem %s5, %s901
      // Predicated region
      $region41: #{block_forward.5} parent=39 // pred_check
        %p903 = pneg %p172
      $region42: #{block_forward.5} parent=39 // pred_check_branch
        %905 = sbr.rel (%p903) target = $region44
      $region43: #{block_forward.5} parent=39 // pred_region
        %s906 = smul.u32 4, %s21
      $region44: #{block_forward.5} parent=39 // pred_fallthru
        _
    $region40: #{block_forward.5} parent=5 // pred_fallthru
      _
    %p907 = scmp.le.s32.totalorder 2, %s11
    // Predicated region
    $region45: #{block_forward.5} parent=5 // pred_check
      %p908 = pneg %p907
    $region46: #{block_forward.5} parent=5 // pred_check_branch
      %910 = sbr.rel (%p908) target = $region48
    $region47: #{block_forward.5} parent=5 // pred_region
      %s911 = ssub.s32 %s11, 2
      // Predicated region
      $region49: #{block_forward.5} parent=47 // pred_check
        %p912 = pneg %p178
      $region50: #{block_forward.5} parent=47 // pred_check_branch
        %914 = sbr.rel (%p912) target = $region52
      $region51: #{block_forward.5} parent=47 // pred_region
        %s915 = smul.u32 4, %s23
        %p916 = scmp.lt.s32.totalorder %s22, 1
        %s917 = scalar_select %p916, %s22, 1
        %p918 = scmp.lt.s32.totalorder %s915, 7
        %s919 = scalar_select %p918, %s915, 7
        %s920 = smul.addr %s917, 8
        %s921 = sadd.s32 %s919, %s920
        %s922 = smul.addr %s921, 8
        %s923 = scalar_lea.vmem %s5, %s922
      $region52: #{block_forward.5} parent=47 // pred_fallthru
        _
    $region48: #{block_forward.5} parent=5 // pred_fallthru
      _
  $region6: #{block_forward.5} parent=0 // loop_footer
    %s15 = sadd.s32 1, %s11
  $region7: #{block_forward.5} parent=0 // loop_footer_branch
    %10 = sbr.rel target = $region3
  $region8: #{block_forward.5} parent=0 // loop_exit
    _

// kernel: block_forward.4
$region0: #{block_forward.4}
  #allocation0 [shape = 'u32[]', space=smem, size = 0x4, offset = 0x4, fixed_abs, tag = 'smem constant byte address 0x4 - core index']
  #allocation1 [shape = 'u32[144,128]{1,0:T(1,128)}', space=vmem, size = 0x12000, scoped, tag = 'internal scratch']
  %s0 = inlined_call_operand.hbm [shape: f32[128,128], index: 0, kind: input, shape index: {}]
  %s1 = inlined_call_operand.vmem [shape: f32[1,128], index: 1, kind: input, shape index: {}]
  %s2 = inlined_call_operand.hbm [shape: f32[1,128], index: 2, kind: input, shape index: {}]
  %s3 = inlined_call_operand.hbm [shape: bf16[128,128], index: 3, kind: input, shape index: {}]
  %s4 = inlined_call_operand.vmem [shape: f32[1,128], index: 4, kind: input, shape index: {}]
  %s5 = inlined_call_operand.hbm [shape: bf16[128,256], index: 5, kind: input, shape index: {}]
  %s6 = inlined_call_operand.vmem [shape: f32[1,256], index: 6, kind: input, shape index: {}]
  %s7 = inlined_call_operand.vmem [shape: bf16[128,128], index: 7, kind: output, shape index: {0}]
  %s8 = inlined_call_operand.vmem [shape: bf16[128,256], index: 8, kind: output, shape index: {1}]
  %9 = xla_tuple %s7, %s8
  %s10 = sld [smem:[#allocation0]]
  $region85: #{block_forward.4} parent=0
    _
  %s12 = ssub.s32 1, %s10
  %s13 = scalar_select 0, %s12, %s10
  $region1: #{block_forward.4} parent=0
    #allocation2 [shape = 'u8[65536]{0}', space=vmem, size = 0x10000, scoped, tag = 'input window, operand 0']
    #allocation3 [shape = 's32[2]{0}', space=sflag, size = 0x8, scoped, tag = 'scoped memory for block_forward.4']
    #allocation4 [shape = 'u8[512]{0}', space=vmem, size = 0x400, scoped, tag = 'input window, operand 2, single buffered']
    #allocation5 [shape = 's32[1]{0}', space=sflag, size = 0x4, scoped, tag = 'scoped memory for block_forward.4']
    #allocation6 [shape = 'u8[32768]{0}', space=vmem, size = 0x8000, scoped, tag = 'input window, operand 3, single buffered']
    #allocation7 [shape = 'u8[65536]{0}', space=vmem, size = 0x10000, scoped, tag = 'input window, operand 5, single buffered']
    #allocation8 [shape = 's32[1]{0}', space=sflag, size = 0x4, scoped, tag = 'scoped memory for block_forward.4']
    %14 = vsyncpa [#allocation3], 0
    %s15 = scalar_lea.sflag [#allocation3], 1
    %16 = vsyncpa %s15, 0
    %17 = vsyncpa [#allocation5], 0
    %18 = vsyncpa [#allocation8], 0
    loop: start=0, step=1, limit=4
    $region2: #{block_forward.4} parent=1 // loop_pre_header
      _
    $region3: #{block_forward.4} parent=1 // loop_header
      %s20 = sphi 0, %s24
      %p21 = scmp.ge.s32.totalorder %s20, 4
      %s30 = sphi 0, %s32
      %s33 = sphi 0, %s30
      %s34 = sphi 0, %s33
      %s50 = sphi 0, %s34
      %s54 = sphi 0, %s54
      %s56 = sphi 0, %s54
      %s57 = sphi 0, %s56
      %s71 = sphi 0, %s57
      %s75 = sphi 0, %s75
      %s77 = sphi 0, %s75
      %s78 = sphi 0, %s77
      %s92 = sphi 0, %s78
      %s96 = sphi 0, %s96
      %s98 = sphi 0, %s96
      %s99 = sphi 0, %s98
      %s113 = sphi 0, %s99
      %s117 = sphi 0, %s117
      %s119 = sphi 0, %s117
      %s120 = sphi 0, %s119
      %s134 = sphi 0, %s120
      %s138 = sphi 0, %s138
      %s140 = sphi 0, %s138
      %s141 = sphi 0, %s140
      %s155 = sphi 0, %s141
      %s159 = sphi 0, %s159
      %s161 = sphi 0, %s159
      %s162 = sphi 0, %s161
      %s176 = sphi 0, %s162
      %s182 = sphi 0, %s184
      %s185 = sphi 0, %s182
      %s186 = sphi 0, %s185
      %s202 = sphi 0, %s186
      %s208 = sphi 0, %s210
      %s211 = sphi 0, %s208
      %s212 = sphi 0, %s211
      %s228 = sphi 0, %s212
    $region4: #{block_forward.4} parent=1 // loop_header_branch
      %23 = sbr.rel (%p21) target = $region8
    $region5: #{block_forward.4} parent=1 // loop_body
      %s25 = ssub.s32 %s20, 1
      %s26 = ssub.s32 %s20, 2
      %s27 = sadd.s32 %s20, 1
      %s28 = ssub.s32 %s20, %s27
      %p29 = scmp.eq.s32.totalorder %s28, 0
      %s31 = sadd.s32 %s30, 1
      %s32 = scalar_select %p29, %s30, %s31
      %p35 = pneg %p29
      %p36 = scmp.eq.s32.totalorder %s20, 1
      %p37 = por %p35, %p36
      %p38 = scmp.ne.s32.totalorder %s30, %s33
      %p39 = scmp.eq.s32.totalorder %s20, 0
      %p40 = por %p38, %p39
      %p41 = scmp.ne.s32.totalorder %s30, %s33
      %p42 = scmp.eq.s32.totalorder %s25, 1
      %p43 = por %p41, %p42
      %p44 = scmp.ne.s32.totalorder %s33, %s34
      %p45 = scmp.eq.s32.totalorder %s25, 0
      %p46 = por %p44, %p45
      %p47 = scmp.ne.s32.totalorder %s33, %s34
      %p48 = scmp.eq.s32.totalorder %s26, 1
      %p49 = por %p47, %p48
      %p51 = scmp.ne.s32.totalorder %s34, %s50
      %p52 = scmp.eq.s32.totalorder %s26, 0
      %p53 = por %p51, %p52
      %s55 = sadd.s32 %s54, 1
      %p58 = scmp.eq.s32.totalorder %s20, 1
      %p59 = scmp.ne.s32.totalorder %s54, %s56
      %p60 = scmp.eq.s32.totalorder %s20, 0
      %p61 = por %p59, %p60
      %p62 = scmp.ne.s32.totalorder %s54, %s56
      %p63 = scmp.eq.s32.totalorder %s25, 1
      %p64 = por %p62, %p63
      %p65 = scmp.ne.s32.totalorder %s56, %s57
      %p66 = scmp.eq.s32.totalorder %s25, 0
      %p67 = por %p65, %p66
      %p68 = scmp.ne.s32.totalorder %s56, %s57
      %p69 = scmp.eq.s32.totalorder %s26, 1
      %p70 = por %p68, %p69
      %p72 = scmp.ne.s32.totalorder %s57, %s71
      %p73 = scmp.eq.s32.totalorder %s26, 0
      %p74 = por %p72, %p73
      %s76 = sadd.s32 %s75, 1
      %p79 = scmp.eq.s32.totalorder %s20, 1
      %p80 = scmp.ne.s32.totalorder %s75, %s77
      %p81 = scmp.eq.s32.totalorder %s20, 0
      %p82 = por %p80, %p81
      %p83 = scmp.ne.s32.totalorder %s75, %s77
      %p84 = scmp.eq.s32.totalorder %s25, 1
      %p85 = por %p83, %p84
      %p86 = scmp.ne.s32.totalorder %s77, %s78
      %p87 = scmp.eq.s32.totalorder %s25, 0
      %p88 = por %p86, %p87
      %p89 = scmp.ne.s32.totalorder %s77, %s78
      %p90 = scmp.eq.s32.totalorder %s26, 1
      %p91 = por %p89, %p90
      %p93 = scmp.ne.s32.totalorder %s78, %s92
      %p94 = scmp.eq.s32.totalorder %s26, 0
      %p95 = por %p93, %p94
      %s97 = sadd.s32 %s96, 1
      %p100 = scmp.eq.s32.totalorder %s20, 1
      %p101 = scmp.ne.s32.totalorder %s96, %s98
      %p102 = scmp.eq.s32.totalorder %s20, 0
      %p103 = por %p101, %p102
      %p104 = scmp.ne.s32.totalorder %s96, %s98
      %p105 = scmp.eq.s32.totalorder %s25, 1
      %p106 = por %p104, %p105
      %p107 = scmp.ne.s32.totalorder %s98, %s99
      %p108 = scmp.eq.s32.totalorder %s25, 0
      %p109 = por %p107, %p108
      %p110 = scmp.ne.s32.totalorder %s98, %s99
      %p111 = scmp.eq.s32.totalorder %s26, 1
      %p112 = por %p110, %p111
      %p114 = scmp.ne.s32.totalorder %s99, %s113
      %p115 = scmp.eq.s32.totalorder %s26, 0
      %p116 = por %p114, %p115
      %s118 = sadd.s32 %s117, 1
      %p121 = scmp.eq.s32.totalorder %s20, 1
      %p122 = scmp.ne.s32.totalorder %s117, %s119
      %p123 = scmp.eq.s32.totalorder %s20, 0
      %p124 = por %p122, %p123
      %p125 = scmp.ne.s32.totalorder %s117, %s119
      %p126 = scmp.eq.s32.totalorder %s25, 1
      %p127 = por %p125, %p126
      %p128 = scmp.ne.s32.totalorder %s119, %s120
      %p129 = scmp.eq.s32.totalorder %s25, 0
      %p130 = por %p128, %p129
      %p131 = scmp.ne.s32.totalorder %s119, %s120
      %p132 = scmp.eq.s32.totalorder %s26, 1
      %p133 = por %p131, %p132
      %p135 = scmp.ne.s32.totalorder %s120, %s134
      %p136 = scmp.eq.s32.totalorder %s26, 0
      %p137 = por %p135, %p136
      %s139 = sadd.s32 %s138, 1
      %p142 = scmp.eq.s32.totalorder %s20, 1
      %p143 = scmp.ne.s32.totalorder %s138, %s140
      %p144 = scmp.eq.s32.totalorder %s20, 0
      %p145 = por %p143, %p144
      %p146 = scmp.ne.s32.totalorder %s138, %s140
      %p147 = scmp.eq.s32.totalorder %s25, 1
      %p148 = por %p146, %p147
      %p149 = scmp.ne.s32.totalorder %s140, %s141
      %p150 = scmp.eq.s32.totalorder %s25, 0
      %p151 = por %p149, %p150
      %p152 = scmp.ne.s32.totalorder %s140, %s141
      %p153 = scmp.eq.s32.totalorder %s26, 1
      %p154 = por %p152, %p153
      %p156 = scmp.ne.s32.totalorder %s141, %s155
      %p157 = scmp.eq.s32.totalorder %s26, 0
      %p158 = por %p156, %p157
      %s160 = sadd.s32 %s159, 1
      %p163 = scmp.eq.s32.totalorder %s20, 1
      %p164 = scmp.ne.s32.totalorder %s159, %s161
      %p165 = scmp.eq.s32.totalorder %s20, 0
      %p166 = por %p164, %p165
      %p167 = scmp.ne.s32.totalorder %s159, %s161
      %p168 = scmp.eq.s32.totalorder %s25, 1
      %p169 = por %p167, %p168
      %p170 = scmp.ne.s32.totalorder %s161, %s162
      %p171 = scmp.eq.s32.totalorder %s25, 0
      %p172 = por %p170, %p171
      %p173 = scmp.ne.s32.totalorder %s161, %s162
      %p174 = scmp.eq.s32.totalorder %s26, 1
      %p175 = por %p173, %p174
      %p177 = scmp.ne.s32.totalorder %s162, %s176
      %p178 = scmp.eq.s32.totalorder %s26, 0
      %p179 = por %p177, %p178
      %s180 = ssub.s32 %s20, %s27
      %p181 = scmp.eq.s32.totalorder %s180, 0
      %s183 = sadd.s32 %s182, 1
      %s184 = scalar_select %p181, %s182, %s183
      %p187 = pneg %p181
      %p188 = scmp.eq.s32.totalorder %s20, 1
      %p189 = por %p187, %p188
      %p190 = scmp.ne.s32.totalorder %s182, %s185
      %p191 = scmp.eq.s32.totalorder %s20, 0
      %p192 = por %p190, %p191
      %p193 = scmp.ne.s32.totalorder %s182, %s185
      %p194 = scmp.eq.s32.totalorder %s25, 1
      %p195 = por %p193, %p194
      %p196 = scmp.ne.s32.totalorder %s185, %s186
      %p197 = scmp.eq.s32.totalorder %s25, 0
      %p198 = por %p196, %p197
      %p199 = scmp.ne.s32.totalorder %s185, %s186
      %p200 = scmp.eq.s32.totalorder %s26, 1
      %p201 = por %p199, %p200
      %p203 = scmp.ne.s32.totalorder %s186, %s202
      %p204 = scmp.eq.s32.totalorder %s26, 0
      %p205 = por %p203, %p204
      %s206 = ssub.s32 %s20, %s27
      %p207 = scmp.eq.s32.totalorder %s206, 0
      %s209 = sadd.s32 %s208, 1
      %s210 = scalar_select %p207, %s208, %s209
      %p213 = pneg %p207
      %p214 = scmp.eq.s32.totalorder %s20, 1
      %p215 = por %p213, %p214
      %p216 = scmp.ne.s32.totalorder %s208, %s211
      %p217 = scmp.eq.s32.totalorder %s20, 0
      %p218 = por %p216, %p217
      %p219 = scmp.ne.s32.totalorder %s208, %s211
      %p220 = scmp.eq.s32.totalorder %s25, 1
      %p221 = por %p219, %p220
      %p222 = scmp.ne.s32.totalorder %s211, %s212
      %p223 = scmp.eq.s32.totalorder %s25, 0
      %p224 = por %p222, %p223
      %p225 = scmp.ne.s32.totalorder %s211, %s212
      %p226 = scmp.eq.s32.totalorder %s26, 1
      %p227 = por %p225, %p226
      %p229 = scmp.ne.s32.totalorder %s212, %s228
      %p230 = scmp.eq.s32.totalorder %s26, 0
      %p231 = por %p229, %p230
      %p232 = scmp.le.s32.totalorder 1, %s20
      %p233 = scmp.lt.s32.totalorder %s20, 3
      %p234 = pnand %p232, %p233
      %p235 = pneg %p234
      // Predicated region
      $region9: #{block_forward.4} parent=5 // pred_check
        _
      $region10: #{block_forward.4} parent=5 // pred_check_branch
        %237 = sbr.rel (%p234) target = $region12
      $region11: #{block_forward.4} parent=5 // pred_region
        %s238 = ssub.s32 %s20, 1
        // Predicated region
        $region13: #{block_forward.4} parent=11 // pred_check
          %p239 = pneg %p67
        $region14: #{block_forward.4} parent=11 // pred_check_branch
          %241 = sbr.rel (%p239) target = $region16
        $region15: #{block_forward.4} parent=11 // pred_region
          _
        $region16: #{block_forward.4} parent=11 // pred_fallthru
          _
        // Predicated region
        $region17: #{block_forward.4} parent=11 // pred_check
          %p242 = pneg %p88
        $region18: #{block_forward.4} parent=11 // pred_check_branch
          %244 = sbr.rel (%p242) target = $region20
        $region19: #{block_forward.4} parent=11 // pred_region
          %s246 = ssub.s32 16, 16
          %247 = vsyncadd [#allocation5], %s246
          %s249 = sshll.u32 [#allocation4], 4
          %s250 = int_to_ptr.vmem [resolvable:$true] %s249
          %252 = dma.hbm_to_vmem [thread:$0]  %s2, 16, %s250, [#allocation5]
        $region20: #{block_forward.4} parent=11 // pred_fallthru
          _
        // Predicated region
        $region21: #{block_forward.4} parent=11 // pred_check
          %p253 = pneg %p109
        $region22: #{block_forward.4} parent=11 // pred_check_branch
          %255 = sbr.rel (%p253) target = $region24
        $region23: #{block_forward.4} parent=11 // pred_region
          %s257 = ssub.s32 1024, 1024
          %258 = vsyncadd [#allocation5], %s257
          %s259 = sshll.u32 [#allocation6], 4
          %s260 = int_to_ptr.vmem [resolvable:$true] %s259
          %265 = dma.hbm_to_vmem [thread:$0]  %s3, 1024, %s260, [#allocation5], 64, 64, 4
        $region24: #{block_forward.4} parent=11 // pred_fallthru
          _
        // Predicated region
        $region25: #{block_forward.4} parent=11 // pred_check
          %p266 = pneg %p130
        $region26: #{block_forward.4} parent=11 // pred_check_branch
          %268 = sbr.rel (%p266) target = $region28
        $region27: #{block_forward.4} parent=11 // pred_region
          _
        $region28: #{block_forward.4} parent=11 // pred_fallthru
          _
        // Predicated region
        $region29: #{block_forward.4} parent=11 // pred_check
          %p269 = pneg %p151
        $region30: #{block_forward.4} parent=11 // pred_check_branch
          %271 = sbr.rel (%p269) target = $region32
        $region31: #{block_forward.4} parent=11 // pred_region
          %s273 = ssub.s32 2048, 2048
          %274 = vsyncadd [#allocation8], %s273
          %s275 = sshll.u32 [#allocation7], 4
          %s276 = int_to_ptr.vmem [resolvable:$true] %s275
          %281 = dma.hbm_to_vmem [thread:$0]  %s5, 2048, %s276, [#allocation8], 128, 128, 8
        $region32: #{block_forward.4} parent=11 // pred_fallthru
          _
        // Predicated region
        $region33: #{block_forward.4} parent=11 // pred_check
          %p282 = pneg %p172
        $region34: #{block_forward.4} parent=11 // pred_check_branch
          %284 = sbr.rel (%p282) target = $region36
        $region35: #{block_forward.4} parent=11 // pred_region
          _
        $region36: #{block_forward.4} parent=11 // pred_fallthru
          _
      $region12: #{block_forward.4} parent=5 // pred_fallthru
        _
      %p285 = scmp.lt.s32.totalorder %s20, 2
      // Predicated region
      $region37: #{block_forward.4} parent=5 // pred_check
        %p286 = pneg %p285
      $region38: #{block_forward.4} parent=5 // pred_check_branch
        %288 = sbr.rel (%p286) target = $region40
      $region39: #{block_forward.4} parent=5 // pred_region
        // Predicated region
        $region41: #{block_forward.4} parent=39 // pred_check
          %p289 = pneg %p40
        $region42: #{block_forward.4} parent=39 // pred_check_branch
          %291 = sbr.rel (%p289) target = $region44
        $region43: #{block_forward.4} parent=39 // pred_region
          %s292 = sand.u32 %s30, 1
          %s293 = scalar_lea.sflag [#allocation3], %s292
          %s294 = sand.u32 %s30, 1
          %s295 = smul.addr %s294, 64
          %s296 = scalar_lea.vmem [#allocation2], %s295
          %s297 = smul.u32 8, %s20
          %s299 = ssub.s32 1024, 1024
          %300 = vsyncadd %s293, %s299
          %s301 = smul.addr %s297, 128
          %s302 = scalar_lea.hbm %s0, %s301
          %s303 = sshll.u32 %s296, 4
          %s304 = int_to_ptr.vmem [resolvable:$true] %s303
          %309 = dma.hbm_to_vmem [thread:$0]  %s302, 1024, %s304, %s293, 128, 128, 8
        $region44: #{block_forward.4} parent=39 // pred_fallthru
          _
      $region40: #{block_forward.4} parent=5 // pred_fallthru
        _
      %p310 = scmp.le.s32.totalorder 1, %s20
      %p311 = scmp.lt.s32.totalorder %s20, 3
      %p312 = pnand %p310, %p311
      %p313 = pneg %p312
      // Predicated region
      $region45: #{block_forward.4} parent=5 // pred_check
        _
      $region46: #{block_forward.4} parent=5 // pred_check_branch
        %315 = sbr.rel (%p312) target = $region48
      $region47: #{block_forward.4} parent=5 // pred_region
        %s316 = ssub.s32 %s20, 1
        %s317 = sand.u32 %s33, 1
        %s318 = scalar_lea.sflag [#allocation3], %s317
        %s319 = sand.u32 %s33, 1
        %s320 = smul.addr %s319, 64
        %s321 = scalar_lea.vmem [#allocation2], %s320
        // Predicated region
        $region49: #{block_forward.4} parent=47 // pred_check
          %p322 = pneg %p46
        $region50: #{block_forward.4} parent=47 // pred_check_branch
          %324 = sbr.rel (%p322) target = $region52
        $region51: #{block_forward.4} parent=47 // pred_region
          %325 = dma.done %s318, 1024
        $region52: #{block_forward.4} parent=47 // pred_fallthru
          _
        // Predicated region
        $region53: #{block_forward.4} parent=47 // pred_check
          %p326 = pneg %p88
        $region54: #{block_forward.4} parent=47 // pred_check_branch
          %328 = sbr.rel (%p326) target = $region56
        $region55: #{block_forward.4} parent=47 // pred_region
          %329 = dma.done [#allocation5], 16
        $region56: #{block_forward.4} parent=47 // pred_fallthru
          _
        // Predicated region
        $region57: #{block_forward.4} parent=47 // pred_check
          %p330 = pneg %p109
        $region58: #{block_forward.4} parent=47 // pred_check_branch
          %332 = sbr.rel (%p330) target = $region60
        $region59: #{block_forward.4} parent=47 // pred_region
          %333 = dma.done [#allocation5], 1024
        $region60: #{block_forward.4} parent=47 // pred_fallthru
          _
        // Predicated region
        $region61: #{block_forward.4} parent=47 // pred_check
          %p334 = pneg %p151
        $region62: #{block_forward.4} parent=47 // pred_check_branch
          %336 = sbr.rel (%p334) target = $region64
        $region63: #{block_forward.4} parent=47 // pred_region
          %337 = dma.done [#allocation8], 2048
        $region64: #{block_forward.4} parent=47 // pred_fallthru
          _
        %s338 = sand.u32 %s33, 1
        %s339 = scalar_lea.sflag [#allocation3], %s338
        %s340 = sand.u32 %s33, 1
        %s341 = smul.addr %s340, 64
        %s342 = scalar_lea.vmem [#allocation2], %s341
        %p343 = pneg %p46
        %p344 = pneg %p43
        %p345 = pneg %p67
        %p346 = pneg %p64
        %p347 = pneg %p88
        %p348 = pneg %p85
        %p349 = pneg %p109
        %p350 = pneg %p106
        %p351 = pneg %p130
        %p352 = pneg %p127
        %p353 = pneg %p151
        %p354 = pneg %p148
        %p355 = pneg %p172
        %p356 = pneg %p169
        %p357 = pneg %p198
        %p358 = pneg %p195
        %s359 = smul.u32 8, %s25
        %p360 = scmp.lt.s32.totalorder %s359, 15
        %s361 = scalar_select %p360, %s359, 15
        %s362 = smul.addr %s361, 4
        %s363 = scalar_lea.vmem %s7, %s362
        %p364 = pneg %p224
        %p365 = pneg %p221
        %s366 = smul.u32 8, %s25
        %p367 = scmp.lt.s32.totalorder %s366, 15
        %s368 = scalar_select %p367, %s366, 15
        %s369 = smul.addr %s368, 2
        %s370 = smul.addr %s369, 4
        %s371 = scalar_lea.vmem %s8, %s370
        %s372 = smul.u32 8, %s25
        %s373 = smul.u32 8, %s25
        %p374 = scmp.lt.s32.totalorder %s373, 15
        %s375 = scalar_select %p374, %s373, 15
        %s376 = smul.addr %s375, 4
        %s377 = scalar_lea.vmem %s7, %s376
        %s378 = smul.u32 8, %s25
        %s379 = smul.u32 8, %s25
        %p380 = scmp.lt.s32.totalorder %s379, 15
        %s381 = scalar_select %p380, %s379, 15
        %s382 = smul.addr %s381, 2
        %s383 = smul.addr %s382, 4
        %s384 = scalar_lea.vmem %s8, %s383
        %s385 = smul.u32 8, %s25
        %v387 = vld [vmem:[%s321] sm:$0xff]
        %v388 = vld [vmem:[%s321 + $0x8] sm:$0xff]
        %v389 = vld [vmem:[%s321 + $0x10] sm:$0xff]
        %v390 = vld [vmem:[%s321 + $0x18] sm:$0xff]
        %v391 = vld [vmem:[%s321 + $0x20] sm:$0xff]
        %v392 = vld [vmem:[%s321 + $0x28] sm:$0xff]
        %v393 = vld [vmem:[%s321 + $0x30] sm:$0xff]
        %v394 = vld [vmem:[%s321 + $0x38] sm:$0xff]
        %v395 = vld [vmem:[%s1] sm:$0x1]
        %v396 = vld [vmem:[#allocation4] sm:$0x1]
        %397 = vadd.xlane.f32.xlu0 %v387
        %v398 = vpop.xlane.xlu0 %397
        %399 = vadd.xlane.f32.xlu0 %v388
        %v400 = vpop.xlane.xlu0 %399
        %401 = vadd.xlane.f32.xlu0 %v389
        %v402 = vpop.xlane.xlu0 %401
        %403 = vadd.xlane.f32.xlu0 %v390
        %v404 = vpop.xlane.xlu0 %403
        %405 = vadd.xlane.f32.xlu0 %v391
        %v406 = vpop.xlane.xlu0 %405
        %407 = vadd.xlane.f32.xlu0 %v392
        %v408 = vpop.xlane.xlu0 %407
        %409 = vadd.xlane.f32.xlu0 %v393
        %v410 = vpop.xlane.xlu0 %409
        %411 = vadd.xlane.f32.xlu0 %v394
        %v412 = vpop.xlane.xlu0 %411
        %v413 = vrcp.pop 128.0
        %v414 = vmul.f32 %v398, %v413
        %v415 = vmul.f32 %v400, %v413
        %v416 = vmul.f32 %v402, %v413
        %v417 = vmul.f32 %v404, %v413
        %v418 = vmul.f32 %v406, %v413
        %v419 = vmul.f32 %v408, %v413
        %v420 = vmul.f32 %v410, %v413
        %v421 = vmul.f32 %v412, %v413
        %v422 = vsub.f32 %v387, %v414
        %v423 = vsub.f32 %v388, %v415
        %v424 = vsub.f32 %v389, %v416
        %v425 = vsub.f32 %v390, %v417
        %v426 = vsub.f32 %v391, %v418
        %v427 = vsub.f32 %v392, %v419
        %v428 = vsub.f32 %v393, %v420
        %v429 = vsub.f32 %v394, %v421
        %v430 = vmul.f32 %v422, %v422
        %v431 = vmul.f32 %v423, %v423
        %v432 = vmul.f32 %v424, %v424
        %v433 = vmul.f32 %v425, %v425
        %v434 = vmul.f32 %v426, %v426
        %v435 = vmul.f32 %v427, %v427
        %v436 = vmul.f32 %v428, %v428
        %v437 = vmul.f32 %v429, %v429
        %438 = vadd.xlane.f32.xlu0 %v430
        %v439 = vpop.xlane.xlu0 %438
        %440 = vadd.xlane.f32.xlu0 %v431
        %v441 = vpop.xlane.xlu0 %440
        %442 = vadd.xlane.f32.xlu0 %v432
        %v443 = vpop.xlane.xlu0 %442
        %444 = vadd.xlane.f32.xlu0 %v433
        %v445 = vpop.xlane.xlu0 %444
        %446 = vadd.xlane.f32.xlu0 %v434
        %v447 = vpop.xlane.xlu0 %446
        %448 = vadd.xlane.f32.xlu0 %v435
        %v449 = vpop.xlane.xlu0 %448
        %450 = vadd.xlane.f32.xlu0 %v436
        %v451 = vpop.xlane.xlu0 %450
        %452 = vadd.xlane.f32.xlu0 %v437
        %v453 = vpop.xlane.xlu0 %452
        %v454 = vmul.f32 %v439, %v413
        %v455 = vmul.f32 %v441, %v413
        %v456 = vmul.f32 %v443, %v413
        %v457 = vmul.f32 %v445, %v413
        %v458 = vmul.f32 %v447, %v413
        %v459 = vmul.f32 %v449, %v413
        %v460 = vmul.f32 %v451, %v413
        %v461 = vmul.f32 %v453, %v413
        %v462 = vadd.f32 %v454, 1e-05
        %v463 = vadd.f32 %v455, 1e-05
        %v464 = vadd.f32 %v456, 1e-05
        %v465 = vadd.f32 %v457, 1e-05
        %v466 = vadd.f32 %v458, 1e-05
        %v467 = vadd.f32 %v459, 1e-05
        %v468 = vadd.f32 %v460, 1e-05
        %v469 = vadd.f32 %v461, 1e-05
        %v470 = vrsqrt.pop %v462
        %v471 = vrsqrt.pop %v463
        %v472 = vrsqrt.pop %v464
        %v473 = vrsqrt.pop %v465
        %v474 = vrsqrt.pop %v466
        %v475 = vrsqrt.pop %v467
        %v476 = vrsqrt.pop %v468
        %v477 = vrsqrt.pop %v469
        %v478 = vmul.f32 %v422, %v470
        %v479 = vmul.f32 %v423, %v471
        %v480 = vmul.f32 %v424, %v472
        %v481 = vmul.f32 %v425, %v473
        %v482 = vmul.f32 %v426, %v474
        %v483 = vmul.f32 %v427, %v475
        %v484 = vmul.f32 %v428, %v476
        %v485 = vmul.f32 %v429, %v477
        %v487 = vlaneseq
        %v488 = vshrl.u32 %v487, 7
        %v489 = vsub.s32 0, %v488
        %v490 = vrot.slane %v395, %v489
        %v492 = vmul.f32 %v478, %v490
        %v493 = vmul.f32 %v479, %v490
        %v494 = vmul.f32 %v480, %v490
        %v495 = vmul.f32 %v481, %v490
        %v496 = vmul.f32 %v482, %v490
        %v497 = vmul.f32 %v483, %v490
        %v498 = vmul.f32 %v484, %v490
        %v499 = vmul.f32 %v485, %v490
        %v501 = vlaneseq
        %v502 = vshrl.u32 %v501, 7
        %v503 = vsub.s32 0, %v502
        %v504 = vrot.slane %v396, %v503
        %v506 = vadd.f32 %v492, %v504
        %v507 = vadd.f32 %v493, %v504
        %v508 = vadd.f32 %v494, %v504
        %v509 = vadd.f32 %v495, %v504
        %v510 = vadd.f32 %v496, %v504
        %v511 = vadd.f32 %v497, %v504
        %v512 = vadd.f32 %v498, %v504
        %v513 = vadd.f32 %v499, %v504
        %v514 = vpack.c.bf16 %v507, %v506
        %v515 = vpack.c.bf16 %v509, %v508
        %v516 = vpack.c.bf16 %v511, %v510
        %v517 = vpack.c.bf16 %v513, %v512
        %v518 = vld [vmem:[#allocation6] sm:$0xf]
        %v519 = vld [vmem:[#allocation6 + $0x4] sm:$0xf]
        %v520 = vld [vmem:[#allocation6 + $0x8] sm:$0xf]
        %v521 = vld [vmem:[#allocation6 + $0xc] sm:$0xf]
        %v522 = vld [vmem:[#allocation6 + $0x10] sm:$0xf]
        %v523 = vld [vmem:[#allocation6 + $0x14] sm:$0xf]
        %v524 = vld [vmem:[#allocation6 + $0x18] sm:$0xf]
        %v525 = vld [vmem:[#allocation6 + $0x1c] sm:$0xf]
        %v526 = vld [vmem:[#allocation6 + $0x20] sm:$0xf]
        %v527 = vld [vmem:[#allocation6 + $0x24] sm:$0xf]
        %v528 = vld [vmem:[#allocation6 + $0x28] sm:$0xf]
        %v529 = vld [vmem:[#allocation6 + $0x2c] sm:$0xf]
        %v530 = vld [vmem:[#allocation6 + $0x30] sm:$0xf]
        %v531 = vld [vmem:[#allocation6 + $0x34] sm:$0xf]
        %v532 = vld [vmem:[#allocation6 + $0x38] sm:$0xf]
        %v533 = vld [vmem:[#allocation6 + $0x3c] sm:$0xf]
        %v534 = vld [vmem:[%s4] sm:$0x1]
        %v536 = vlaneseq
        %v537 = vshrl.u32 %v536, 7
        %v538 = vsub.s32 0, %v537
        %v539 = vrot.slane %v534, %v538
        %v557 = vunpack.c.l.b16 %v518
        %v558 = vunpack.c.l.b16 %v519
        %v559 = vunpack.c.l.b16 %v520
        %v560 = vunpack.c.l.b16 %v521
        %v561 = vunpack.c.l.b16 %v522
        %v562 = vunpack.c.l.b16 %v523
        %v563 = vunpack.c.l.b16 %v524
        %v564 = vunpack.c.l.b16 %v525
        %v565 = vunpack.c.l.b16 %v526
        %v566 = vunpack.c.l.b16 %v527
        %v567 = vunpack.c.l.b16 %v528
        %v568 = vunpack.c.l.b16 %v529
        %v569 = vunpack.c.l.b16 %v530
        %v570 = vunpack.c.l.b16 %v531
        %v571 = vunpack.c.l.b16 %v532
        %v572 = vunpack.c.l.b16 %v533
        %v573 = vpack.c.b16 %v558, %v557
        %v574 = vpack.c.b16 %v560, %v559
        %v575 = vpack.c.b16 %v562, %v561
        %v576 = vpack.c.b16 %v564, %v563
        %v577 = vpack.c.b16 %v566, %v565
        %v578 = vpack.c.b16 %v568, %v567
        %v579 = vpack.c.b16 %v570, %v569
        %v580 = vpack.c.b16 %v572, %v571
        %589 = vmatprep.subr.bf16.mxu0 0
        %590 = vmatpush1.bf16.msra.mxu0 %v573
        %591 = vmatprep.subr.bf16.mxu0 0
        %592 = vmatpush1.bf16.msra.mxu0 %v574
        %593 = vmatprep.subr.bf16.mxu0 0
        %594 = vmatpush1.bf16.msra.mxu0 %v575
        %595 = vmatprep.subr.bf16.mxu0 0
        %596 = vmatpush1.bf16.msra.mxu0 %v576
        %597 = vmatprep.subr.bf16.mxu0 0
        %598 = vmatpush1.bf16.msra.mxu0 %v577
        %599 = vmatprep.subr.bf16.mxu0 0
        %600 = vmatpush1.bf16.msra.mxu0 %v578
        %601 = vmatprep.subr.bf16.mxu0 0
        %602 = vmatpush1.bf16.msra.mxu0 %v579
        %603 = vmatprep.subr.bf16.mxu0 0
        %604 = vmatpush1.bf16.msra.mxu0 %v580
        %605 = vmatprep.subr.bf16.mxu0 0
        %606 = vmatpush1.bf16.msra.mxu0 0
        %607 = vmatprep.subr.bf16.mxu0 0
        %608 = vmatpush1.bf16.msra.mxu0 0
        %609 = vmatprep.subr.bf16.mxu0 0
        %610 = vmatpush1.bf16.msra.mxu0 0
        %611 = vmatprep.subr.bf16.mxu0 0
        %612 = vmatpush1.bf16.msra.mxu0 0
        %613 = vmatprep.subr.bf16.mxu0 0
        %614 = vmatpush1.bf16.msra.mxu0 0
        %615 = vmatprep.subr.bf16.mxu0 0
        %616 = vmatpush1.bf16.msra.mxu0 0
        %617 = vmatprep.subr.bf16.mxu0 0
        %618 = vmatpush1.bf16.msra.mxu0 0
        %619 = vmatprep.subr.bf16.mxu0 0
        %620 = vmatpush1.bf16.msra.mxu0 0
        %621 = vmatprep.mubr.bf16.mxu0 0
        %622 = vmatmul.mubr.bf16.gmra.mrb[0].mxu0 %v514
        %v623 = vpop.f32.mrb[0].mxu0
        %v624 = vadd.f32 %v539, %v623
        %v625 = vpop.f32.mrb[0].mxu0
        %v626 = vpop.f32.mrb[0].mxu0
        %v627 = vadd.f32 %v539, %v626
        %v628 = vpop.f32.mrb[0].mxu0
        %629 = vmatprep.mubr.bf16.mxu0 0
        %630 = vmatmul.mubr.bf16.gmra.mrb[0].mxu0 %v515
        %v631 = vpop.f32.mrb[0].mxu0
        %v632 = vadd.f32 %v539, %v631
        %v633 = vpop.f32.mrb[0].mxu0
        %v634 = vpop.f32.mrb[0].mxu0
        %v635 = vadd.f32 %v539, %v634
        %v636 = vpop.f32.mrb[0].mxu0
        %637 = vmatprep.mubr.bf16.mxu0 0
        %638 = vmatmul.mubr.bf16.gmra.mrb[0].mxu0 %v516
        %v639 = vpop.f32.mrb[0].mxu0
        %v640 = vadd.f32 %v539, %v639
        %v641 = vpop.f32.mrb[0].mxu0
        %v642 = vpop.f32.mrb[0].mxu0
        %v643 = vadd.f32 %v539, %v642
        %v644 = vpop.f32.mrb[0].mxu0
        %645 = vmatprep.mubr.bf16.mxu0 0
        %646 = vmatmul.mubr.bf16.gmra.mrb[0].mxu0 %v517
        %v647 = vpop.f32.mrb[0].mxu0
        %v648 = vadd.f32 %v539, %v647
        %v649 = vpop.f32.mrb[0].mxu0
        %v650 = vpop.f32.mrb[0].mxu0
        %v651 = vadd.f32 %v539, %v650
        %v652 = vpop.f32.mrb[0].mxu0
        %653 = vdwg.mxu0
        %v654 = vpack.c.bf16 %v627, %v624
        %v655 = vpack.c.bf16 %v635, %v632
        %v656 = vpack.c.bf16 %v643, %v640
        %v657 = vpack.c.bf16 %v651, %v648
        %v662 = vunpack.c.l.b16 %v654
        %v663 = vunpack.c.h.b16 %v654
        %v664 = vunpack.c.l.b16 %v655
        %v665 = vunpack.c.h.b16 %v655
        %v666 = vunpack.c.l.b16 %v656
        %v667 = vunpack.c.h.b16 %v656
        %v668 = vunpack.c.l.b16 %v657
        %v669 = vunpack.c.h.b16 %v657
        %v670 = vpack.c.b16 %v662, %v662
        %v671 = vpack.c.b16 %v663, %v663
        %v672 = vpack.c.b16 %v664, %v664
        %v673 = vpack.c.b16 %v665, %v665
        %v674 = vpack.c.b16 %v666, %v666
        %v675 = vpack.c.b16 %v667, %v667
        %v676 = vpack.c.b16 %v668, %v668
        %v677 = vpack.c.b16 %v669, %v669
        %686 = vst [vmem:[%s377] sm:$0xf] %v670
        %687 = vst [vmem:[%s377 + $0x4] sm:$0xf] %v671
        %688 = vst [vmem:[%s377 + $0x8] sm:$0xf] %v672
        %689 = vst [vmem:[%s377 + $0xc] sm:$0xf] %v673
        %690 = vst [vmem:[%s377 + $0x10] sm:$0xf] %v674
        %691 = vst [vmem:[%s377 + $0x14] sm:$0xf] %v675
        %692 = vst [vmem:[%s377 + $0x18] sm:$0xf] %v676
        %693 = vst [vmem:[%s377 + $0x1c] sm:$0xf] %v677
        %v694 = vld [vmem:[#allocation7] sm:$0xff]
        %v695 = vld [vmem:[#allocation7 + $0x8] sm:$0xff]
        %v696 = vld [vmem:[#allocation7 + $0x10] sm:$0xff]
        %v697 = vld [vmem:[#allocation7 + $0x18] sm:$0xff]
        %v698 = vld [vmem:[#allocation7 + $0x20] sm:$0xff]
        %v699 = vld [vmem:[#allocation7 + $0x28] sm:$0xff]
        %v700 = vld [vmem:[#allocation7 + $0x30] sm:$0xff]
        %v701 = vld [vmem:[#allocation7 + $0x38] sm:$0xff]
        %v702 = vld [vmem:[#allocation7 + $0x40] sm:$0xff]
        %v703 = vld [vmem:[#allocation7 + $0x48] sm:$0xff]
        %v704 = vld [vmem:[#allocation7 + $0x50] sm:$0xff]
        %v705 = vld [vmem:[#allocation7 + $0x58] sm:$0xff]
        %v706 = vld [vmem:[#allocation7 + $0x60] sm:$0xff]
        %v707 = vld [vmem:[#allocation7 + $0x68] sm:$0xff]
        %v708 = vld [vmem:[#allocation7 + $0x70] sm:$0xff]
        %v709 = vld [vmem:[#allocation7 + $0x78] sm:$0xff]
        %v710 = vld [vmem:[%s6] sm:$0x3]
        %v712 = vlaneseq
        %v713 = vshrl.u32 %v712, 7
        %v714 = vsub.s32 0, %v713
        %v715 = vrot.slane %v710, %v714
        %v716 = vlaneseq
        %v717 = vshrl.u32 %v716, 7
        %v718 = vsub.s32 1, %v717
        %v719 = vrot.slane %v710, %v718
        %v738 = vunpack.c.l.b16 %v694
        %v739 = vunpack.c.h.b16 %v694
        %v740 = vunpack.c.l.b16 %v695
        %v741 = vunpack.c.h.b16 %v695
        %v742 = vunpack.c.l.b16 %v696
        %v743 = vunpack.c.h.b16 %v696
        %v744 = vunpack.c.l.b16 %v697
        %v745 = vunpack.c.h.b16 %v697
        %v746 = vunpack.c.l.b16 %v698
        %v747 = vunpack.c.h.b16 %v698
        %v748 = vunpack.c.l.b16 %v699
        %v749 = vunpack.c.h.b16 %v699
        %v750 = vunpack.c.l.b16 %v700
        %v751 = vunpack.c.h.b16 %v700
        %v752 = vunpack.c.l.b16 %v701
        %v753 = vunpack.c.h.b16 %v701
        %v754 = vunpack.c.l.b16 %v702
        %v755 = vunpack.c.h.b16 %v702
        %v756 = vunpack.c.l.b16 %v703
        %v757 = vunpack.c.h.b16 %v703
        %v758 = vunpack.c.l.b16 %v704
        %v759 = vunpack.c.h.b16 %v704
        %v760 = vunpack.c.l.b16 %v705
        %v761 = vunpack.c.h.b16 %v705
        %v762 = vunpack.c.l.b16 %v706
        %v763 = vunpack.c.h.b16 %v706
        %v764 = vunpack.c.l.b16 %v707
        %v765 = vunpack.c.h.b16 %v707
        %v766 = vunpack.c.l.b16 %v708
        %v767 = vunpack.c.h.b16 %v708
        %v768 = vunpack.c.l.b16 %v709
        %v769 = vunpack.c.h.b16 %v709
        %v770 = vpack.c.b16 %v740, %v738
        %v771 = vpack.c.b16 %v741, %v739
        %v772 = vpack.c.b16 %v744, %v742
        %v773 = vpack.c.b16 %v745, %v743
        %v774 = vpack.c.b16 %v748, %v746
        %v775 = vpack.c.b16 %v749, %v747
        %v776 = vpack.c.b16 %v752, %v750
        %v777 = vpack.c.b16 %v753, %v751
        %v778 = vpack.c.b16 %v756, %v754
        %v779 = vpack.c.b16 %v757, %v755
        %v780 = vpack.c.b16 %v760, %v758
        %v781 = vpack.c.b16 %v761, %v759
        %v782 = vpack.c.b16 %v764, %v762
        %v783 = vpack.c.b16 %v765, %v763
        %v784 = vpack.c.b16 %v768, %v766
        %v785 = vpack.c.b16 %v769, %v767
        %802 = vmatprep.subr.bf16.mxu0 %v771
        %803 = vmatpush1.bf16.msra.mxu0 %v770
        %804 = vmatprep.subr.bf16.mxu0 %v773
        %805 = vmatpush1.bf16.msra.mxu0 %v772
        %806 = vmatprep.subr.bf16.mxu0 %v775
        %807 = vmatpush1.bf16.msra.mxu0 %v774
        %808 = vmatprep.subr.bf16.mxu0 %v777
        %809 = vmatpush1.bf16.msra.mxu0 %v776
        %810 = vmatprep.subr.bf16.mxu0 %v779
        %811 = vmatpush1.bf16.msra.mxu0 %v778
        %812 = vmatprep.subr.bf16.mxu0 %v781
        %813 = vmatpush1.bf16.msra.mxu0 %v780
        %814 = vmatprep.subr.bf16.mxu0 %v783
        %815 = vmatpush1.bf16.msra.mxu0 %v782
        %816 = vmatprep.subr.bf16.mxu0 %v785
        %817 = vmatpush1.bf16.msra.mxu0 %v784
        %818 = vmatprep.subr.bf16.mxu0 0
        %819 = vmatpush1.bf16.msra.mxu0 0
        %820 = vmatprep.subr.bf16.mxu0 0
        %821 = vmatpush1.bf16.msra.mxu0 0
        %822 = vmatprep.subr.bf16.mxu0 0
        %823 = vmatpush1.bf16.msra.mxu0 0
        %824 = vmatprep.subr.bf16.mxu0 0
        %825 = vmatpush1.bf16.msra.mxu0 0
        %826 = vmatprep.subr.bf16.mxu0 0
        %827 = vmatpush1.bf16.msra.mxu0 0
        %828 = vmatprep.subr.bf16.mxu0 0
        %829 = vmatpush1.bf16.msra.mxu0 0
        %830 = vmatprep.subr.bf16.mxu0 0
        %831 = vmatpush1.bf16.msra.mxu0 0
        %832 = vmatprep.subr.bf16.mxu0 0
        %833 = vmatpush1.bf16.msra.mxu0 0
        %834 = vmatprep.mubr.bf16.mxu0 0
        %835 = vmatmul.mubr.bf16.gmra.mrb[0].mxu0 %v514
        %v836 = vpop.f32.mrb[0].mxu0
        %v837 = vadd.f32 %v715, %v836
        %v838 = vpop.f32.mrb[0].mxu0
        %v839 = vadd.f32 %v719, %v838
        %v840 = vpop.f32.mrb[0].mxu0
        %v841 = vadd.f32 %v715, %v840
        %v842 = vpop.f32.mrb[0].mxu0
        %v843 = vadd.f32 %v719, %v842
        %844 = vmatprep.mubr.bf16.mxu0 0
        %845 = vmatmul.mubr.bf16.gmra.mrb[0].mxu0 %v515
        %v846 = vpop.f32.mrb[0].mxu0
        %v847 = vadd.f32 %v715, %v846
        %v848 = vpop.f32.mrb[0].mxu0
        %v849 = vadd.f32 %v719, %v848
        %v850 = vpop.f32.mrb[0].mxu0
        %v851 = vadd.f32 %v715, %v850
        %v852 = vpop.f32.mrb[0].mxu0
        %v853 = vadd.f32 %v719, %v852
        %854 = vmatprep.mubr.bf16.mxu0 0
        %855 = vmatmul.mubr.bf16.gmra.mrb[0].mxu0 %v516
        %v856 = vpop.f32.mrb[0].mxu0
        %v857 = vadd.f32 %v715, %v856
        %v858 = vpop.f32.mrb[0].mxu0
        %v859 = vadd.f32 %v719, %v858
        %v860 = vpop.f32.mrb[0].mxu0
        %v861 = vadd.f32 %v715, %v860
        %v862 = vpop.f32.mrb[0].mxu0
        %v863 = vadd.f32 %v719, %v862
        %864 = vmatprep.mubr.bf16.mxu0 0
        %865 = vmatmul.mubr.bf16.gmra.mrb[0].mxu0 %v517
        %v866 = vpop.f32.mrb[0].mxu0
        %v867 = vadd.f32 %v715, %v866
        %v868 = vpop.f32.mrb[0].mxu0
        %v869 = vadd.f32 %v719, %v868
        %v870 = vpop.f32.mrb[0].mxu0
        %v871 = vadd.f32 %v715, %v870
        %v872 = vpop.f32.mrb[0].mxu0
        %v873 = vadd.f32 %v719, %v872
        %874 = vdwg.mxu0
        %v875 = vpack.c.bf16 %v841, %v837
        %v876 = vpack.c.bf16 %v843, %v839
        %v877 = vpack.c.bf16 %v851, %v847
        %v878 = vpack.c.bf16 %v853, %v849
        %v879 = vpack.c.bf16 %v861, %v857
        %v880 = vpack.c.bf16 %v863, %v859
        %v881 = vpack.c.bf16 %v871, %v867
        %v882 = vpack.c.bf16 %v873, %v869
        %v891 = vunpack.c.l.b16 %v875
        %v892 = vunpack.c.l.b16 %v876
        %v893 = vunpack.c.h.b16 %v875
        %v894 = vunpack.c.h.b16 %v876
        %v895 = vunpack.c.l.b16 %v877
        %v896 = vunpack.c.l.b16 %v878
        %v897 = vunpack.c.h.b16 %v877
        %v898 = vunpack.c.h.b16 %v878
        %v899 = vunpack.c.l.b16 %v879
        %v900 = vunpack.c.l.b16 %v880
        %v901 = vunpack.c.h.b16 %v879
        %v902 = vunpack.c.h.b16 %v880
        %v903 = vunpack.c.l.b16 %v881
        %v904 = vunpack.c.l.b16 %v882
        %v905 = vunpack.c.h.b16 %v881
        %v906 = vunpack.c.h.b16 %v882
        %v907 = vpack.c.b16 %v892, %v891
        %v908 = vpack.c.b16 %v894, %v893
        %v909 = vpack.c.b16 %v896, %v895
        %v910 = vpack.c.b16 %v898, %v897
        %v911 = vpack.c.b16 %v900, %v899
        %v912 = vpack.c.b16 %v902, %v901
        %v913 = vpack.c.b16 %v904, %v903
        %v914 = vpack.c.b16 %v906, %v905
        %923 = vst [vmem:[%s384] sm:$0xff] %v907
        %924 = vst [vmem:[%s384 + $0x8] sm:$0xff] %v908
        %925 = vst [vmem:[%s384 + $0x10] sm:$0xff] %v909
        %926 = vst [vmem:[%s384 + $0x18] sm:$0xff] %v910
        %927 = vst [vmem:[%s384 + $0x20] sm:$0xff] %v911
        %928 = vst [vmem:[%s384 + $0x28] sm:$0xff] %v912
        %929 = vst [vmem:[%s384 + $0x30] sm:$0xff] %v913
        %930 = vst [vmem:[%s384 + $0x38] sm:$0xff] %v914
        %s931 = smul.u32 8, %s25
        %p932 = scmp.lt.s32.totalorder %s931, 15
        %s933 = scalar_select %p932, %s931, 15
        %s934 = smul.addr %s933, 4
        %s935 = scalar_lea.vmem %s7, %s934
        %s936 = smul.u32 8, %s25
        %p937 = scmp.lt.s32.totalorder %s936, 15
        %s938 = scalar_select %p937, %s936, 15
        %s939 = smul.addr %s938, 2
        %s940 = smul.addr %s939, 4
        %s941 = scalar_lea.vmem %s8, %s940
        // Predicated region
        $region65: #{block_forward.4} parent=47 // pred_check
          %p942 = pneg %p195
        $region66: #{block_forward.4} parent=47 // pred_check_branch
          %944 = sbr.rel (%p942) target = $region68
        $region67: #{block_forward.4} parent=47 // pred_region
          %s945 = smul.u32 8, %s25
        $region68: #{block_forward.4} parent=47 // pred_fallthru
          _
        // Predicated region
        $region69: #{block_forward.4} parent=47 // pred_check
          %p946 = pneg %p221
        $region70: #{block_forward.4} parent=47 // pred_check_branch
          %948 = sbr.rel (%p946) target = $region72
        $region71: #{block_forward.4} parent=47 // pred_region
          %s949 = smul.u32 8, %s25
        $region72: #{block_forward.4} parent=47 // pred_fallthru
          _
      $region48: #{block_forward.4} parent=5 // pred_fallthru
        _
      %p950 = scmp.le.s32.totalorder 2, %s20
      // Predicated region
      $region73: #{block_forward.4} parent=5 // pred_check
        %p951 = pneg %p950
      $region74: #{block_forward.4} parent=5 // pred_check_branch
        %953 = sbr.rel (%p951) target = $region76
      $region75: #{block_forward.4} parent=5 // pred_region
        %s954 = ssub.s32 %s20, 2
        // Predicated region
        $region77: #{block_forward.4} parent=75 // pred_check
          %p955 = pneg %p201
        $region78: #{block_forward.4} parent=75 // pred_check_branch
          %957 = sbr.rel (%p955) target = $region80
        $region79: #{block_forward.4} parent=75 // pred_region
          %s958 = smul.u32 8, %s26
          %p959 = scmp.lt.s32.totalorder %s958, 15
          %s960 = scalar_select %p959, %s958, 15
          %s961 = smul.addr %s960, 4
          %s962 = scalar_lea.vmem %s7, %s961
        $region80: #{block_forward.4} parent=75 // pred_fallthru
          _
        // Predicated region
        $region81: #{block_forward.4} parent=75 // pred_check
          %p963 = pneg %p227
        $region82: #{block_forward.4} parent=75 // pred_check_branch
          %965 = sbr.rel (%p963) target = $region84
        $region83: #{block_forward.4} parent=75 // pred_region
          %s966 = smul.u32 8, %s26
          %p967 = scmp.lt.s32.totalorder %s966, 15
          %s968 = scalar_select %p967, %s966, 15
          %s969 = smul.addr %s968, 2
          %s970 = smul.addr %s969, 4
          %s971 = scalar_lea.vmem %s8, %s970
        $region84: #{block_forward.4} parent=75 // pred_fallthru
          _
      $region76: #{block_forward.4} parent=5 // pred_fallthru
        _
    $region6: #{block_forward.4} parent=1 // loop_footer
      %s24 = sadd.s32 1, %s20
    $region7: #{block_forward.4} parent=1 // loop_footer_branch
      %19 = sbr.rel target = $region3
    $region8: #{block_forward.4} parent=1 // loop_exit
      _
    %972 = vsyncpa [#allocation3], 1
    %s973 = scalar_lea.sflag [#allocation3], 1
    %974 = vsyncpa %s973, 1
    %975 = vsyncpa [#allocation5], 1
    %976 = vsyncpa [#allocation8], 1

// kernel: block_forward.7
$region0: #{block_forward.7}
  #allocation0 [shape = 'u32[]', space=smem, size = 0x4, offset = 0x4, fixed_abs, tag = 'smem constant byte address 0x4 - core index']
  #allocation1 [shape = 'u32[144,128]{1,0:T(1,128)}', space=vmem, size = 0x12000, scoped, tag = 'internal scratch']
  #allocation2 [shape = 'f32[10,17,256]{2,1,0:T(8,128)}', space=vmem, size = 0x3c000, scoped, tag = 'scratch operand']
  #allocation3 [shape = 'bf16[64,256]{1,0:T(16,128)(2,1)}', space=vmem, size = 0x8000, scoped, tag = 'scratch operand']
  #allocation4 [shape = 'f32[64,128]{1,0:T(8,128)}', space=vmem, size = 0x8000, scoped, tag = 'scratch operand']
  %s0 = inlined_call_operand.vmem [shape: bf16[2,8,8,512], index: 0, kind: input, shape index: {}]
  %s1 = inlined_call_operand.vmem [shape: f32[9,512], index: 1, kind: input, shape index: {}]
  %s2 = inlined_call_operand.vmem [shape: f32[1,512], index: 2, kind: input, shape index: {}]
  %s3 = inlined_call_operand.vmem [shape: bf16[512,128], index: 3, kind: input, shape index: {}]
  %s4 = inlined_call_operand.vmem [shape: f32[1,128], index: 4, kind: input, shape index: {}]
  %s5 = inlined_call_operand.vmem [shape: f32[2,64,128], index: 5, kind: input, shape index: {}]
  %s6 = inlined_call_operand.hbm [shape: f32[2,64,128], index: 6, kind: output, shape index: {}]
  %s7 = sld [smem:[#allocation0]]
  $region122: #{block_forward.7} parent=0
    _
  %s9 = ssub.s32 1, %s7
  %s10 = scalar_select 0, %s9, %s7
  $region1: #{block_forward.7} parent=0
    #allocation5 [shape = 'u8[65536]{0}', space=vmem, size = 0x10000, scoped, tag = 'input window, operand 0']
    #allocation6 [shape = 'u8[32768]{0}', space=vmem, size = 0x8000, scoped, tag = 'input window, operand 1']
    #allocation7 [shape = 'u8[65536]{0}', space=vmem, size = 0x10000, scoped, tag = 'output window, operand 0']
    #allocation8 [shape = 's32[2]{0}', space=sflag, size = 0x8, scoped, tag = 'scoped memory for block_forward.7']
    %11 = vsyncpa [#allocation8], 0
    %s12 = scalar_lea.sflag [#allocation8], 1
    %13 = vsyncpa %s12, 0
    loop: start=0, step=1, limit=6
    $region2: #{block_forward.7} parent=1 // loop_pre_header
      _
    $region3: #{block_forward.7} parent=1 // loop_header
      %s15 = sphi 0, %s19
      %p16 = scmp.ge.s32.totalorder %s15, 6
      %s22 = sphi 0, %s34
      %s23 = sphi 0, %s30
      %s24 = sphi 0, %s22
      %s25 = sphi 0, %s23
      %s26 = sphi 0, %s24
      %s27 = sphi 0, %s25
      %s39 = sphi 0, %s41
      %s42 = sphi 0, %s39
      %s43 = sphi 0, %s42
      %s59 = sphi 0, %s43
      %s65 = sphi 0, %s67
      %s68 = sphi 0, %s65
      %s69 = sphi 0, %s68
      %s85 = sphi 0, %s69
      %s91 = sphi 0, %s93
      %s94 = sphi 0, %s91
      %s95 = sphi 0, %s94
      %s111 = sphi 0, %s95
      %s117 = sphi 0, %s119
      %s120 = sphi 0, %s117
      %s121 = sphi 0, %s120
      %s137 = sphi 0, %s121
      %s141 = sphi 0, %s141
      %s143 = sphi 0, %s141
      %s144 = sphi 0, %s143
      %s158 = sphi 0, %s144
      %s164 = sphi 0, %s166
      %s167 = sphi 0, %s164
      %s168 = sphi 0, %s167
      %s184 = sphi 0, %s168
      %s190 = sphi 0, %s192
      %s193 = sphi 0, %s190
      %s194 = sphi 0, %s193
      %s210 = sphi 0, %s194
    $region4: #{block_forward.7} parent=1 // loop_header_branch
      %18 = sbr.rel (%p16) target = $region8
    $region5: #{block_forward.7} parent=1 // loop_body
      %s20 = ssub.s32 %s15, 1
      %s21 = ssub.s32 %s15, 2
      %s28 = sadd.s32 1, %s23
      %p29 = scmp.ge.s32.totalorder %s28, 2
      %s30 = scalar_select %p29, 0, %s28
      %s31 = sadd.s32 1, %s22
      %s32 = scalar_select %p29, %s31, %s22
      %p33 = scmp.ge.s32.totalorder %s32, 2
      %s34 = scalar_select %p33, 0, %s32
      %s35 = ssub.s32 %s22, %s34
      %s36 = ssub.s32 %s23, %s30
      %s37 = sor.u32 %s35, %s36
      %p38 = scmp.eq.s32.totalorder %s37, 0
      %s40 = sadd.s32 %s39, 1
      %s41 = scalar_select %p38, %s39, %s40
      %p44 = pneg %p38
      %p45 = scmp.eq.s32.totalorder %s15, 3
      %p46 = por %p44, %p45
      %p47 = scmp.ne.s32.totalorder %s39, %s42
      %p48 = scmp.eq.s32.totalorder %s15, 0
      %p49 = por %p47, %p48
      %p50 = scmp.ne.s32.totalorder %s39, %s42
      %p51 = scmp.eq.s32.totalorder %s20, 3
      %p52 = por %p50, %p51
      %p53 = scmp.ne.s32.totalorder %s42, %s43
      %p54 = scmp.eq.s32.totalorder %s20, 0
      %p55 = por %p53, %p54
      %p56 = scmp.ne.s32.totalorder %s42, %s43
      %p57 = scmp.eq.s32.totalorder %s21, 3
      %p58 = por %p56, %p57
      %p60 = scmp.ne.s32.totalorder %s43, %s59
      %p61 = scmp.eq.s32.totalorder %s21, 0
      %p62 = por %p60, %p61
      %s63 = ssub.s32 %s23, %s30
      %p64 = scmp.eq.s32.totalorder %s63, 0
      %s66 = sadd.s32 %s65, 1
      %s67 = scalar_select %p64, %s65, %s66
      %p70 = pneg %p64
      %p71 = scmp.eq.s32.totalorder %s15, 3
      %p72 = por %p70, %p71
      %p73 = scmp.ne.s32.totalorder %s65, %s68
      %p74 = scmp.eq.s32.totalorder %s15, 0
      %p75 = por %p73, %p74
      %p76 = scmp.ne.s32.totalorder %s65, %s68
      %p77 = scmp.eq.s32.totalorder %s20, 3
      %p78 = por %p76, %p77
      %p79 = scmp.ne.s32.totalorder %s68, %s69
      %p80 = scmp.eq.s32.totalorder %s20, 0
      %p81 = por %p79, %p80
      %p82 = scmp.ne.s32.totalorder %s68, %s69
      %p83 = scmp.eq.s32.totalorder %s21, 3
      %p84 = por %p82, %p83
      %p86 = scmp.ne.s32.totalorder %s69, %s85
      %p87 = scmp.eq.s32.totalorder %s21, 0
      %p88 = por %p86, %p87
      %s89 = ssub.s32 %s23, %s30
      %p90 = scmp.eq.s32.totalorder %s89, 0
      %s92 = sadd.s32 %s91, 1
      %s93 = scalar_select %p90, %s91, %s92
      %p96 = pneg %p90
      %p97 = scmp.eq.s32.totalorder %s15, 3
      %p98 = por %p96, %p97
      %p99 = scmp.ne.s32.totalorder %s91, %s94
      %p100 = scmp.eq.s32.totalorder %s15, 0
      %p101 = por %p99, %p100
      %p102 = scmp.ne.s32.totalorder %s91, %s94
      %p103 = scmp.eq.s32.totalorder %s20, 3
      %p104 = por %p102, %p103
      %p105 = scmp.ne.s32.totalorder %s94, %s95
      %p106 = scmp.eq.s32.totalorder %s20, 0
      %p107 = por %p105, %p106
      %p108 = scmp.ne.s32.totalorder %s94, %s95
      %p109 = scmp.eq.s32.totalorder %s21, 3
      %p110 = por %p108, %p109
      %p112 = scmp.ne.s32.totalorder %s95, %s111
      %p113 = scmp.eq.s32.totalorder %s21, 0
      %p114 = por %p112, %p113
      %s115 = ssub.s32 %s23, %s30
      %p116 = scmp.eq.s32.totalorder %s115, 0
      %s118 = sadd.s32 %s117, 1
      %s119 = scalar_select %p116, %s117, %s118
      %p122 = pneg %p116
      %p123 = scmp.eq.s32.totalorder %s15, 3
      %p124 = por %p122, %p123
      %p125 = scmp.ne.s32.totalorder %s117, %s120
      %p126 = scmp.eq.s32.totalorder %s15, 0
      %p127 = por %p125, %p126
      %p128 = scmp.ne.s32.totalorder %s117, %s120
      %p129 = scmp.eq.s32.totalorder %s20, 3
      %p130 = por %p128, %p129
      %p131 = scmp.ne.s32.totalorder %s120, %s121
      %p132 = scmp.eq.s32.totalorder %s20, 0
      %p133 = por %p131, %p132
      %p134 = scmp.ne.s32.totalorder %s120, %s121
      %p135 = scmp.eq.s32.totalorder %s21, 3
      %p136 = por %p134, %p135
      %p138 = scmp.ne.s32.totalorder %s121, %s137
      %p139 = scmp.eq.s32.totalorder %s21, 0
      %p140 = por %p138, %p139
      %s142 = sadd.s32 %s141, 1
      %p145 = scmp.eq.s32.totalorder %s15, 3
      %p146 = scmp.ne.s32.totalorder %s141, %s143
      %p147 = scmp.eq.s32.totalorder %s15, 0
      %p148 = por %p146, %p147
      %p149 = scmp.ne.s32.totalorder %s141, %s143
      %p150 = scmp.eq.s32.totalorder %s20, 3
      %p151 = por %p149, %p150
      %p152 = scmp.ne.s32.totalorder %s143, %s144
      %p153 = scmp.eq.s32.totalorder %s20, 0
      %p154 = por %p152, %p153
      %p155 = scmp.ne.s32.totalorder %s143, %s144
      %p156 = scmp.eq.s32.totalorder %s21, 3
      %p157 = por %p155, %p156
      %p159 = scmp.ne.s32.totalorder %s144, %s158
      %p160 = scmp.eq.s32.totalorder %s21, 0
      %p161 = por %p159, %p160
      %s162 = ssub.s32 %s22, %s34
      %p163 = scmp.eq.s32.totalorder %s162, 0
      %s165 = sadd.s32 %s164, 1
      %s166 = scalar_select %p163, %s164, %s165
      %p169 = pneg %p163
      %p170 = scmp.eq.s32.totalorder %s15, 3
      %p171 = por %p169, %p170
      %p172 = scmp.ne.s32.totalorder %s164, %s167
      %p173 = scmp.eq.s32.totalorder %s15, 0
      %p174 = por %p172, %p173
      %p175 = scmp.ne.s32.totalorder %s164, %s167
      %p176 = scmp.eq.s32.totalorder %s20, 3
      %p177 = por %p175, %p176
      %p178 = scmp.ne.s32.totalorder %s167, %s168
      %p179 = scmp.eq.s32.totalorder %s20, 0
      %p180 = por %p178, %p179
      %p181 = scmp.ne.s32.totalorder %s167, %s168
      %p182 = scmp.eq.s32.totalorder %s21, 3
      %p183 = por %p181, %p182
      %p185 = scmp.ne.s32.totalorder %s168, %s184
      %p186 = scmp.eq.s32.totalorder %s21, 0
      %p187 = por %p185, %p186
      %s188 = ssub.s32 %s22, %s34
      %p189 = scmp.eq.s32.totalorder %s188, 0
      %s191 = sadd.s32 %s190, 1
      %s192 = scalar_select %p189, %s190, %s191
      %p195 = pneg %p189
      %p196 = scmp.eq.s32.totalorder %s15, 3
      %p197 = por %p195, %p196
      %p198 = scmp.ne.s32.totalorder %s190, %s193
      %p199 = scmp.eq.s32.totalorder %s15, 0
      %p200 = por %p198, %p199
      %p201 = scmp.ne.s32.totalorder %s190, %s193
      %p202 = scmp.eq.s32.totalorder %s20, 3
      %p203 = por %p201, %p202
      %p204 = scmp.ne.s32.totalorder %s193, %s194
      %p205 = scmp.eq.s32.totalorder %s20, 0
      %p206 = por %p204, %p205
      %p207 = scmp.ne.s32.totalorder %s193, %s194
      %p208 = scmp.eq.s32.totalorder %s21, 3
      %p209 = por %p207, %p208
      %p211 = scmp.ne.s32.totalorder %s194, %s210
      %p212 = scmp.eq.s32.totalorder %s21, 0
      %p213 = por %p211, %p212
      %p214 = scmp.le.s32.totalorder 1, %s15
      %p215 = scmp.lt.s32.totalorder %s15, 5
      %p216 = pnand %p214, %p215
      %p217 = pneg %p216
      // Predicated region
      $region9: #{block_forward.7} parent=5 // pred_check
        _
      $region10: #{block_forward.7} parent=5 // pred_check_branch
        %219 = sbr.rel (%p216) target = $region12
      $region11: #{block_forward.7} parent=5 // pred_region
        %s220 = ssub.s32 %s15, 1
        // Predicated region
        $region13: #{block_forward.7} parent=11 // pred_check
          %p221 = pneg %p154
        $region14: #{block_forward.7} parent=11 // pred_check_branch
          %223 = sbr.rel (%p221) target = $region16
        $region15: #{block_forward.7} parent=11 // pred_region
          _
        $region16: #{block_forward.7} parent=11 // pred_fallthru
          _
      $region12: #{block_forward.7} parent=5 // pred_fallthru
        _
      %p224 = scmp.lt.s32.totalorder %s15, 4
      // Predicated region
      $region17: #{block_forward.7} parent=5 // pred_check
        %p225 = pneg %p224
      $region18: #{block_forward.7} parent=5 // pred_check_branch
        %227 = sbr.rel (%p225) target = $region20
      $region19: #{block_forward.7} parent=5 // pred_region
        // Predicated region
        $region21: #{block_forward.7} parent=19 // pred_check
          %p228 = pneg %p49
        $region22: #{block_forward.7} parent=19 // pred_check_branch
          %230 = sbr.rel (%p228) target = $region24
        $region23: #{block_forward.7} parent=19 // pred_region
          %s231 = sand.u32 %s39, 1
          %s232 = sand.u32 %s39, 1
          %s233 = smul.addr %s232, 64
          %s234 = scalar_lea.vmem [#allocation5], %s233
          %s235 = smul.u32 2, %s23
          %s236 = smul.addr %s22, 32
          %s237 = sadd.s32 %s235, %s236
          %s238 = smul.addr %s237, 4
          %s239 = scalar_lea.vmem %s0, %s238
          // Predicated region
          $region25: #{block_forward.7} parent=23 // pred_check
            _
          $region26: #{block_forward.7} parent=23 // pred_check_branch
            %241 = sbr.rel (0) target = $region28
          $region27: #{block_forward.7} parent=23 // pred_region
            // Predicated region
            $region29: #{block_forward.7} parent=27 // pred_check
              _
            $region30: #{block_forward.7} parent=27 // pred_check_branch
              %243 = sbr.rel (0) target = $region32
            $region31: #{block_forward.7} parent=27 // pred_region
              // Predicated region
              $region44: #{block_forward.7} parent=31 // pred_check
                _
              $region45: #{block_forward.7} parent=31 // pred_check_branch
                %272 = sbr.rel (0) target = $region47
              $region46: #{block_forward.7} parent=31 // pred_region
                loop: start=0, step=1, limit=1
                $region48: #{block_forward.7} parent=46 // loop_pre_header
                  _
                $region49: #{block_forward.7} parent=46 // loop_header
                  %s274 = sphi 0, %s278
                  %p275 = scmp.ge.s32.totalorder %s274, 1
                  %s279 = sphi %s239, %s239
                  %s280 = sphi %s234, %s234
                $region50: #{block_forward.7} parent=46 // loop_header_branch
                  %277 = sbr.rel (%p275) target = $region54
                $region51: #{block_forward.7} parent=46 // loop_body
                  %v281 = vld [vmem:[%s279] sm:$0xff]
                  %282 = vst [vmem:[%s280] sm:$0xff] %v281
                  %v283 = vld [vmem:[%s279 + $0x10] sm:$0xff]
                  %284 = vst [vmem:[%s280 + $0x8] sm:$0xff] %v283
                  %v285 = vld [vmem:[%s279 + $0x20] sm:$0xff]
                  %286 = vst [vmem:[%s280 + $0x10] sm:$0xff] %v285
                  %v287 = vld [vmem:[%s279 + $0x30] sm:$0xff]
                  %288 = vst [vmem:[%s280 + $0x18] sm:$0xff] %v287
                  %v289 = vld [vmem:[%s279 + $0x40] sm:$0xff]
                  %290 = vst [vmem:[%s280 + $0x20] sm:$0xff] %v289
                  %v291 = vld [vmem:[%s279 + $0x50] sm:$0xff]
                  %292 = vst [vmem:[%s280 + $0x28] sm:$0xff] %v291
                  %v293 = vld [vmem:[%s279 + $0x60] sm:$0xff]
                  %294 = vst [vmem:[%s280 + $0x30] sm:$0xff] %v293
                  %v295 = vld [vmem:[%s279 + $0x70] sm:$0xff]
                  %296 = vst [vmem:[%s280 + $0x38] sm:$0xff] %v295
                $region52: #{block_forward.7} parent=46 // loop_footer
                  %s278 = sadd.s32 1, %s274
                $region53: #{block_forward.7} parent=46 // loop_footer_branch
                  %273 = sbr.rel target = $region49
                $region54: #{block_forward.7} parent=46 // loop_exit
                  _
              $region47: #{block_forward.7} parent=31 // pred_fallthru
                _
              // Predicated region
              $region55: #{block_forward.7} parent=31 // pred_check
                _
              $region56: #{block_forward.7} parent=31 // pred_check_branch
                %298 = sbr.rel target = $region58
              $region57: #{block_forward.7} parent=31 // pred_region
                _
              $region58: #{block_forward.7} parent=31 // pred_fallthru
                _
            $region32: #{block_forward.7} parent=27 // pred_fallthru
              _
            // Predicated region
            $region33: #{block_forward.7} parent=27 // pred_check
              _
            $region34: #{block_forward.7} parent=27 // pred_check_branch
              %245 = sbr.rel target = $region36
            $region35: #{block_forward.7} parent=27 // pred_region
              loop: start=0, step=1, limit=1
              $region37: #{block_forward.7} parent=35 // loop_pre_header
                _
              $region38: #{block_forward.7} parent=35 // loop_header
                %s248 = sphi 0, %s252
                %p249 = scmp.ge.s32.totalorder %s248, 1
                %s253 = sphi %s239, %s239
                %s254 = sphi %s234, %s234
              $region39: #{block_forward.7} parent=35 // loop_header_branch
                %251 = sbr.rel (%p249) target = $region43
              $region40: #{block_forward.7} parent=35 // loop_body
                %v255 = vld [vmem:[%s253] sm:$0xff]
                %256 = vst [vmem:[%s254] sm:$0xff] %v255
                %v257 = vld [vmem:[%s253 + $0x10] sm:$0xff]
                %258 = vst [vmem:[%s254 + $0x8] sm:$0xff] %v257
                %v259 = vld [vmem:[%s253 + $0x20] sm:$0xff]
                %260 = vst [vmem:[%s254 + $0x10] sm:$0xff] %v259
                %v261 = vld [vmem:[%s253 + $0x30] sm:$0xff]
                %262 = vst [vmem:[%s254 + $0x18] sm:$0xff] %v261
                %v263 = vld [vmem:[%s253 + $0x40] sm:$0xff]
                %264 = vst [vmem:[%s254 + $0x20] sm:$0xff] %v263
                %v265 = vld [vmem:[%s253 + $0x50] sm:$0xff]
                %266 = vst [vmem:[%s254 + $0x28] sm:$0xff] %v265
                %v267 = vld [vmem:[%s253 + $0x60] sm:$0xff]
                %268 = vst [vmem:[%s254 + $0x30] sm:$0xff] %v267
                %v269 = vld [vmem:[%s253 + $0x70] sm:$0xff]
                %270 = vst [vmem:[%s254 + $0x38] sm:$0xff] %v269
              $region41: #{block_forward.7} parent=35 // loop_footer
                %s252 = sadd.s32 1, %s248
              $region42: #{block_forward.7} parent=35 // loop_footer_branch
                %247 = sbr.rel target = $region38
              $region43: #{block_forward.7} parent=35 // loop_exit
                _
            $region36: #{block_forward.7} parent=27 // pred_fallthru
              _
          $region28: #{block_forward.7} parent=23 // pred_fallthru
            _
          %299 = vnop
        $region24: #{block_forward.7} parent=19 // pred_fallthru
          _
        // Predicated region
        $region59: #{block_forward.7} parent=19 // pred_check
          %p300 = pneg %p75
        $region60: #{block_forward.7} parent=19 // pred_check_branch
          %302 = sbr.rel (%p300) target = $region62
        $region61: #{block_forward.7} parent=19 // pred_region
          %s303 = sand.u32 %s65, 1
          %s304 = sand.u32 %s65, 1
          %s305 = smul.addr %s304, 32
          %s306 = scalar_lea.vmem [#allocation6], %s305
          %s307 = smul.u32 2, %s23
          %s308 = smul.addr %s307, 8
          %s309 = scalar_lea.vmem %s1, %s308
          // Predicated region
          $region63: #{block_forward.7} parent=61 // pred_check
            _
          $region64: #{block_forward.7} parent=61 // pred_check_branch
            %311 = sbr.rel (0) target = $region66
          $region65: #{block_forward.7} parent=61 // pred_region
            // Predicated region
            $region67: #{block_forward.7} parent=65 // pred_check
              _
            $region68: #{block_forward.7} parent=65 // pred_check_branch
              %313 = sbr.rel (0) target = $region70
            $region69: #{block_forward.7} parent=65 // pred_region
              loop: start=0, step=1, limit=1
              $region71: #{block_forward.7} parent=69 // loop_pre_header
                _
              $region72: #{block_forward.7} parent=69 // loop_header
                %s315 = sphi 0, %s319
                %p316 = scmp.ge.s32.totalorder %s315, 1
                %s320 = sphi %s309, %s309
                %s321 = sphi %s306, %s306
              $region73: #{block_forward.7} parent=69 // loop_header_branch
                %318 = sbr.rel (%p316) target = $region77
              $region74: #{block_forward.7} parent=69 // loop_body
                %v322 = vld [vmem:[%s320] sm:$0xff]
                %323 = vst [vmem:[%s321] sm:$0xff] %v322
                %v324 = vld [vmem:[%s320 + $0x8] sm:$0xff]
                %325 = vst [vmem:[%s321 + $0x8] sm:$0xff] %v324
                %v326 = vld [vmem:[%s320 + $0x20] sm:$0xff]
                %327 = vst [vmem:[%s321 + $0x10] sm:$0xff] %v326
                %v328 = vld [vmem:[%s320 + $0x28] sm:$0xff]
                %329 = vst [vmem:[%s321 + $0x18] sm:$0xff] %v328
              $region75: #{block_forward.7} parent=69 // loop_footer
                %s319 = sadd.s32 1, %s315
              $region76: #{block_forward.7} parent=69 // loop_footer_branch
                %314 = sbr.rel target = $region72
              $region77: #{block_forward.7} parent=69 // loop_exit
                _
            $region70: #{block_forward.7} parent=65 // pred_fallthru
              _
            // Predicated region
            $region78: #{block_forward.7} parent=65 // pred_check
              _
            $region79: #{block_forward.7} parent=65 // pred_check_branch
              %331 = sbr.rel target = $region81
            $region80: #{block_forward.7} parent=65 // pred_region
              _
            $region81: #{block_forward.7} parent=65 // pred_fallthru
              _
          $region66: #{block_forward.7} parent=61 // pred_fallthru
            _
          %332 = vnop
        $region62: #{block_forward.7} parent=19 // pred_fallthru
          _
        // Predicated region
        $region82: #{block_forward.7} parent=19 // pred_check
          %p333 = pneg %p101
        $region83: #{block_forward.7} parent=19 // pred_check_branch
          %335 = sbr.rel (%p333) target = $region85
        $region84: #{block_forward.7} parent=19 // pred_region
          %s336 = smul.u32 2, %s23
          %p337 = scmp.lt.s32.totalorder %s336, 3
          %s338 = scalar_select %p337, %s336, 3
          %s339 = scalar_lea.vmem %s2, %s338
          %s340 = smul.u32 2, %s23
        $region85: #{block_forward.7} parent=19 // pred_fallthru
          _
        // Predicated region
        $region86: #{block_forward.7} parent=19 // pred_check
          %p341 = pneg %p127
        $region87: #{block_forward.7} parent=19 // pred_check_branch
          %343 = sbr.rel (%p341) target = $region89
        $region88: #{block_forward.7} parent=19 // pred_region
          %s344 = smul.u32 32, %s23
          %p345 = scmp.lt.s32.totalorder %s344, 63
          %s346 = scalar_select %p345, %s344, 63
          %s347 = smul.addr %s346, 4
          %s348 = scalar_lea.vmem %s3, %s347
          %s349 = smul.u32 32, %s23
        $region89: #{block_forward.7} parent=19 // pred_fallthru
          _
        // Predicated region
        $region90: #{block_forward.7} parent=19 // pred_check
          %p350 = pneg %p174
        $region91: #{block_forward.7} parent=19 // pred_check_branch
          %352 = sbr.rel (%p350) target = $region93
        $region92: #{block_forward.7} parent=19 // pred_region
          %p353 = scmp.lt.s32.totalorder %s22, 1
          %s354 = scalar_select %p353, %s22, 1
          %s355 = smul.addr %s354, 8
          %s356 = smul.addr %s355, 8
          %s357 = scalar_lea.vmem %s5, %s356
        $region93: #{block_forward.7} parent=19 // pred_fallthru
          _
      $region20: #{block_forward.7} parent=5 // pred_fallthru
        _
      %p358 = scmp.le.s32.totalorder 1, %s15
      %p359 = scmp.lt.s32.totalorder %s15, 5
      %p360 = pnand %p358, %p359
      %p361 = pneg %p360
      // Predicated region
      $region94: #{block_forward.7} parent=5 // pred_check
        _
      $region95: #{block_forward.7} parent=5 // pred_check_branch
        %363 = sbr.rel (%p360) target = $region97
      $region96: #{block_forward.7} parent=5 // pred_region
        %s364 = ssub.s32 %s15, 1
        %s365 = sand.u32 %s42, 1
        %s366 = sand.u32 %s42, 1
        %s367 = smul.addr %s366, 64
        %s368 = scalar_lea.vmem [#allocation5], %s367
        // Predicated region
        $region98: #{block_forward.7} parent=96 // pred_check
          %p369 = pneg %p55
        $region99: #{block_forward.7} parent=96 // pred_check_branch
          %371 = sbr.rel (%p369) target = $region101
        $region100: #{block_forward.7} parent=96 // pred_region
          _
        $region101: #{block_forward.7} parent=96 // pred_fallthru
          _
        %s372 = sand.u32 %s68, 1
        %s373 = sand.u32 %s68, 1
        %s374 = smul.addr %s373, 32
        %s375 = scalar_lea.vmem [#allocation6], %s374
        // Predicated region
        $region102: #{block_forward.7} parent=96 // pred_check
          %p376 = pneg %p81
        $region103: #{block_forward.7} parent=96 // pred_check_branch
          %378 = sbr.rel (%p376) target = $region105
        $region104: #{block_forward.7} parent=96 // pred_region
          _
        $region105: #{block_forward.7} parent=96 // pred_fallthru
          _
        %s379 = sand.u32 %s42, 1
        %s380 = sand.u32 %s42, 1
        %s381 = smul.addr %s380, 64
        %s382 = scalar_lea.vmem [#allocation5], %s381
        %p383 = pneg %p55
        %p384 = pneg %p52
        %s385 = sand.u32 %s68, 1
        %s386 = sand.u32 %s68, 1
        %s387 = smul.addr %s386, 32
        %s388 = scalar_lea.vmem [#allocation6], %s387
        %p389 = pneg %p81
        %p390 = pneg %p78
        %s391 = smul.u32 2, %s25
        %p392 = scmp.lt.s32.totalorder %s391, 3
        %s393 = scalar_select %p392, %s391, 3
        %s394 = scalar_lea.vmem %s2, %s393
        %p395 = pneg %p107
        %p396 = pneg %p104
        %s397 = smul.u32 32, %s25
        %p398 = scmp.lt.s32.totalorder %s397, 63
        %s399 = scalar_select %p398, %s397, 63
        %s400 = smul.addr %s399, 4
        %s401 = scalar_lea.vmem %s3, %s400
        %p402 = pneg %p133
        %p403 = pneg %p130
        %p404 = pneg %p154
        %p405 = pneg %p151
        %p406 = scmp.lt.s32.totalorder %s24, 1
        %s407 = scalar_select %p406, %s24, 1
        %s408 = smul.addr %s407, 8
        %s409 = smul.addr %s408, 8
        %s410 = scalar_lea.vmem %s5, %s409
        %p411 = pneg %p180
        %p412 = pneg %p177
        %p413 = pneg %p206
        %p414 = pneg %p203
        %s415 = sand.u32 %s193, 1
        %s416 = scalar_lea.sflag [#allocation8], %s415
        %s417 = sand.u32 %s193, 1
        %s418 = smul.addr %s417, 64
        %s419 = scalar_lea.vmem [#allocation7], %s418
        %s420 = smul.u32 2, %s25
        %s421 = smul.u32 2, %s25
        %s422 = smul.u32 2, %s25
        %p423 = scmp.lt.s32.totalorder %s422, 3
        %s424 = scalar_select %p423, %s422, 3
        %s425 = scalar_lea.vmem %s2, %s424
        %s426 = smul.u32 2, %s25
        %s427 = smul.u32 32, %s25
        %p428 = scmp.lt.s32.totalorder %s427, 63
        %s429 = scalar_select %p428, %s427, 63
        %s430 = smul.addr %s429, 4
        %s431 = scalar_lea.vmem %s3, %s430
        %s432 = smul.u32 32, %s25
        %p433 = scmp.lt.s32.totalorder %s24, 1
        %s434 = scalar_select %p433, %s24, 1
        %s435 = smul.addr %s434, 8
        %s436 = smul.addr %s435, 8
        %s437 = scalar_lea.vmem %s5, %s436
        %p439 = scmp.eq.s32.totalorder %s25, 0
        // Predicated region
        $region106: #{block_forward.7} parent=96 // pred_check
          %p440 = pneg %p439
        $region107: #{block_forward.7} parent=96 // pred_check_branch
          %442 = sbr.rel (%p440) target = $region109
        $region108: #{block_forward.7} parent=96 // pred_region
          %443 = vst [vmem:[#allocation2] sm:$0xff] 0.0
          %444 = vst [vmem:[#allocation2 + $0x8] sm:$0xff] 0.0
          %445 = vst [vmem:[#allocation2 + $0x10] sm:$0xff] 0.0
          %446 = vst [vmem:[#allocation2 + $0x18] sm:$0xff] 0.0
          %447 = vst [vmem:[#allocation2 + $0x20] sm:$0x1] 0.0
          %448 = vst [vmem:[#allocation2 + $0x28] sm:$0x1] 0.0
          %449 = vst [vmem:[#allocation2 + $0x30] sm:$0xff] 0.0
          %450 = vst [vmem:[#allocation2 + $0x38] sm:$0xff] 0.0
          %451 = vst [vmem:[#allocation2 + $0x40] sm:$0xff] 0.0
          %452 = vst [vmem:[#allocation2 + $0x48] sm:$0xff] 0.0
          %453 = vst [vmem:[#allocation2 + $0x50] sm:$0x1] 0.0
          %454 = vst [vmem:[#allocation2 + $0x58] sm:$0x1] 0.0
          %455 = vst [vmem:[#allocation2 + $0x60] sm:$0xff] 0.0
          %456 = vst [vmem:[#allocation2 + $0x68] sm:$0xff] 0.0
          %457 = vst [vmem:[#allocation2 + $0x70] sm:$0xff] 0.0
          %458 = vst [vmem:[#allocation2 + $0x78] sm:$0xff] 0.0
          %459 = vst [vmem:[#allocation2 + $0x80] sm:$0x1] 0.0
          %460 = vst [vmem:[#allocation2 + $0x88] sm:$0x1] 0.0
          %461 = vst [vmem:[#allocation2 + $0x90] sm:$0xff] 0.0
          %462 = vst [vmem:[#allocation2 + $0x98] sm:$0xff] 0.0
          %463 = vst [vmem:[#allocation2 + $0xa0] sm:$0xff] 0.0
          %464 = vst [vmem:[#allocation2 + $0xa8] sm:$0xff] 0.0
          %465 = vst [vmem:[#allocation2 + $0xb0] sm:$0x1] 0.0
          %466 = vst [vmem:[#allocation2 + $0xb8] sm:$0x1] 0.0
          %467 = vst [vmem:[#allocation2 + $0xc0] sm:$0xff] 0.0
          %468 = vst [vmem:[#allocation2 + $0xc8] sm:$0xff] 0.0
          %469 = vst [vmem:[#allocation2 + $0xd0] sm:$0xff] 0.0
          %470 = vst [vmem:[#allocation2 + $0xd8] sm:$0xff] 0.0
          %471 = vst [vmem:[#allocation2 + $0xe0] sm:$0x1] 0.0
          %472 = vst [vmem:[#allocation2 + $0xe8] sm:$0x1] 0.0
          %473 = vst [vmem:[#allocation2 + $0xf0] sm:$0xff] 0.0
          %474 = vst [vmem:[#allocation2 + $0xf8] sm:$0xff] 0.0
          %475 = vst [vmem:[#allocation2 + $0x100] sm:$0xff] 0.0
          %476 = vst [vmem:[#allocation2 + $0x108] sm:$0xff] 0.0
          %477 = vst [vmem:[#allocation2 + $0x110] sm:$0x1] 0.0
          %478 = vst [vmem:[#allocation2 + $0x118] sm:$0x1] 0.0
          %479 = vst [vmem:[#allocation2 + $0x120] sm:$0xff] 0.0
          %480 = vst [vmem:[#allocation2 + $0x128] sm:$0xff] 0.0
          %481 = vst [vmem:[#allocation2 + $0x130] sm:$0xff] 0.0
          %482 = vst [vmem:[#allocation2 + $0x138] sm:$0xff] 0.0
          %483 = vst [vmem:[#allocation2 + $0x140] sm:$0x1] 0.0
          %484 = vst [vmem:[#allocation2 + $0x148] sm:$0x1] 0.0
          %485 = vst [vmem:[#allocation2 + $0x150] sm:$0xff] 0.0
          %486 = vst [vmem:[#allocation2 + $0x158] sm:$0xff] 0.0
          %487 = vst [vmem:[#allocation2 + $0x160] sm:$0xff] 0.0
          %488 = vst [vmem:[#allocation2 + $0x168] sm:$0xff] 0.0
          %489 = vst [vmem:[#allocation2 + $0x170] sm:$0x1] 0.0
          %490 = vst [vmem:[#allocation2 + $0x178] sm:$0x1] 0.0
          %491 = vst [vmem:[#allocation2 + $0x180] sm:$0xff] 0.0
          %492 = vst [vmem:[#allocation2 + $0x188] sm:$0xff] 0.0
          %493 = vst [vmem:[#allocation2 + $0x190] sm:$0xff] 0.0
          %494 = vst [vmem:[#allocation2 + $0x198] sm:$0xff] 0.0
          %495 = vst [vmem:[#allocation2 + $0x1a0] sm:$0x1] 0.0
          %496 = vst [vmem:[#allocation2 + $0x1a8] sm:$0x1] 0.0
          %497 = vst [vmem:[#allocation2 + $0x1b0] sm:$0xff] 0.0
          %498 = vst [vmem:[#allocation2 + $0x1b8] sm:$0xff] 0.0
          %499 = vst [vmem:[#allocation2 + $0x1c0] sm:$0xff] 0.0
          %500 = vst [vmem:[#allocation2 + $0x1c8] sm:$0xff] 0.0
          %501 = vst [vmem:[#allocation2 + $0x1d0] sm:$0x1] 0.0
          %502 = vst [vmem:[#allocation2 + $0x1d8] sm:$0x1] 0.0
          %503 = vst [vmem:[#allocation4] sm:$0xff] 0.0
          %504 = vst [vmem:[#allocation4 + $0x8] sm:$0xff] 0.0
          %505 = vst [vmem:[#allocation4 + $0x10] sm:$0xff] 0.0
          %506 = vst [vmem:[#allocation4 + $0x18] sm:$0xff] 0.0
          %507 = vst [vmem:[#allocation4 + $0x20] sm:$0xff] 0.0
          %508 = vst [vmem:[#allocation4 + $0x28] sm:$0xff] 0.0
          %509 = vst [vmem:[#allocation4 + $0x30] sm:$0xff] 0.0
          %510 = vst [vmem:[#allocation4 + $0x38] sm:$0xff] 0.0
        $region109: #{block_forward.7} parent=96 // pred_fallthru
          _
        %v511 = vld [vmem:[%s368] sm:$0xff]
        %v512 = vld [vmem:[%s368 + $0x8] sm:$0xff]
        %v513 = vld [vmem:[%s368 + $0x10] sm:$0xff]
        %v514 = vld [vmem:[%s368 + $0x18] sm:$0xff]
        %v515 = vld [vmem:[%s368 + $0x20] sm:$0xff]
        %v516 = vld [vmem:[%s368 + $0x28] sm:$0xff]
        %v517 = vld [vmem:[%s368 + $0x30] sm:$0xff]
        %v518 = vld [vmem:[%s368 + $0x38] sm:$0xff]
        %v519 = vunpack.c.l.bf16 %v511
        %v520 = vunpack.c.h.bf16 %v511
        %v521 = vunpack.c.l.bf16 %v512
        %v522 = vunpack.c.h.bf16 %v512
        %v523 = vunpack.c.l.bf16 %v513
        %v524 = vunpack.c.h.bf16 %v513
        %v525 = vunpack.c.l.bf16 %v514
        %v526 = vunpack.c.h.bf16 %v514
        %v527 = vunpack.c.l.bf16 %v515
        %v528 = vunpack.c.h.bf16 %v515
        %v529 = vunpack.c.l.bf16 %v516
        %v530 = vunpack.c.h.bf16 %v516
        %v531 = vunpack.c.l.bf16 %v517
        %v532 = vunpack.c.h.bf16 %v517
        %v533 = vunpack.c.l.bf16 %v518
        %v534 = vunpack.c.h.bf16 %v518
        %s535 = scalar_lea.vmem [#allocation2], 48
        %536 = vst [vmem:[%s535 + $0x10] sm:$0xff] %v519
        %537 = vst [vmem:[%s535 + $0x18] sm:$0xff] %v520
        %538 = vst [vmem:[%s535 + $0x40] sm:$0xff] %v521
        %539 = vst [vmem:[%s535 + $0x48] sm:$0xff] %v522
        %540 = vst [vmem:[%s535 + $0x70] sm:$0xff] %v523
        %541 = vst [vmem:[%s535 + $0x78] sm:$0xff] %v524
        %542 = vst [vmem:[%s535 + $0xa0] sm:$0xff] %v525
        %543 = vst [vmem:[%s535 + $0xa8] sm:$0xff] %v526
        %544 = vst [vmem:[%s535 + $0xd0] sm:$0xff] %v527
        %545 = vst [vmem:[%s535 + $0xd8] sm:$0xff] %v528
        %546 = vst [vmem:[%s535 + $0x100] sm:$0xff] %v529
        %547 = vst [vmem:[%s535 + $0x108] sm:$0xff] %v530
        %548 = vst [vmem:[%s535 + $0x130] sm:$0xff] %v531
        %549 = vst [vmem:[%s535 + $0x138] sm:$0xff] %v532
        %550 = vst [vmem:[%s535 + $0x160] sm:$0xff] %v533
        %551 = vst [vmem:[%s535 + $0x168] sm:$0xff] %v534
        %v552 = vld [vmem:[%s375] sm:$0xff]
        %v553 = vld [vmem:[%s375 + $0x8] sm:$0xff]
        %v554 = vld [vmem:[%s375 + $0x10] sm:$0x1]
        %v555 = vld [vmem:[%s375 + $0x18] sm:$0x1]
        %v556 = vld [vmem:[#allocation2] sm:$0x80]
        %v557 = vld [vmem:[#allocation2 + $0x8] sm:$0x80]
        %v558 = vld [vmem:[#allocation2 + $0x10] sm:$0x7f]
        %v559 = vld [vmem:[#allocation2 + $0x18] sm:$0x7f]
        %v560 = vld [vmem:[#allocation2 + $0x30] sm:$0x80]
        %v561 = vld [vmem:[#allocation2 + $0x38] sm:$0x80]
        %v562 = vld [vmem:[#allocation2 + $0x40] sm:$0x7f]
        %v563 = vld [vmem:[#allocation2 + $0x48] sm:$0x7f]
        %v564 = vld [vmem:[#allocation2 + $0x60] sm:$0x80]
        %v565 = vld [vmem:[#allocation2 + $0x68] sm:$0x80]
        %v566 = vld [vmem:[#allocation2 + $0x70] sm:$0x7f]
        %v567 = vld [vmem:[#allocation2 + $0x78] sm:$0x7f]
        %v568 = vld [vmem:[#allocation2 + $0x90] sm:$0x80]
        %v569 = vld [vmem:[#allocation2 + $0x98] sm:$0x80]
        %v570 = vld [vmem:[#allocation2 + $0xa0] sm:$0x7f]
        %v571 = vld [vmem:[#allocation2 + $0xa8] sm:$0x7f]
        %v572 = vlaneseq
        %v573 = vshrl.u32 %v572, 7
        %v574 = vsub.s32 0, %v573
        %v575 = vrot.slane %v552, %v574
        %v576 = vlaneseq
        %v577 = vshrl.u32 %v576, 7
        %v578 = vsub.s32 0, %v577
        %v579 = vrot.slane %v553, %v578
        %v580 = vmul.f32 %v556, %v575
        %v581 = vmul.f32 %v557, %v579
        %v582 = vmul.f32 %v558, %v575
        %v583 = vmul.f32 %v559, %v579
        %v584 = vmul.f32 %v560, %v575
        %v585 = vmul.f32 %v561, %v579
        %v586 = vmul.f32 %v562, %v575
        %v587 = vmul.f32 %v563, %v579
        %v588 = vmul.f32 %v564, %v575
        %v589 = vmul.f32 %v565, %v579
        %v590 = vmul.f32 %v566, %v575
        %v591 = vmul.f32 %v567, %v579
        %v592 = vmul.f32 %v568, %v575
        %v593 = vmul.f32 %v569, %v579
        %v594 = vmul.f32 %v570, %v575
        %v595 = vmul.f32 %v571, %v579
        %v596 = vadd.f32 %v580, 0.0
        %v597 = vadd.f32 %v581, 0.0
        %v598 = vadd.f32 %v582, 0.0
        %v599 = vadd.f32 %v583, 0.0
        %v600 = vadd.f32 %v584, 0.0
        %v601 = vadd.f32 %v585, 0.0
        %v602 = vadd.f32 %v586, 0.0
        %v603 = vadd.f32 %v587, 0.0
        %v604 = vadd.f32 %v588, 0.0
        %v605 = vadd.f32 %v589, 0.0
        %v606 = vadd.f32 %v590, 0.0
        %v607 = vadd.f32 %v591, 0.0
        %v608 = vadd.f32 %v592, 0.0
        %v609 = vadd.f32 %v593, 0.0
        %v610 = vadd.f32 %v594, 0.0
        %v611 = vadd.f32 %v595, 0.0
        %v612 = vld [vmem:[#allocation2 + $0x10] sm:$0xff]
        %v613 = vld [vmem:[#allocation2 + $0x18] sm:$0xff]
        %v614 = vld [vmem:[#allocation2 + $0x40] sm:$0xff]
        %v615 = vld [vmem:[#allocation2 + $0x48] sm:$0xff]
        %v616 = vld [vmem:[#allocation2 + $0x70] sm:$0xff]
        %v617 = vld [vmem:[#allocation2 + $0x78] sm:$0xff]
        %v618 = vld [vmem:[#allocation2 + $0xa0] sm:$0xff]
        %v619 = vld [vmem:[#allocation2 + $0xa8] sm:$0xff]
        %v620 = vlaneseq
        %v621 = vshrl.u32 %v620, 7
        %v622 = vsub.s32 1, %v621
        %v623 = vrot.slane %v552, %v622
        %v624 = vlaneseq
        %v625 = vshrl.u32 %v624, 7
        %v626 = vsub.s32 1, %v625
        %v627 = vrot.slane %v553, %v626
        %v628 = vmul.f32 %v612, %v623
        %v629 = vmul.f32 %v613, %v627
        %v630 = vmul.f32 %v614, %v623
        %v631 = vmul.f32 %v615, %v627
        %v632 = vmul.f32 %v616, %v623
        %v633 = vmul.f32 %v617, %v627
        %v634 = vmul.f32 %v618, %v623
        %v635 = vmul.f32 %v619, %v627
        %v644 = vrot.slane %v628, 1
        %v645 = vrot.slane %v629, 1
        %v646 = vrot.slane %v630, 1
        %v647 = vrot.slane %v631, 1
        %v648 = vrot.slane %v632, 1
        %v649 = vrot.slane %v633, 1
        %v650 = vrot.slane %v634, 1
        %v651 = vrot.slane %v635, 1
        %v660 = vadd.f32 %v596, %v644
        %v661 = vadd.f32 %v597, %v645
        %v662 = vadd.f32 %v598, %v644
        %v663 = vadd.f32 %v599, %v645
        %v664 = vadd.f32 %v600, %v646
        %v665 = vadd.f32 %v601, %v647
        %v666 = vadd.f32 %v602, %v646
        %v667 = vadd.f32 %v603, %v647
        %v668 = vadd.f32 %v604, %v648
        %v669 = vadd.f32 %v605, %v649
        %v670 = vadd.f32 %v606, %v648
        %v671 = vadd.f32 %v607, %v649
        %v672 = vadd.f32 %v608, %v650
        %v673 = vadd.f32 %v609, %v651
        %v674 = vadd.f32 %v610, %v650
        %v675 = vadd.f32 %v611, %v651
        %v676 = vld [vmem:[#allocation2 + $0x10] sm:$0xfe]
        %v677 = vld [vmem:[#allocation2 + $0x18] sm:$0xfe]
        %v678 = vld [vmem:[#allocation2 + $0x20] sm:$0x1]
        %v679 = vld [vmem:[#allocation2 + $0x28] sm:$0x1]
        %v680 = vld [vmem:[#allocation2 + $0x40] sm:$0xfe]
        %v681 = vld [vmem:[#allocation2 + $0x48] sm:$0xfe]
        %v682 = vld [vmem:[#allocation2 + $0x50] sm:$0x1]
        %v683 = vld [vmem:[#allocation2 + $0x58] sm:$0x1]
        %v684 = vld [vmem:[#allocation2 + $0x70] sm:$0xfe]
        %v685 = vld [vmem:[#allocation2 + $0x78] sm:$0xfe]
        %v686 = vld [vmem:[#allocation2 + $0x80] sm:$0x1]
        %v687 = vld [vmem:[#allocation2 + $0x88] sm:$0x1]
        %v688 = vld [vmem:[#allocation2 + $0xa0] sm:$0xfe]
        %v689 = vld [vmem:[#allocation2 + $0xa8] sm:$0xfe]
        %v690 = vld [vmem:[#allocation2 + $0xb0] sm:$0x1]
        %v691 = vld [vmem:[#allocation2 + $0xb8] sm:$0x1]
        %v692 = vlaneseq
        %v693 = vshrl.u32 %v692, 7
        %v694 = vsub.s32 2, %v693
        %v695 = vrot.slane %v552, %v694
        %v696 = vlaneseq
        %v697 = vshrl.u32 %v696, 7
        %v698 = vsub.s32 2, %v697
        %v699 = vrot.slane %v553, %v698
        %v700 = vmul.f32 %v676, %v695
        %v701 = vmul.f32 %v677, %v699
        %v702 = vmul.f32 %v678, %v695
        %v703 = vmul.f32 %v679, %v699
        %v704 = vmul.f32 %v680, %v695
        %v705 = vmul.f32 %v681, %v699
        %v706 = vmul.f32 %v682, %v695
        %v707 = vmul.f32 %v683, %v699
        %v708 = vmul.f32 %v684, %v695
        %v709 = vmul.f32 %v685, %v699
        %v710 = vmul.f32 %v686, %v695
        %v711 = vmul.f32 %v687, %v699
        %v712 = vmul.f32 %v688, %v695
        %v713 = vmul.f32 %v689, %v699
        %v714 = vmul.f32 %v690, %v695
        %v715 = vmul.f32 %v691, %v699
        %vm732 = vcmask 1045504
        %v733 = vrot.slane %v700, 2
        %v734 = vrot.slane %v701, 2
        %v735 = vrot.slane %v702, 2
        %v736 = vsel %vm732, %v733, %v735
        %v737 = vrot.slane %v703, 2
        %v738 = vsel %vm732, %v734, %v737
        %v739 = vrot.slane %v704, 2
        %v740 = vrot.slane %v705, 2
        %v741 = vrot.slane %v706, 2
        %v742 = vsel %vm732, %v739, %v741
        %v743 = vrot.slane %v707, 2
        %v744 = vsel %vm732, %v740, %v743
        %v745 = vrot.slane %v708, 2
        %v746 = vrot.slane %v709, 2
        %v747 = vrot.slane %v710, 2
        %v748 = vsel %vm732, %v745, %v747
        %v749 = vrot.slane %v711, 2
        %v750 = vsel %vm732, %v746, %v749
        %v751 = vrot.slane %v712, 2
        %v752 = vrot.slane %v713, 2
        %v753 = vrot.slane %v714, 2
        %v754 = vsel %vm732, %v751, %v753
        %v755 = vrot.slane %v715, 2
        %v756 = vsel %vm732, %v752, %v755
        %v773 = vadd.f32 %v660, %v733
        %v774 = vadd.f32 %v661, %v734
        %v775 = vadd.f32 %v662, %v736
        %v776 = vadd.f32 %v663, %v738
        %v777 = vadd.f32 %v664, %v739
        %v778 = vadd.f32 %v665, %v740
        %v779 = vadd.f32 %v666, %v742
        %v780 = vadd.f32 %v667, %v744
        %v781 = vadd.f32 %v668, %v745
        %v782 = vadd.f32 %v669, %v746
        %v783 = vadd.f32 %v670, %v748
        %v784 = vadd.f32 %v671, %v750
        %v785 = vadd.f32 %v672, %v751
        %v786 = vadd.f32 %v673, %v752
        %v787 = vadd.f32 %v674, %v754
        %v788 = vadd.f32 %v675, %v756
        %v789 = vld [vmem:[%s535] sm:$0x80]
        %v790 = vld [vmem:[%s535 + $0x8] sm:$0x80]
        %v791 = vld [vmem:[%s535 + $0x10] sm:$0x7f]
        %v792 = vld [vmem:[%s535 + $0x18] sm:$0x7f]
        %v793 = vld [vmem:[%s535 + $0x30] sm:$0x80]
        %v794 = vld [vmem:[%s535 + $0x38] sm:$0x80]
        %v795 = vld [vmem:[%s535 + $0x40] sm:$0x7f]
        %v796 = vld [vmem:[%s535 + $0x48] sm:$0x7f]
        %v797 = vld [vmem:[%s535 + $0x60] sm:$0x80]
        %v798 = vld [vmem:[%s535 + $0x68] sm:$0x80]
        %v799 = vld [vmem:[%s535 + $0x70] sm:$0x7f]
        %v800 = vld [vmem:[%s535 + $0x78] sm:$0x7f]
        %v801 = vld [vmem:[%s535 + $0x90] sm:$0x80]
        %v802 = vld [vmem:[%s535 + $0x98] sm:$0x80]
        %v803 = vld [vmem:[%s535 + $0xa0] sm:$0x7f]
        %v804 = vld [vmem:[%s535 + $0xa8] sm:$0x7f]
        %v805 = vlaneseq
        %v806 = vshrl.u32 %v805, 7
        %v807 = vsub.s32 3, %v806
        %v808 = vrot.slane %v552, %v807
        %v809 = vlaneseq
        %v810 = vshrl.u32 %v809, 7
        %v811 = vsub.s32 3, %v810
        %v812 = vrot.slane %v553, %v811
        %v813 = vmul.f32 %v789, %v808
        %v814 = vmul.f32 %v790, %v812
        %v815 = vmul.f32 %v791, %v808
        %v816 = vmul.f32 %v792, %v812
        %v817 = vmul.f32 %v793, %v808
        %v818 = vmul.f32 %v794, %v812
        %v819 = vmul.f32 %v795, %v808
        %v820 = vmul.f32 %v796, %v812
        %v821 = vmul.f32 %v797, %v808
        %v822 = vmul.f32 %v798, %v812
        %v823 = vmul.f32 %v799, %v808
        %v824 = vmul.f32 %v800, %v812
        %v825 = vmul.f32 %v801, %v808
        %v826 = vmul.f32 %v802, %v812
        %v827 = vmul.f32 %v803, %v808
        %v828 = vmul.f32 %v804, %v812
        %v829 = vadd.f32 %v773, %v813
        %v830 = vadd.f32 %v774, %v814
        %v831 = vadd.f32 %v775, %v815
        %v832 = vadd.f32 %v776, %v816
        %v833 = vadd.f32 %v777, %v817
        %v834 = vadd.f32 %v778, %v818
        %v835 = vadd.f32 %v779, %v819
        %v836 = vadd.f32 %v780, %v820
        %v837 = vadd.f32 %v781, %v821
        %v838 = vadd.f32 %v782, %v822
        %v839 = vadd.f32 %v783, %v823
        %v840 = vadd.f32 %v784, %v824
        %v841 = vadd.f32 %v785, %v825
        %v842 = vadd.f32 %v786, %v826
        %v843 = vadd.f32 %v787, %v827
        %v844 = vadd.f32 %v788, %v828
        %v845 = vld [vmem:[%s535 + $0x10] sm:$0xff]
        %v846 = vld [vmem:[%s535 + $0x18] sm:$0xff]
        %v847 = vld [vmem:[%s535 + $0x40] sm:$0xff]
        %v848 = vld [vmem:[%s535 + $0x48] sm:$0xff]
        %v849 = vld [vmem:[%s535 + $0x70] sm:$0xff]
        %v850 = vld [vmem:[%s535 + $0x78] sm:$0xff]
        %v851 = vld [vmem:[%s535 + $0xa0] sm:$0xff]
        %v852 = vld [vmem:[%s535 + $0xa8] sm:$0xff]
        %v853 = vlaneseq
        %v854 = vshrl.u32 %v853, 7
        %v855 = vsub.s32 4, %v854
        %v856 = vrot.slane %v552, %v855
        %v857 = vlaneseq
        %v858 = vshrl.u32 %v857, 7
        %v859 = vsub.s32 4, %v858
        %v860 = vrot.slane %v553, %v859
        %v861 = vmul.f32 %v845, %v856
        %v862 = vmul.f32 %v846, %v860
        %v863 = vmul.f32 %v847, %v856
        %v864 = vmul.f32 %v848, %v860
        %v865 = vmul.f32 %v849, %v856
        %v866 = vmul.f32 %v850, %v860
        %v867 = vmul.f32 %v851, %v856
        %v868 = vmul.f32 %v852, %v860
        %v877 = vrot.slane %v861, 1
        %v878 = vrot.slane %v862, 1
        %v879 = vrot.slane %v863, 1
        %v880 = vrot.slane %v864, 1
        %v881 = vrot.slane %v865, 1
        %v882 = vrot.slane %v866, 1
        %v883 = vrot.slane %v867, 1
        %v884 = vrot.slane %v868, 1
        %v893 = vadd.f32 %v829, %v877
        %v894 = vadd.f32 %v830, %v878
        %v895 = vadd.f32 %v831, %v877
        %v896 = vadd.f32 %v832, %v878
        %v897 = vadd.f32 %v833, %v879
        %v898 = vadd.f32 %v834, %v880
        %v899 = vadd.f32 %v835, %v879
        %v900 = vadd.f32 %v836, %v880
        %v901 = vadd.f32 %v837, %v881
        %v902 = vadd.f32 %v838, %v882
        %v903 = vadd.f32 %v839, %v881
        %v904 = vadd.f32 %v840, %v882
        %v905 = vadd.f32 %v841, %v883
        %v906 = vadd.f32 %v842, %v884
        %v907 = vadd.f32 %v843, %v883
        %v908 = vadd.f32 %v844, %v884
        %v909 = vld [vmem:[%s535 + $0x10] sm:$0xfe]
        %v910 = vld [vmem:[%s535 + $0x18] sm:$0xfe]
        %v911 = vld [vmem:[%s535 + $0x20] sm:$0x1]
        %v912 = vld [vmem:[%s535 + $0x28] sm:$0x1]
        %v913 = vld [vmem:[%s535 + $0x40] sm:$0xfe]
        %v914 = vld [vmem:[%s535 + $0x48] sm:$0xfe]
        %v915 = vld [vmem:[%s535 + $0x50] sm:$0x1]
        %v916 = vld [vmem:[%s535 + $0x58] sm:$0x1]
        %v917 = vld [vmem:[%s535 + $0x70] sm:$0xfe]
        %v918 = vld [vmem:[%s535 + $0x78] sm:$0xfe]
        %v919 = vld [vmem:[%s535 + $0x80] sm:$0x1]
        %v920 = vld [vmem:[%s535 + $0x88] sm:$0x1]
        %v921 = vld [vmem:[%s535 + $0xa0] sm:$0xfe]
        %v922 = vld [vmem:[%s535 + $0xa8] sm:$0xfe]
        %v923 = vld [vmem:[%s535 + $0xb0] sm:$0x1]
        %v924 = vld [vmem:[%s535 + $0xb8] sm:$0x1]
        %v925 = vlaneseq
        %v926 = vshrl.u32 %v925, 7
        %v927 = vsub.s32 5, %v926
        %v928 = vrot.slane %v552, %v927
        %v929 = vlaneseq
        %v930 = vshrl.u32 %v929, 7
        %v931 = vsub.s32 5, %v930
        %v932 = vrot.slane %v553, %v931
        %v933 = vmul.f32 %v909, %v928
        %v934 = vmul.f32 %v910, %v932
        %v935 = vmul.f32 %v911, %v928
        %v936 = vmul.f32 %v912, %v932
        %v937 = vmul.f32 %v913, %v928
        %v938 = vmul.f32 %v914, %v932
        %v939 = vmul.f32 %v915, %v928
        %v940 = vmul.f32 %v916, %v932
        %v941 = vmul.f32 %v917, %v928
        %v942 = vmul.f32 %v918, %v932
        %v943 = vmul.f32 %v919, %v928
        %v944 = vmul.f32 %v920, %v932
        %v945 = vmul.f32 %v921, %v928
        %v946 = vmul.f32 %v922, %v932
        %v947 = vmul.f32 %v923, %v928
        %v948 = vmul.f32 %v924, %v932
        %v965 = vrot.slane %v933, 2
        %v966 = vrot.slane %v934, 2
        %v967 = vrot.slane %v935, 2
        %v968 = vsel %vm732, %v965, %v967
        %v969 = vrot.slane %v936, 2
        %v970 = vsel %vm732, %v966, %v969
        %v971 = vrot.slane %v937, 2
        %v972 = vrot.slane %v938, 2
        %v973 = vrot.slane %v939, 2
        %v974 = vsel %vm732, %v971, %v973
        %v975 = vrot.slane %v940, 2
        %v976 = vsel %vm732, %v972, %v975
        %v977 = vrot.slane %v941, 2
        %v978 = vrot.slane %v942, 2
        %v979 = vrot.slane %v943, 2
        %v980 = vsel %vm732, %v977, %v979
        %v981 = vrot.slane %v944, 2
        %v982 = vsel %vm732, %v978, %v981
        %v983 = vrot.slane %v945, 2
        %v984 = vrot.slane %v946, 2
        %v985 = vrot.slane %v947, 2
        %v986 = vsel %vm732, %v983, %v985
        %v987 = vrot.slane %v948, 2
        %v988 = vsel %vm732, %v984, %v987
        %v1005 = vadd.f32 %v893, %v965
        %v1006 = vadd.f32 %v894, %v966
        %v1007 = vadd.f32 %v895, %v968
        %v1008 = vadd.f32 %v896, %v970
        %v1009 = vadd.f32 %v897, %v971
        %v1010 = vadd.f32 %v898, %v972
        %v1011 = vadd.f32 %v899, %v974
        %v1012 = vadd.f32 %v900, %v976
        %v1013 = vadd.f32 %v901, %v977
        %v1014 = vadd.f32 %v902, %v978
        %v1015 = vadd.f32 %v903, %v980
        %v1016 = vadd.f32 %v904, %v982
        %v1017 = vadd.f32 %v905, %v983
        %v1018 = vadd.f32 %v906, %v984
        %v1019 = vadd.f32 %v907, %v986
        %v1020 = vadd.f32 %v908, %v988
        %s1021 = scalar_lea.vmem [#allocation2], 96
        %v1022 = vld [vmem:[%s1021] sm:$0x80]
        %v1023 = vld [vmem:[%s1021 + $0x8] sm:$0x80]
        %v1024 = vld [vmem:[%s1021 + $0x10] sm:$0x7f]
        %v1025 = vld [vmem:[%s1021 + $0x18] sm:$0x7f]
        %v1026 = vld [vmem:[%s1021 + $0x30] sm:$0x80]
        %v1027 = vld [vmem:[%s1021 + $0x38] sm:$0x80]
        %v1028 = vld [vmem:[%s1021 + $0x40] sm:$0x7f]
        %v1029 = vld [vmem:[%s1021 + $0x48] sm:$0x7f]
        %v1030 = vld [vmem:[%s1021 + $0x60] sm:$0x80]
        %v1031 = vld [vmem:[%s1021 + $0x68] sm:$0x80]
        %v1032 = vld [vmem:[%s1021 + $0x70] sm:$0x7f]
        %v1033 = vld [vmem:[%s1021 + $0x78] sm:$0x7f]
        %v1034 = vld [vmem:[%s1021 + $0x90] sm:$0x80]
        %v1035 = vld [vmem:[%s1021 + $0x98] sm:$0x80]
        %v1036 = vld [vmem:[%s1021 + $0xa0] sm:$0x7f]
        %v1037 = vld [vmem:[%s1021 + $0xa8] sm:$0x7f]
        %v1038 = vlaneseq
        %v1039 = vshrl.u32 %v1038, 7
        %v1040 = vsub.s32 6, %v1039
        %v1041 = vrot.slane %v552, %v1040
        %v1042 = vlaneseq
        %v1043 = vshrl.u32 %v1042, 7
        %v1044 = vsub.s32 6, %v1043
        %v1045 = vrot.slane %v553, %v1044
        %v1046 = vmul.f32 %v1022, %v1041
        %v1047 = vmul.f32 %v1023, %v1045
        %v1048 = vmul.f32 %v1024, %v1041
        %v1049 = vmul.f32 %v1025, %v1045
        %v1050 = vmul.f32 %v1026, %v1041
        %v1051 = vmul.f32 %v1027, %v1045
        %v1052 = vmul.f32 %v1028, %v1041
        %v1053 = vmul.f32 %v1029, %v1045
        %v1054 = vmul.f32 %v1030, %v1041
        %v1055 = vmul.f32 %v1031, %v1045
        %v1056 = vmul.f32 %v1032, %v1041
        %v1057 = vmul.f32 %v1033, %v1045
        %v1058 = vmul.f32 %v1034, %v1041
        %v1059 = vmul.f32 %v1035, %v1045
        %v1060 = vmul.f32 %v1036, %v1041
        %v1061 = vmul.f32 %v1037, %v1045
        %v1062 = vadd.f32 %v1005, %v1046
        %v1063 = vadd.f32 %v1006, %v1047
        %v1064 = vadd.f32 %v1007, %v1048
        %v1065 = vadd.f32 %v1008, %v1049
        %v1066 = vadd.f32 %v1009, %v1050
        %v1067 = vadd.f32 %v1010, %v1051
        %v1068 = vadd.f32 %v1011, %v1052
        %v1069 = vadd.f32 %v1012, %v1053
        %v1070 = vadd.f32 %v1013, %v1054
        %v1071 = vadd.f32 %v1014, %v1055
        %v1072 = vadd.f32 %v1015, %v1056
        %v1073 = vadd.f32 %v1016, %v1057
        %v1074 = vadd.f32 %v1017, %v1058
        %v1075 = vadd.f32 %v1018, %v1059
        %v1076 = vadd.f32 %v1019, %v1060
        %v1077 = vadd.f32 %v1020, %v1061
        %v1078 = vld [vmem:[%s1021 + $0x10] sm:$0xff]
        %v1079 = vld [vmem:[%s1021 + $0x18] sm:$0xff]
        %v1080 = vld [vmem:[%s1021 + $0x40] sm:$0xff]
        %v1081 = vld [vmem:[%s1021 + $0x48] sm:$0xff]
        %v1082 = vld [vmem:[%s1021 + $0x70] sm:$0xff]
        %v1083 = vld [vmem:[%s1021 + $0x78] sm:$0xff]
        %v1084 = vld [vmem:[%s1021 + $0xa0] sm:$0xff]
        %v1085 = vld [vmem:[%s1021 + $0xa8] sm:$0xff]
        %v1086 = vlaneseq
        %v1087 = vshrl.u32 %v1086, 7
        %v1088 = vsub.s32 7, %v1087
        %v1089 = vrot.slane %v552, %v1088
        %v1090 = vlaneseq
        %v1091 = vshrl.u32 %v1090, 7
        %v1092 = vsub.s32 7, %v1091
        %v1093 = vrot.slane %v553, %v1092
        %v1094 = vmul.f32 %v1078, %v1089
        %v1095 = vmul.f32 %v1079, %v1093
        %v1096 = vmul.f32 %v1080, %v1089
        %v1097 = vmul.f32 %v1081, %v1093
        %v1098 = vmul.f32 %v1082, %v1089
        %v1099 = vmul.f32 %v1083, %v1093
        %v1100 = vmul.f32 %v1084, %v1089
        %v1101 = vmul.f32 %v1085, %v1093
        %v1110 = vrot.slane %v1094, 1
        %v1111 = vrot.slane %v1095, 1
        %v1112 = vrot.slane %v1096, 1
        %v1113 = vrot.slane %v1097, 1
        %v1114 = vrot.slane %v1098, 1
        %v1115 = vrot.slane %v1099, 1
        %v1116 = vrot.slane %v1100, 1
        %v1117 = vrot.slane %v1101, 1
        %v1126 = vadd.f32 %v1062, %v1110
        %v1127 = vadd.f32 %v1063, %v1111
        %v1128 = vadd.f32 %v1064, %v1110
        %v1129 = vadd.f32 %v1065, %v1111
        %v1130 = vadd.f32 %v1066, %v1112
        %v1131 = vadd.f32 %v1067, %v1113
        %v1132 = vadd.f32 %v1068, %v1112
        %v1133 = vadd.f32 %v1069, %v1113
        %v1134 = vadd.f32 %v1070, %v1114
        %v1135 = vadd.f32 %v1071, %v1115
        %v1136 = vadd.f32 %v1072, %v1114
        %v1137 = vadd.f32 %v1073, %v1115
        %v1138 = vadd.f32 %v1074, %v1116
        %v1139 = vadd.f32 %v1075, %v1117
        %v1140 = vadd.f32 %v1076, %v1116
        %v1141 = vadd.f32 %v1077, %v1117
        %v1142 = vld [vmem:[%s1021 + $0x10] sm:$0xfe]
        %v1143 = vld [vmem:[%s1021 + $0x18] sm:$0xfe]
        %v1144 = vld [vmem:[%s1021 + $0x20] sm:$0x1]
        %v1145 = vld [vmem:[%s1021 + $0x28] sm:$0x1]
        %v1146 = vld [vmem:[%s1021 + $0x40] sm:$0xfe]
        %v1147 = vld [vmem:[%s1021 + $0x48] sm:$0xfe]
        %v1148 = vld [vmem:[%s1021 + $0x50] sm:$0x1]
        %v1149 = vld [vmem:[%s1021 + $0x58] sm:$0x1]
        %v1150 = vld [vmem:[%s1021 + $0x70] sm:$0xfe]
        %v1151 = vld [vmem:[%s1021 + $0x78] sm:$0xfe]
        %v1152 = vld [vmem:[%s1021 + $0x80] sm:$0x1]
        %v1153 = vld [vmem:[%s1021 + $0x88] sm:$0x1]
        %v1154 = vld [vmem:[%s1021 + $0xa0] sm:$0xfe]
        %v1155 = vld [vmem:[%s1021 + $0xa8] sm:$0xfe]
        %v1156 = vld [vmem:[%s1021 + $0xb0] sm:$0x1]
        %v1157 = vld [vmem:[%s1021 + $0xb8] sm:$0x1]
        %v1158 = vlaneseq
        %v1159 = vshrl.u32 %v1158, 7
        %v1160 = vsub.s32 0, %v1159
        %v1161 = vrot.slane %v554, %v1160
        %v1162 = vlaneseq
        %v1163 = vshrl.u32 %v1162, 7
        %v1164 = vsub.s32 0, %v1163
        %v1165 = vrot.slane %v555, %v1164
        %v1166 = vmul.f32 %v1142, %v1161
        %v1167 = vmul.f32 %v1143, %v1165
        %v1168 = vmul.f32 %v1144, %v1161
        %v1169 = vmul.f32 %v1145, %v1165
        %v1170 = vmul.f32 %v1146, %v1161
        %v1171 = vmul.f32 %v1147, %v1165
        %v1172 = vmul.f32 %v1148, %v1161
        %v1173 = vmul.f32 %v1149, %v1165
        %v1174 = vmul.f32 %v1150, %v1161
        %v1175 = vmul.f32 %v1151, %v1165
        %v1176 = vmul.f32 %v1152, %v1161
        %v1177 = vmul.f32 %v1153, %v1165
        %v1178 = vmul.f32 %v1154, %v1161
        %v1179 = vmul.f32 %v1155, %v1165
        %v1180 = vmul.f32 %v1156, %v1161
        %v1181 = vmul.f32 %v1157, %v1165
        %v1198 = vrot.slane %v1166, 2
        %v1199 = vrot.slane %v1167, 2
        %v1200 = vrot.slane %v1168, 2
        %v1201 = vsel %vm732, %v1198, %v1200
        %v1202 = vrot.slane %v1169, 2
        %v1203 = vsel %vm732, %v1199, %v1202
        %v1204 = vrot.slane %v1170, 2
        %v1205 = vrot.slane %v1171, 2
        %v1206 = vrot.slane %v1172, 2
        %v1207 = vsel %vm732, %v1204, %v1206
        %v1208 = vrot.slane %v1173, 2
        %v1209 = vsel %vm732, %v1205, %v1208
        %v1210 = vrot.slane %v1174, 2
        %v1211 = vrot.slane %v1175, 2
        %v1212 = vrot.slane %v1176, 2
        %v1213 = vsel %vm732, %v1210, %v1212
        %v1214 = vrot.slane %v1177, 2
        %v1215 = vsel %vm732, %v1211, %v1214
        %v1216 = vrot.slane %v1178, 2
        %v1217 = vrot.slane %v1179, 2
        %v1218 = vrot.slane %v1180, 2
        %v1219 = vsel %vm732, %v1216, %v1218
        %v1220 = vrot.slane %v1181, 2
        %v1221 = vsel %vm732, %v1217, %v1220
        %v1238 = vadd.f32 %v1126, %v1198
        %v1239 = vadd.f32 %v1127, %v1199
        %v1240 = vadd.f32 %v1128, %v1201
        %v1241 = vadd.f32 %v1129, %v1203
        %v1242 = vadd.f32 %v1130, %v1204
        %v1243 = vadd.f32 %v1131, %v1205
        %v1244 = vadd.f32 %v1132, %v1207
        %v1245 = vadd.f32 %v1133, %v1209
        %v1246 = vadd.f32 %v1134, %v1210
        %v1247 = vadd.f32 %v1135, %v1211
        %v1248 = vadd.f32 %v1136, %v1213
        %v1249 = vadd.f32 %v1137, %v1215
        %v1250 = vadd.f32 %v1138, %v1216
        %v1251 = vadd.f32 %v1139, %v1217
        %v1252 = vadd.f32 %v1140, %v1219
        %v1253 = vadd.f32 %v1141, %v1221
        %vm1270 = vcmask 1040384
        %v1271 = vrot.slane %v1238, 7
        %v1272 = vrot.slane %v1240, 7
        %v1273 = vsel %vm1270, %v1271, %v1272
        %v1274 = vrot.slane %v1239, 7
        %v1275 = vrot.slane %v1241, 7
        %v1276 = vsel %vm1270, %v1274, %v1275
        %v1277 = vrot.slane %v1242, 7
        %v1278 = vrot.slane %v1244, 7
        %v1279 = vsel %vm1270, %v1277, %v1278
        %v1280 = vrot.slane %v1243, 7
        %v1281 = vrot.slane %v1245, 7
        %v1282 = vsel %vm1270, %v1280, %v1281
        %v1283 = vrot.slane %v1246, 7
        %v1284 = vrot.slane %v1248, 7
        %v1285 = vsel %vm1270, %v1283, %v1284
        %v1286 = vrot.slane %v1247, 7
        %v1287 = vrot.slane %v1249, 7
        %v1288 = vsel %vm1270, %v1286, %v1287
        %v1289 = vrot.slane %v1250, 7
        %v1290 = vrot.slane %v1252, 7
        %v1291 = vsel %vm1270, %v1289, %v1290
        %v1292 = vrot.slane %v1251, 7
        %v1293 = vrot.slane %v1253, 7
        %v1294 = vsel %vm1270, %v1292, %v1293
        %v1303 = vld [vmem:[%s425] sm:$0x3]
        %v1305 = vlaneseq
        %v1306 = vshrl.u32 %v1305, 7
        %v1307 = vsub.s32 0, %v1306
        %v1308 = vrot.slane %v1303, %v1307
        %v1309 = vlaneseq
        %v1310 = vshrl.u32 %v1309, 7
        %v1311 = vsub.s32 1, %v1310
        %v1312 = vrot.slane %v1303, %v1311
        %v1315 = vadd.f32 %v1273, %v1308
        %v1316 = vadd.f32 %v1276, %v1312
        %v1317 = vadd.f32 %v1279, %v1308
        %v1318 = vadd.f32 %v1282, %v1312
        %v1319 = vadd.f32 %v1285, %v1308
        %v1320 = vadd.f32 %v1288, %v1312
        %v1321 = vadd.f32 %v1291, %v1308
        %v1322 = vadd.f32 %v1294, %v1312
        %v1323 = vmul.f32 %v1315, %v1315
        %v1324 = vmul.f32 %v1316, %v1316
        %v1325 = vmul.f32 %v1317, %v1317
        %v1326 = vmul.f32 %v1318, %v1318
        %v1327 = vmul.f32 %v1319, %v1319
        %v1328 = vmul.f32 %v1320, %v1320
        %v1329 = vmul.f32 %v1321, %v1321
        %v1330 = vmul.f32 %v1322, %v1322
        %v1331 = vmul.f32 %v1315, %v1323
        %v1332 = vmul.f32 %v1316, %v1324
        %v1333 = vmul.f32 %v1317, %v1325
        %v1334 = vmul.f32 %v1318, %v1326
        %v1335 = vmul.f32 %v1319, %v1327
        %v1336 = vmul.f32 %v1320, %v1328
        %v1337 = vmul.f32 %v1321, %v1329
        %v1338 = vmul.f32 %v1322, %v1330
        %v1339 = vmul.f32 %v1331, 0.044715
        %v1340 = vmul.f32 %v1332, 0.044715
        %v1341 = vmul.f32 %v1333, 0.044715
        %v1342 = vmul.f32 %v1334, 0.044715
        %v1343 = vmul.f32 %v1335, 0.044715
        %v1344 = vmul.f32 %v1336, 0.044715
        %v1345 = vmul.f32 %v1337, 0.044715
        %v1346 = vmul.f32 %v1338, 0.044715
        %v1347 = vadd.f32 %v1315, %v1339
        %v1348 = vadd.f32 %v1316, %v1340
        %v1349 = vadd.f32 %v1317, %v1341
        %v1350 = vadd.f32 %v1318, %v1342
        %v1351 = vadd.f32 %v1319, %v1343
        %v1352 = vadd.f32 %v1320, %v1344
        %v1353 = vadd.f32 %v1321, %v1345
        %v1354 = vadd.f32 %v1322, %v1346
        %v1355 = vmul.f32 %v1347, 0.7978846
        %v1356 = vmul.f32 %v1348, 0.7978846
        %v1357 = vmul.f32 %v1349, 0.7978846
        %v1358 = vmul.f32 %v1350, 0.7978846
        %v1359 = vmul.f32 %v1351, 0.7978846
        %v1360 = vmul.f32 %v1352, 0.7978846
        %v1361 = vmul.f32 %v1353, 0.7978846
        %v1362 = vmul.f32 %v1354, 0.7978846
        %v1363 = vtanh.pop %v1355
        %v1364 = vtanh.pop %v1356
        %v1365 = vtanh.pop %v1357
        %v1366 = vtanh.pop %v1358
        %v1367 = vtanh.pop %v1359
        %v1368 = vtanh.pop %v1360
        %v1369 = vtanh.pop %v1361
        %v1370 = vtanh.pop %v1362
        %v1371 = vadd.f32 %v1363, 1.0
        %v1372 = vadd.f32 %v1364, 1.0
        %v1373 = vadd.f32 %v1365, 1.0
        %v1374 = vadd.f32 %v1366, 1.0
        %v1375 = vadd.f32 %v1367, 1.0
        %v1376 = vadd.f32 %v1368, 1.0
        %v1377 = vadd.f32 %v1369, 1.0
        %v1378 = vadd.f32 %v1370, 1.0
        %v1379 = vmul.f32 %v1371, 0.5
        %v1380 = vmul.f32 %v1372, 0.5
        %v1381 = vmul.f32 %v1373, 0.5
        %v1382 = vmul.f32 %v1374, 0.5
        %v1383 = vmul.f32 %v1375, 0.5
        %v1384 = vmul.f32 %v1376, 0.5
        %v1385 = vmul.f32 %v1377, 0.5
        %v1386 = vmul.f32 %v1378, 0.5
        %v1387 = vmul.f32 %v1315, %v1379
        %v1388 = vmul.f32 %v1316, %v1380
        %v1389 = vmul.f32 %v1317, %v1381
        %v1390 = vmul.f32 %v1318, %v1382
        %v1391 = vmul.f32 %v1319, %v1383
        %v1392 = vmul.f32 %v1320, %v1384
        %v1393 = vmul.f32 %v1321, %v1385
        %v1394 = vmul.f32 %v1322, %v1386
        %v1395 = vpack.c.bf16 %v1389, %v1387
        %v1396 = vpack.c.bf16 %v1390, %v1388
        %v1397 = vpack.c.bf16 %v1393, %v1391
        %v1398 = vpack.c.bf16 %v1394, %v1392
        %1399 = vst [vmem:[#allocation3] sm:$0xff] %v1395
        %1400 = vst [vmem:[#allocation3 + $0x8] sm:$0xff] %v1396
        %1401 = vst [vmem:[#allocation3 + $0x10] sm:$0xff] %v1397
        %1402 = vst [vmem:[#allocation3 + $0x18] sm:$0xff] %v1398
        %s1403 = scalar_lea.vmem [#allocation2], 192
        %v1404 = vld [vmem:[%s1403] sm:$0x80]
        %v1405 = vld [vmem:[%s1403 + $0x8] sm:$0x80]
        %v1406 = vld [vmem:[%s1403 + $0x10] sm:$0x7f]
        %v1407 = vld [vmem:[%s1403 + $0x18] sm:$0x7f]
        %v1408 = vld [vmem:[%s1403 + $0x30] sm:$0x80]
        %v1409 = vld [vmem:[%s1403 + $0x38] sm:$0x80]
        %v1410 = vld [vmem:[%s1403 + $0x40] sm:$0x7f]
        %v1411 = vld [vmem:[%s1403 + $0x48] sm:$0x7f]
        %v1412 = vld [vmem:[%s1403 + $0x60] sm:$0x80]
        %v1413 = vld [vmem:[%s1403 + $0x68] sm:$0x80]
        %v1414 = vld [vmem:[%s1403 + $0x70] sm:$0x7f]
        %v1415 = vld [vmem:[%s1403 + $0x78] sm:$0x7f]
        %v1416 = vld [vmem:[%s1403 + $0x90] sm:$0x80]
        %v1417 = vld [vmem:[%s1403 + $0x98] sm:$0x80]
        %v1418 = vld [vmem:[%s1403 + $0xa0] sm:$0x7f]
        %v1419 = vld [vmem:[%s1403 + $0xa8] sm:$0x7f]
        %v1420 = vmul.f32 %v1404, %v575
        %v1421 = vmul.f32 %v1405, %v579
        %v1422 = vmul.f32 %v1406, %v575
        %v1423 = vmul.f32 %v1407, %v579
        %v1424 = vmul.f32 %v1408, %v575
        %v1425 = vmul.f32 %v1409, %v579
        %v1426 = vmul.f32 %v1410, %v575
        %v1427 = vmul.f32 %v1411, %v579
        %v1428 = vmul.f32 %v1412, %v575
        %v1429 = vmul.f32 %v1413, %v579
        %v1430 = vmul.f32 %v1414, %v575
        %v1431 = vmul.f32 %v1415, %v579
        %v1432 = vmul.f32 %v1416, %v575
        %v1433 = vmul.f32 %v1417, %v579
        %v1434 = vmul.f32 %v1418, %v575
        %v1435 = vmul.f32 %v1419, %v579
        %v1436 = vadd.f32 %v1420, 0.0
        %v1437 = vadd.f32 %v1421, 0.0
        %v1438 = vadd.f32 %v1422, 0.0
        %v1439 = vadd.f32 %v1423, 0.0
        %v1440 = vadd.f32 %v1424, 0.0
        %v1441 = vadd.f32 %v1425, 0.0
        %v1442 = vadd.f32 %v1426, 0.0
        %v1443 = vadd.f32 %v1427, 0.0
        %v1444 = vadd.f32 %v1428, 0.0
        %v1445 = vadd.f32 %v1429, 0.0
        %v1446 = vadd.f32 %v1430, 0.0
        %v1447 = vadd.f32 %v1431, 0.0
        %v1448 = vadd.f32 %v1432, 0.0
        %v1449 = vadd.f32 %v1433, 0.0
        %v1450 = vadd.f32 %v1434, 0.0
        %v1451 = vadd.f32 %v1435, 0.0
        %v1452 = vld [vmem:[%s1403 + $0x10] sm:$0xff]
        %v1453 = vld [vmem:[%s1403 + $0x18] sm:$0xff]
        %v1454 = vld [vmem:[%s1403 + $0x40] sm:$0xff]
        %v1455 = vld [vmem:[%s1403 + $0x48] sm:$0xff]
        %v1456 = vld [vmem:[%s1403 + $0x70] sm:$0xff]
        %v1457 = vld [vmem:[%s1403 + $0x78] sm:$0xff]
        %v1458 = vld [vmem:[%s1403 + $0xa0] sm:$0xff]
        %v1459 = vld [vmem:[%s1403 + $0xa8] sm:$0xff]
        %v1460 = vmul.f32 %v1452, %v623
        %v1461 = vmul.f32 %v1453, %v627
        %v1462 = vmul.f32 %v1454, %v623
        %v1463 = vmul.f32 %v1455, %v627
        %v1464 = vmul.f32 %v1456, %v623
        %v1465 = vmul.f32 %v1457, %v627
        %v1466 = vmul.f32 %v1458, %v623
        %v1467 = vmul.f32 %v1459, %v627
        %v1476 = vrot.slane %v1460, 1
        %v1477 = vrot.slane %v1461, 1
        %v1478 = vrot.slane %v1462, 1
        %v1479 = vrot.slane %v1463, 1
        %v1480 = vrot.slane %v1464, 1
        %v1481 = vrot.slane %v1465, 1
        %v1482 = vrot.slane %v1466, 1
        %v1483 = vrot.slane %v1467, 1
        %v1492 = vadd.f32 %v1436, %v1476
        %v1493 = vadd.f32 %v1437, %v1477
        %v1494 = vadd.f32 %v1438, %v1476
        %v1495 = vadd.f32 %v1439, %v1477
        %v1496 = vadd.f32 %v1440, %v1478
        %v1497 = vadd.f32 %v1441, %v1479
        %v1498 = vadd.f32 %v1442, %v1478
        %v1499 = vadd.f32 %v1443, %v1479
        %v1500 = vadd.f32 %v1444, %v1480
        %v1501 = vadd.f32 %v1445, %v1481
        %v1502 = vadd.f32 %v1446, %v1480
        %v1503 = vadd.f32 %v1447, %v1481
        %v1504 = vadd.f32 %v1448, %v1482
        %v1505 = vadd.f32 %v1449, %v1483
        %v1506 = vadd.f32 %v1450, %v1482
        %v1507 = vadd.f32 %v1451, %v1483
        %v1508 = vld [vmem:[%s1403 + $0x10] sm:$0xfe]
        %v1509 = vld [vmem:[%s1403 + $0x18] sm:$0xfe]
        %v1510 = vld [vmem:[%s1403 + $0x20] sm:$0x1]
        %v1511 = vld [vmem:[%s1403 + $0x28] sm:$0x1]
        %v1512 = vld [vmem:[%s1403 + $0x40] sm:$0xfe]
        %v1513 = vld [vmem:[%s1403 + $0x48] sm:$0xfe]
        %v1514 = vld [vmem:[%s1403 + $0x50] sm:$0x1]
        %v1515 = vld [vmem:[%s1403 + $0x58] sm:$0x1]
        %v1516 = vld [vmem:[%s1403 + $0x70] sm:$0xfe]
        %v1517 = vld [vmem:[%s1403 + $0x78] sm:$0xfe]
        %v1518 = vld [vmem:[%s1403 + $0x80] sm:$0x1]
        %v1519 = vld [vmem:[%s1403 + $0x88] sm:$0x1]
        %v1520 = vld [vmem:[%s1403 + $0xa0] sm:$0xfe]
        %v1521 = vld [vmem:[%s1403 + $0xa8] sm:$0xfe]
        %v1522 = vld [vmem:[%s1403 + $0xb0] sm:$0x1]
        %v1523 = vld [vmem:[%s1403 + $0xb8] sm:$0x1]
        %v1524 = vmul.f32 %v1508, %v695
        %v1525 = vmul.f32 %v1509, %v699
        %v1526 = vmul.f32 %v1510, %v695
        %v1527 = vmul.f32 %v1511, %v699
        %v1528 = vmul.f32 %v1512, %v695
        %v1529 = vmul.f32 %v1513, %v699
        %v1530 = vmul.f32 %v1514, %v695
        %v1531 = vmul.f32 %v1515, %v699
        %v1532 = vmul.f32 %v1516, %v695
        %v1533 = vmul.f32 %v1517, %v699
        %v1534 = vmul.f32 %v1518, %v695
        %v1535 = vmul.f32 %v1519, %v699
        %v1536 = vmul.f32 %v1520, %v695
        %v1537 = vmul.f32 %v1521, %v699
        %v1538 = vmul.f32 %v1522, %v695
        %v1539 = vmul.f32 %v1523, %v699
        %v1556 = vrot.slane %v1524, 2
        %v1557 = vrot.slane %v1525, 2
        %v1558 = vrot.slane %v1526, 2
        %v1559 = vsel %vm732, %v1556, %v1558
        %v1560 = vrot.slane %v1527, 2
        %v1561 = vsel %vm732, %v1557, %v1560
        %v1562 = vrot.slane %v1528, 2
        %v1563 = vrot.slane %v1529, 2
        %v1564 = vrot.slane %v1530, 2
        %v1565 = vsel %vm732, %v1562, %v1564
        %v1566 = vrot.slane %v1531, 2
        %v1567 = vsel %vm732, %v1563, %v1566
        %v1568 = vrot.slane %v1532, 2
        %v1569 = vrot.slane %v1533, 2
        %v1570 = vrot.slane %v1534, 2
        %v1571 = vsel %vm732, %v1568, %v1570
        %v1572 = vrot.slane %v1535, 2
        %v1573 = vsel %vm732, %v1569, %v1572
        %v1574 = vrot.slane %v1536, 2
        %v1575 = vrot.slane %v1537, 2
        %v1576 = vrot.slane %v1538, 2
        %v1577 = vsel %vm732, %v1574, %v1576
        %v1578 = vrot.slane %v1539, 2
        %v1579 = vsel %vm732, %v1575, %v1578
        %v1596 = vadd.f32 %v1492, %v1556
        %v1597 = vadd.f32 %v1493, %v1557
        %v1598 = vadd.f32 %v1494, %v1559
        %v1599 = vadd.f32 %v1495, %v1561
        %v1600 = vadd.f32 %v1496, %v1562
        %v1601 = vadd.f32 %v1497, %v1563
        %v1602 = vadd.f32 %v1498, %v1565
        %v1603 = vadd.f32 %v1499, %v1567
        %v1604 = vadd.f32 %v1500, %v1568
        %v1605 = vadd.f32 %v1501, %v1569
        %v1606 = vadd.f32 %v1502, %v1571
        %v1607 = vadd.f32 %v1503, %v1573
        %v1608 = vadd.f32 %v1504, %v1574
        %v1609 = vadd.f32 %v1505, %v1575
        %v1610 = vadd.f32 %v1506, %v1577
        %v1611 = vadd.f32 %v1507, %v1579
        %s1612 = scalar_lea.vmem [#allocation2], 240
        %v1613 = vld [vmem:[%s1612] sm:$0x80]
        %v1614 = vld [vmem:[%s1612 + $0x8] sm:$0x80]
        %v1615 = vld [vmem:[%s1612 + $0x10] sm:$0x7f]
        %v1616 = vld [vmem:[%s1612 + $0x18] sm:$0x7f]
        %v1617 = vld [vmem:[%s1612 + $0x30] sm:$0x80]
        %v1618 = vld [vmem:[%s1612 + $0x38] sm:$0x80]
        %v1619 = vld [vmem:[%s1612 + $0x40] sm:$0x7f]
        %v1620 = vld [vmem:[%s1612 + $0x48] sm:$0x7f]
        %v1621 = vld [vmem:[%s1612 + $0x60] sm:$0x80]
        %v1622 = vld [vmem:[%s1612 + $0x68] sm:$0x80]
        %v1623 = vld [vmem:[%s1612 + $0x70] sm:$0x7f]
        %v1624 = vld [vmem:[%s1612 + $0x78] sm:$0x7f]
        %v1625 = vld [vmem:[%s1612 + $0x90] sm:$0x80]
        %v1626 = vld [vmem:[%s1612 + $0x98] sm:$0x80]
        %v1627 = vld [vmem:[%s1612 + $0xa0] sm:$0x7f]
        %v1628 = vld [vmem:[%s1612 + $0xa8] sm:$0x7f]
        %v1629 = vmul.f32 %v1613, %v808
        %v1630 = vmul.f32 %v1614, %v812
        %v1631 = vmul.f32 %v1615, %v808
        %v1632 = vmul.f32 %v1616, %v812
        %v1633 = vmul.f32 %v1617, %v808
        %v1634 = vmul.f32 %v1618, %v812
        %v1635 = vmul.f32 %v1619, %v808
        %v1636 = vmul.f32 %v1620, %v812
        %v1637 = vmul.f32 %v1621, %v808
        %v1638 = vmul.f32 %v1622, %v812
        %v1639 = vmul.f32 %v1623, %v808
        %v1640 = vmul.f32 %v1624, %v812
        %v1641 = vmul.f32 %v1625, %v808
        %v1642 = vmul.f32 %v1626, %v812
        %v1643 = vmul.f32 %v1627, %v808
        %v1644 = vmul.f32 %v1628, %v812
        %v1645 = vadd.f32 %v1596, %v1629
        %v1646 = vadd.f32 %v1597, %v1630
        %v1647 = vadd.f32 %v1598, %v1631
        %v1648 = vadd.f32 %v1599, %v1632
        %v1649 = vadd.f32 %v1600, %v1633
        %v1650 = vadd.f32 %v1601, %v1634
        %v1651 = vadd.f32 %v1602, %v1635
        %v1652 = vadd.f32 %v1603, %v1636
        %v1653 = vadd.f32 %v1604, %v1637
        %v1654 = vadd.f32 %v1605, %v1638
        %v1655 = vadd.f32 %v1606, %v1639
        %v1656 = vadd.f32 %v1607, %v1640
        %v1657 = vadd.f32 %v1608, %v1641
        %v1658 = vadd.f32 %v1609, %v1642
        %v1659 = vadd.f32 %v1610, %v1643
        %v1660 = vadd.f32 %v1611, %v1644
        %v1661 = vld [vmem:[%s1612 + $0x10] sm:$0xff]
        %v1662 = vld [vmem:[%s1612 + $0x18] sm:$0xff]
        %v1663 = vld [vmem:[%s1612 + $0x40] sm:$0xff]
        %v1664 = vld [vmem:[%s1612 + $0x48] sm:$0xff]
        %v1665 = vld [vmem:[%s1612 + $0x70] sm:$0xff]
        %v1666 = vld [vmem:[%s1612 + $0x78] sm:$0xff]
        %v1667 = vld [vmem:[%s1612 + $0xa0] sm:$0xff]
        %v1668 = vld [vmem:[%s1612 + $0xa8] sm:$0xff]
        %v1669 = vmul.f32 %v1661, %v856
        %v1670 = vmul.f32 %v1662, %v860
        %v1671 = vmul.f32 %v1663, %v856
        %v1672 = vmul.f32 %v1664, %v860
        %v1673 = vmul.f32 %v1665, %v856
        %v1674 = vmul.f32 %v1666, %v860
        %v1675 = vmul.f32 %v1667, %v856
        %v1676 = vmul.f32 %v1668, %v860
        %v1685 = vrot.slane %v1669, 1
        %v1686 = vrot.slane %v1670, 1
        %v1687 = vrot.slane %v1671, 1
        %v1688 = vrot.slane %v1672, 1
        %v1689 = vrot.slane %v1673, 1
        %v1690 = vrot.slane %v1674, 1
        %v1691 = vrot.slane %v1675, 1
        %v1692 = vrot.slane %v1676, 1
        %v1701 = vadd.f32 %v1645, %v1685
        %v1702 = vadd.f32 %v1646, %v1686
        %v1703 = vadd.f32 %v1647, %v1685
        %v1704 = vadd.f32 %v1648, %v1686
        %v1705 = vadd.f32 %v1649, %v1687
        %v1706 = vadd.f32 %v1650, %v1688
        %v1707 = vadd.f32 %v1651, %v1687
        %v1708 = vadd.f32 %v1652, %v1688
        %v1709 = vadd.f32 %v1653, %v1689
        %v1710 = vadd.f32 %v1654, %v1690
        %v1711 = vadd.f32 %v1655, %v1689
        %v1712 = vadd.f32 %v1656, %v1690
        %v1713 = vadd.f32 %v1657, %v1691
        %v1714 = vadd.f32 %v1658, %v1692
        %v1715 = vadd.f32 %v1659, %v1691
        %v1716 = vadd.f32 %v1660, %v1692
        %v1717 = vld [vmem:[%s1612 + $0x10] sm:$0xfe]
        %v1718 = vld [vmem:[%s1612 + $0x18] sm:$0xfe]
        %v1719 = vld [vmem:[%s1612 + $0x20] sm:$0x1]
        %v1720 = vld [vmem:[%s1612 + $0x28] sm:$0x1]
        %v1721 = vld [vmem:[%s1612 + $0x40] sm:$0xfe]
        %v1722 = vld [vmem:[%s1612 + $0x48] sm:$0xfe]
        %v1723 = vld [vmem:[%s1612 + $0x50] sm:$0x1]
        %v1724 = vld [vmem:[%s1612 + $0x58] sm:$0x1]
        %v1725 = vld [vmem:[%s1612 + $0x70] sm:$0xfe]
        %v1726 = vld [vmem:[%s1612 + $0x78] sm:$0xfe]
        %v1727 = vld [vmem:[%s1612 + $0x80] sm:$0x1]
        %v1728 = vld [vmem:[%s1612 + $0x88] sm:$0x1]
        %v1729 = vld [vmem:[%s1612 + $0xa0] sm:$0xfe]
        %v1730 = vld [vmem:[%s1612 + $0xa8] sm:$0xfe]
        %v1731 = vld [vmem:[%s1612 + $0xb0] sm:$0x1]
        %v1732 = vld [vmem:[%s1612 + $0xb8] sm:$0x1]
        %v1733 = vmul.f32 %v1717, %v928
        %v1734 = vmul.f32 %v1718, %v932
        %v1735 = vmul.f32 %v1719, %v928
        %v1736 = vmul.f32 %v1720, %v932
        %v1737 = vmul.f32 %v1721, %v928
        %v1738 = vmul.f32 %v1722, %v932
        %v1739 = vmul.f32 %v1723, %v928
        %v1740 = vmul.f32 %v1724, %v932
        %v1741 = vmul.f32 %v1725, %v928
        %v1742 = vmul.f32 %v1726, %v932
        %v1743 = vmul.f32 %v1727, %v928
        %v1744 = vmul.f32 %v1728, %v932
        %v1745 = vmul.f32 %v1729, %v928
        %v1746 = vmul.f32 %v1730, %v932
        %v1747 = vmul.f32 %v1731, %v928
        %v1748 = vmul.f32 %v1732, %v932
        %v1765 = vrot.slane %v1733, 2
        %v1766 = vrot.slane %v1734, 2
        %v1767 = vrot.slane %v1735, 2
        %v1768 = vsel %vm732, %v1765, %v1767
        %v1769 = vrot.slane %v1736, 2
        %v1770 = vsel %vm732, %v1766, %v1769
        %v1771 = vrot.slane %v1737, 2
        %v1772 = vrot.slane %v1738, 2
        %v1773 = vrot.slane %v1739, 2
        %v1774 = vsel %vm732, %v1771, %v1773
        %v1775 = vrot.slane %v1740, 2
        %v1776 = vsel %vm732, %v1772, %v1775
        %v1777 = vrot.slane %v1741, 2
        %v1778 = vrot.slane %v1742, 2
        %v1779 = vrot.slane %v1743, 2
        %v1780 = vsel %vm732, %v1777, %v1779
        %v1781 = vrot.slane %v1744, 2
        %v1782 = vsel %vm732, %v1778, %v1781
        %v1783 = vrot.slane %v1745, 2
        %v1784 = vrot.slane %v1746, 2
        %v1785 = vrot.slane %v1747, 2
        %v1786 = vsel %vm732, %v1783, %v1785
        %v1787 = vrot.slane %v1748, 2
        %v1788 = vsel %vm732, %v1784, %v1787
        %v1805 = vadd.f32 %v1701, %v1765
        %v1806 = vadd.f32 %v1702, %v1766
        %v1807 = vadd.f32 %v1703, %v1768
        %v1808 = vadd.f32 %v1704, %v1770
        %v1809 = vadd.f32 %v1705, %v1771
        %v1810 = vadd.f32 %v1706, %v1772
        %v1811 = vadd.f32 %v1707, %v1774
        %v1812 = vadd.f32 %v1708, %v1776
        %v1813 = vadd.f32 %v1709, %v1777
        %v1814 = vadd.f32 %v1710, %v1778
        %v1815 = vadd.f32 %v1711, %v1780
        %v1816 = vadd.f32 %v1712, %v1782
        %v1817 = vadd.f32 %v1713, %v1783
        %v1818 = vadd.f32 %v1714, %v1784
        %v1819 = vadd.f32 %v1715, %v1786
        %v1820 = vadd.f32 %v1716, %v1788
        %s1821 = scalar_lea.vmem [#allocation2], 288
        %v1822 = vld [vmem:[%s1821] sm:$0x80]
        %v1823 = vld [vmem:[%s1821 + $0x8] sm:$0x80]
        %v1824 = vld [vmem:[%s1821 + $0x10] sm:$0x7f]
        %v1825 = vld [vmem:[%s1821 + $0x18] sm:$0x7f]
        %v1826 = vld [vmem:[%s1821 + $0x30] sm:$0x80]
        %v1827 = vld [vmem:[%s1821 + $0x38] sm:$0x80]
        %v1828 = vld [vmem:[%s1821 + $0x40] sm:$0x7f]
        %v1829 = vld [vmem:[%s1821 + $0x48] sm:$0x7f]
        %v1830 = vld [vmem:[%s1821 + $0x60] sm:$0x80]
        %v1831 = vld [vmem:[%s1821 + $0x68] sm:$0x80]
        %v1832 = vld [vmem:[%s1821 + $0x70] sm:$0x7f]
        %v1833 = vld [vmem:[%s1821 + $0x78] sm:$0x7f]
        %v1834 = vld [vmem:[%s1821 + $0x90] sm:$0x80]
        %v1835 = vld [vmem:[%s1821 + $0x98] sm:$0x80]
        %v1836 = vld [vmem:[%s1821 + $0xa0] sm:$0x7f]
        %v1837 = vld [vmem:[%s1821 + $0xa8] sm:$0x7f]
        %v1838 = vmul.f32 %v1822, %v1041
        %v1839 = vmul.f32 %v1823, %v1045
        %v1840 = vmul.f32 %v1824, %v1041
        %v1841 = vmul.f32 %v1825, %v1045
        %v1842 = vmul.f32 %v1826, %v1041
        %v1843 = vmul.f32 %v1827, %v1045
        %v1844 = vmul.f32 %v1828, %v1041
        %v1845 = vmul.f32 %v1829, %v1045
        %v1846 = vmul.f32 %v1830, %v1041
        %v1847 = vmul.f32 %v1831, %v1045
        %v1848 = vmul.f32 %v1832, %v1041
        %v1849 = vmul.f32 %v1833, %v1045
        %v1850 = vmul.f32 %v1834, %v1041
        %v1851 = vmul.f32 %v1835, %v1045
        %v1852 = vmul.f32 %v1836, %v1041
        %v1853 = vmul.f32 %v1837, %v1045
        %v1854 = vadd.f32 %v1805, %v1838
        %v1855 = vadd.f32 %v1806, %v1839
        %v1856 = vadd.f32 %v1807, %v1840
        %v1857 = vadd.f32 %v1808, %v1841
        %v1858 = vadd.f32 %v1809, %v1842
        %v1859 = vadd.f32 %v1810, %v1843
        %v1860 = vadd.f32 %v1811, %v1844
        %v1861 = vadd.f32 %v1812, %v1845
        %v1862 = vadd.f32 %v1813, %v1846
        %v1863 = vadd.f32 %v1814, %v1847
        %v1864 = vadd.f32 %v1815, %v1848
        %v1865 = vadd.f32 %v1816, %v1849
        %v1866 = vadd.f32 %v1817, %v1850
        %v1867 = vadd.f32 %v1818, %v1851
        %v1868 = vadd.f32 %v1819, %v1852
        %v1869 = vadd.f32 %v1820, %v1853
        %v1870 = vld [vmem:[%s1821 + $0x10] sm:$0xff]
        %v1871 = vld [vmem:[%s1821 + $0x18] sm:$0xff]
        %v1872 = vld [vmem:[%s1821 + $0x40] sm:$0xff]
        %v1873 = vld [vmem:[%s1821 + $0x48] sm:$0xff]
        %v1874 = vld [vmem:[%s1821 + $0x70] sm:$0xff]
        %v1875 = vld [vmem:[%s1821 + $0x78] sm:$0xff]
        %v1876 = vld [vmem:[%s1821 + $0xa0] sm:$0xff]
        %v1877 = vld [vmem:[%s1821 + $0xa8] sm:$0xff]
        %v1878 = vmul.f32 %v1870, %v1089
        %v1879 = vmul.f32 %v1871, %v1093
        %v1880 = vmul.f32 %v1872, %v1089
        %v1881 = vmul.f32 %v1873, %v1093
        %v1882 = vmul.f32 %v1874, %v1089
        %v1883 = vmul.f32 %v1875, %v1093
        %v1884 = vmul.f32 %v1876, %v1089
        %v1885 = vmul.f32 %v1877, %v1093
        %v1894 = vrot.slane %v1878, 1
        %v1895 = vrot.slane %v1879, 1
        %v1896 = vrot.slane %v1880, 1
        %v1897 = vrot.slane %v1881, 1
        %v1898 = vrot.slane %v1882, 1
        %v1899 = vrot.slane %v1883, 1
        %v1900 = vrot.slane %v1884, 1
        %v1901 = vrot.slane %v1885, 1
        %v1910 = vadd.f32 %v1854, %v1894
        %v1911 = vadd.f32 %v1855, %v1895
        %v1912 = vadd.f32 %v1856, %v1894
        %v1913 = vadd.f32 %v1857, %v1895
        %v1914 = vadd.f32 %v1858, %v1896
        %v1915 = vadd.f32 %v1859, %v1897
        %v1916 = vadd.f32 %v1860, %v1896
        %v1917 = vadd.f32 %v1861, %v1897
        %v1918 = vadd.f32 %v1862, %v1898
        %v1919 = vadd.f32 %v1863, %v1899
        %v1920 = vadd.f32 %v1864, %v1898
        %v1921 = vadd.f32 %v1865, %v1899
        %v1922 = vadd.f32 %v1866, %v1900
        %v1923 = vadd.f32 %v1867, %v1901
        %v1924 = vadd.f32 %v1868, %v1900
        %v1925 = vadd.f32 %v1869, %v1901
        %v1926 = vld [vmem:[%s1821 + $0x10] sm:$0xfe]
        %v1927 = vld [vmem:[%s1821 + $0x18] sm:$0xfe]
        %v1928 = vld [vmem:[%s1821 + $0x20] sm:$0x1]
        %v1929 = vld [vmem:[%s1821 + $0x28] sm:$0x1]
        %v1930 = vld [vmem:[%s1821 + $0x40] sm:$0xfe]
        %v1931 = vld [vmem:[%s1821 + $0x48] sm:$0xfe]
        %v1932 = vld [vmem:[%s1821 + $0x50] sm:$0x1]
        %v1933 = vld [vmem:[%s1821 + $0x58] sm:$0x1]
        %v1934 = vld [vmem:[%s1821 + $0x70] sm:$0xfe]
        %v1935 = vld [vmem:[%s1821 + $0x78] sm:$0xfe]
        %v1936 = vld [vmem:[%s1821 + $0x80] sm:$0x1]
        %v1937 = vld [vmem:[%s1821 + $0x88] sm:$0x1]
        %v1938 = vld [vmem:[%s1821 + $0xa0] sm:$0xfe]
        %v1939 = vld [vmem:[%s1821 + $0xa8] sm:$0xfe]
        %v1940 = vld [vmem:[%s1821 + $0xb0] sm:$0x1]
        %v1941 = vld [vmem:[%s1821 + $0xb8] sm:$0x1]
        %v1942 = vmul.f32 %v1926, %v1161
        %v1943 = vmul.f32 %v1927, %v1165
        %v1944 = vmul.f32 %v1928, %v1161
        %v1945 = vmul.f32 %v1929, %v1165
        %v1946 = vmul.f32 %v1930, %v1161
        %v1947 = vmul.f32 %v1931, %v1165
        %v1948 = vmul.f32 %v1932, %v1161
        %v1949 = vmul.f32 %v1933, %v1165
        %v1950 = vmul.f32 %v1934, %v1161
        %v1951 = vmul.f32 %v1935, %v1165
        %v1952 = vmul.f32 %v1936, %v1161
        %v1953 = vmul.f32 %v1937, %v1165
        %v1954 = vmul.f32 %v1938, %v1161
        %v1955 = vmul.f32 %v1939, %v1165
        %v1956 = vmul.f32 %v1940, %v1161
        %v1957 = vmul.f32 %v1941, %v1165
        %v1974 = vrot.slane %v1942, 2
        %v1975 = vrot.slane %v1943, 2
        %v1976 = vrot.slane %v1944, 2
        %v1977 = vsel %vm732, %v1974, %v1976
        %v1978 = vrot.slane %v1945, 2
        %v1979 = vsel %vm732, %v1975, %v1978
        %v1980 = vrot.slane %v1946, 2
        %v1981 = vrot.slane %v1947, 2
        %v1982 = vrot.slane %v1948, 2
        %v1983 = vsel %vm732, %v1980, %v1982
        %v1984 = vrot.slane %v1949, 2
        %v1985 = vsel %vm732, %v1981, %v1984
        %v1986 = vrot.slane %v1950, 2
        %v1987 = vrot.slane %v1951, 2
        %v1988 = vrot.slane %v1952, 2
        %v1989 = vsel %vm732, %v1986, %v1988
        %v1990 = vrot.slane %v1953, 2
        %v1991 = vsel %vm732, %v1987, %v1990
        %v1992 = vrot.slane %v1954, 2
        %v1993 = vrot.slane %v1955, 2
        %v1994 = vrot.slane %v1956, 2
        %v1995 = vsel %vm732, %v1992, %v1994
        %v1996 = vrot.slane %v1957, 2
        %v1997 = vsel %vm732, %v1993, %v1996
        %v2014 = vadd.f32 %v1910, %v1974
        %v2015 = vadd.f32 %v1911, %v1975
        %v2016 = vadd.f32 %v1912, %v1977
        %v2017 = vadd.f32 %v1913, %v1979
        %v2018 = vadd.f32 %v1914, %v1980
        %v2019 = vadd.f32 %v1915, %v1981
        %v2020 = vadd.f32 %v1916, %v1983
        %v2021 = vadd.f32 %v1917, %v1985
        %v2022 = vadd.f32 %v1918, %v1986
        %v2023 = vadd.f32 %v1919, %v1987
        %v2024 = vadd.f32 %v1920, %v1989
        %v2025 = vadd.f32 %v1921, %v1991
        %v2026 = vadd.f32 %v1922, %v1992
        %v2027 = vadd.f32 %v1923, %v1993
        %v2028 = vadd.f32 %v1924, %v1995
        %v2029 = vadd.f32 %v1925, %v1997
        %v2046 = vrot.slane %v2014, 7
        %v2047 = vrot.slane %v2016, 7
        %v2048 = vsel %vm1270, %v2046, %v2047
        %v2049 = vrot.slane %v2015, 7
        %v2050 = vrot.slane %v2017, 7
        %v2051 = vsel %vm1270, %v2049, %v2050
        %v2052 = vrot.slane %v2018, 7
        %v2053 = vrot.slane %v2020, 7
        %v2054 = vsel %vm1270, %v2052, %v2053
        %v2055 = vrot.slane %v2019, 7
        %v2056 = vrot.slane %v2021, 7
        %v2057 = vsel %vm1270, %v2055, %v2056
        %v2058 = vrot.slane %v2022, 7
        %v2059 = vrot.slane %v2024, 7
        %v2060 = vsel %vm1270, %v2058, %v2059
        %v2061 = vrot.slane %v2023, 7
        %v2062 = vrot.slane %v2025, 7
        %v2063 = vsel %vm1270, %v2061, %v2062
        %v2064 = vrot.slane %v2026, 7
        %v2065 = vrot.slane %v2028, 7
        %v2066 = vsel %vm1270, %v2064, %v2065
        %v2067 = vrot.slane %v2027, 7
        %v2068 = vrot.slane %v2029, 7
        %v2069 = vsel %vm1270, %v2067, %v2068
        %v2078 = vld [vmem:[%s425] sm:$0x3]
        %v2080 = vlaneseq
        %v2081 = vshrl.u32 %v2080, 7
        %v2082 = vsub.s32 0, %v2081
        %v2083 = vrot.slane %v2078, %v2082
        %v2084 = vlaneseq
        %v2085 = vshrl.u32 %v2084, 7
        %v2086 = vsub.s32 1, %v2085
        %v2087 = vrot.slane %v2078, %v2086
        %v2090 = vadd.f32 %v2048, %v2083
        %v2091 = vadd.f32 %v2051, %v2087
        %v2092 = vadd.f32 %v2054, %v2083
        %v2093 = vadd.f32 %v2057, %v2087
        %v2094 = vadd.f32 %v2060, %v2083
        %v2095 = vadd.f32 %v2063, %v2087
        %v2096 = vadd.f32 %v2066, %v2083
        %v2097 = vadd.f32 %v2069, %v2087
        %v2098 = vmul.f32 %v2090, %v2090
        %v2099 = vmul.f32 %v2091, %v2091
        %v2100 = vmul.f32 %v2092, %v2092
        %v2101 = vmul.f32 %v2093, %v2093
        %v2102 = vmul.f32 %v2094, %v2094
        %v2103 = vmul.f32 %v2095, %v2095
        %v2104 = vmul.f32 %v2096, %v2096
        %v2105 = vmul.f32 %v2097, %v2097
        %v2106 = vmul.f32 %v2090, %v2098
        %v2107 = vmul.f32 %v2091, %v2099
        %v2108 = vmul.f32 %v2092, %v2100
        %v2109 = vmul.f32 %v2093, %v2101
        %v2110 = vmul.f32 %v2094, %v2102
        %v2111 = vmul.f32 %v2095, %v2103
        %v2112 = vmul.f32 %v2096, %v2104
        %v2113 = vmul.f32 %v2097, %v2105
        %v2114 = vmul.f32 %v2106, 0.044715
        %v2115 = vmul.f32 %v2107, 0.044715
        %v2116 = vmul.f32 %v2108, 0.044715
        %v2117 = vmul.f32 %v2109, 0.044715
        %v2118 = vmul.f32 %v2110, 0.044715
        %v2119 = vmul.f32 %v2111, 0.044715
        %v2120 = vmul.f32 %v2112, 0.044715
        %v2121 = vmul.f32 %v2113, 0.044715
        %v2122 = vadd.f32 %v2090, %v2114
        %v2123 = vadd.f32 %v2091, %v2115
        %v2124 = vadd.f32 %v2092, %v2116
        %v2125 = vadd.f32 %v2093, %v2117
        %v2126 = vadd.f32 %v2094, %v2118
        %v2127 = vadd.f32 %v2095, %v2119
        %v2128 = vadd.f32 %v2096, %v2120
        %v2129 = vadd.f32 %v2097, %v2121
        %v2130 = vmul.f32 %v2122, 0.7978846
        %v2131 = vmul.f32 %v2123, 0.7978846
        %v2132 = vmul.f32 %v2124, 0.7978846
        %v2133 = vmul.f32 %v2125, 0.7978846
        %v2134 = vmul.f32 %v2126, 0.7978846
        %v2135 = vmul.f32 %v2127, 0.7978846
        %v2136 = vmul.f32 %v2128, 0.7978846
        %v2137 = vmul.f32 %v2129, 0.7978846
        %v2138 = vtanh.pop %v2130
        %v2139 = vtanh.pop %v2131
        %v2140 = vtanh.pop %v2132
        %v2141 = vtanh.pop %v2133
        %v2142 = vtanh.pop %v2134
        %v2143 = vtanh.pop %v2135
        %v2144 = vtanh.pop %v2136
        %v2145 = vtanh.pop %v2137
        %v2146 = vadd.f32 %v2138, 1.0
        %v2147 = vadd.f32 %v2139, 1.0
        %v2148 = vadd.f32 %v2140, 1.0
        %v2149 = vadd.f32 %v2141, 1.0
        %v2150 = vadd.f32 %v2142, 1.0
        %v2151 = vadd.f32 %v2143, 1.0
        %v2152 = vadd.f32 %v2144, 1.0
        %v2153 = vadd.f32 %v2145, 1.0
        %v2154 = vmul.f32 %v2146, 0.5
        %v2155 = vmul.f32 %v2147, 0.5
        %v2156 = vmul.f32 %v2148, 0.5
        %v2157 = vmul.f32 %v2149, 0.5
        %v2158 = vmul.f32 %v2150, 0.5
        %v2159 = vmul.f32 %v2151, 0.5
        %v2160 = vmul.f32 %v2152, 0.5
        %v2161 = vmul.f32 %v2153, 0.5
        %v2162 = vmul.f32 %v2090, %v2154
        %v2163 = vmul.f32 %v2091, %v2155
        %v2164 = vmul.f32 %v2092, %v2156
        %v2165 = vmul.f32 %v2093, %v2157
        %v2166 = vmul.f32 %v2094, %v2158
        %v2167 = vmul.f32 %v2095, %v2159
        %v2168 = vmul.f32 %v2096, %v2160
        %v2169 = vmul.f32 %v2097, %v2161
        %v2170 = vpack.c.bf16 %v2164, %v2162
        %v2171 = vpack.c.bf16 %v2165, %v2163
        %v2172 = vpack.c.bf16 %v2168, %v2166
        %v2173 = vpack.c.bf16 %v2169, %v2167
        %2174 = vst [vmem:[#allocation3 + $0x20] sm:$0xff] %v2170
        %2175 = vst [vmem:[#allocation3 + $0x28] sm:$0xff] %v2171
        %2176 = vst [vmem:[#allocation3 + $0x30] sm:$0xff] %v2172
        %2177 = vst [vmem:[#allocation3 + $0x38] sm:$0xff] %v2173
        %v2178 = vld [vmem:[#allocation4] sm:$0xff]
        %v2179 = vld [vmem:[#allocation4 + $0x8] sm:$0xff]
        %v2180 = vld [vmem:[#allocation4 + $0x10] sm:$0xff]
        %v2181 = vld [vmem:[#allocation4 + $0x18] sm:$0xff]
        %v2182 = vld [vmem:[#allocation4 + $0x20] sm:$0xff]
        %v2183 = vld [vmem:[#allocation4 + $0x28] sm:$0xff]
        %v2184 = vld [vmem:[#allocation4 + $0x30] sm:$0xff]
        %v2185 = vld [vmem:[#allocation4 + $0x38] sm:$0xff]
        %v2186 = vld [vmem:[#allocation3] sm:$0xff]
        %v2187 = vld [vmem:[#allocation3 + $0x8] sm:$0xff]
        %v2188 = vld [vmem:[#allocation3 + $0x10] sm:$0xff]
        %v2189 = vld [vmem:[#allocation3 + $0x18] sm:$0xff]
        %v2190 = vld [vmem:[#allocation3 + $0x20] sm:$0xff]
        %v2191 = vld [vmem:[#allocation3 + $0x28] sm:$0xff]
        %v2192 = vld [vmem:[#allocation3 + $0x30] sm:$0xff]
        %v2193 = vld [vmem:[#allocation3 + $0x38] sm:$0xff]
        %v2194 = vld [vmem:[%s431] sm:$0xf]
        %v2195 = vld [vmem:[%s431 + $0x4] sm:$0xf]
        %v2196 = vld [vmem:[%s431 + $0x8] sm:$0xf]
        %v2197 = vld [vmem:[%s431 + $0xc] sm:$0xf]
        %v2198 = vld [vmem:[%s431 + $0x10] sm:$0xf]
        %v2199 = vld [vmem:[%s431 + $0x14] sm:$0xf]
        %v2200 = vld [vmem:[%s431 + $0x18] sm:$0xf]
        %v2201 = vld [vmem:[%s431 + $0x1c] sm:$0xf]
        %v2202 = vld [vmem:[%s431 + $0x20] sm:$0xf]
        %v2203 = vld [vmem:[%s431 + $0x24] sm:$0xf]
        %v2204 = vld [vmem:[%s431 + $0x28] sm:$0xf]
        %v2205 = vld [vmem:[%s431 + $0x2c] sm:$0xf]
        %v2206 = vld [vmem:[%s431 + $0x30] sm:$0xf]
        %v2207 = vld [vmem:[%s431 + $0x34] sm:$0xf]
        %v2208 = vld [vmem:[%s431 + $0x38] sm:$0xf]
        %v2209 = vld [vmem:[%s431 + $0x3c] sm:$0xf]
        %v2210 = vld [vmem:[%s431 + $0x40] sm:$0xf]
        %v2211 = vld [vmem:[%s431 + $0x44] sm:$0xf]
        %v2212 = vld [vmem:[%s431 + $0x48] sm:$0xf]
        %v2213 = vld [vmem:[%s431 + $0x4c] sm:$0xf]
        %v2214 = vld [vmem:[%s431 + $0x50] sm:$0xf]
        %v2215 = vld [vmem:[%s431 + $0x54] sm:$0xf]
        %v2216 = vld [vmem:[%s431 + $0x58] sm:$0xf]
        %v2217 = vld [vmem:[%s431 + $0x5c] sm:$0xf]
        %v2218 = vld [vmem:[%s431 + $0x60] sm:$0xf]
        %v2219 = vld [vmem:[%s431 + $0x64] sm:$0xf]
        %v2220 = vld [vmem:[%s431 + $0x68] sm:$0xf]
        %v2221 = vld [vmem:[%s431 + $0x6c] sm:$0xf]
        %v2222 = vld [vmem:[%s431 + $0x70] sm:$0xf]
        %v2223 = vld [vmem:[%s431 + $0x74] sm:$0xf]
        %v2224 = vld [vmem:[%s431 + $0x78] sm:$0xf]
        %v2225 = vld [vmem:[%s431 + $0x7c] sm:$0xf]
        %v2258 = vunpack.c.l.b16 %v2194
        %v2259 = vunpack.c.l.b16 %v2195
        %v2260 = vunpack.c.l.b16 %v2196
        %v2261 = vunpack.c.l.b16 %v2197
        %v2262 = vunpack.c.l.b16 %v2198
        %v2263 = vunpack.c.l.b16 %v2199
        %v2264 = vunpack.c.l.b16 %v2200
        %v2265 = vunpack.c.l.b16 %v2201
        %v2266 = vunpack.c.l.b16 %v2202
        %v2267 = vunpack.c.l.b16 %v2203
        %v2268 = vunpack.c.l.b16 %v2204
        %v2269 = vunpack.c.l.b16 %v2205
        %v2270 = vunpack.c.l.b16 %v2206
        %v2271 = vunpack.c.l.b16 %v2207
        %v2272 = vunpack.c.l.b16 %v2208
        %v2273 = vunpack.c.l.b16 %v2209
        %v2274 = vunpack.c.l.b16 %v2210
        %v2275 = vunpack.c.l.b16 %v2211
        %v2276 = vunpack.c.l.b16 %v2212
        %v2277 = vunpack.c.l.b16 %v2213
        %v2278 = vunpack.c.l.b16 %v2214
        %v2279 = vunpack.c.l.b16 %v2215
        %v2280 = vunpack.c.l.b16 %v2216
        %v2281 = vunpack.c.l.b16 %v2217
        %v2282 = vunpack.c.l.b16 %v2218
        %v2283 = vunpack.c.l.b16 %v2219
        %v2284 = vunpack.c.l.b16 %v2220
        %v2285 = vunpack.c.l.b16 %v2221
        %v2286 = vunpack.c.l.b16 %v2222
        %v2287 = vunpack.c.l.b16 %v2223
        %v2288 = vunpack.c.l.b16 %v2224
        %v2289 = vunpack.c.l.b16 %v2225
        %v2290 = vpack.c.b16 %v2259, %v2258
        %v2291 = vpack.c.b16 %v2261, %v2260
        %v2292 = vpack.c.b16 %v2263, %v2262
        %v2293 = vpack.c.b16 %v2265, %v2264
        %v2294 = vpack.c.b16 %v2267, %v2266
        %v2295 = vpack.c.b16 %v2269, %v2268
        %v2296 = vpack.c.b16 %v2271, %v2270
        %v2297 = vpack.c.b16 %v2273, %v2272
        %v2298 = vpack.c.b16 %v2275, %v2274
        %v2299 = vpack.c.b16 %v2277, %v2276
        %v2300 = vpack.c.b16 %v2279, %v2278
        %v2301 = vpack.c.b16 %v2281, %v2280
        %v2302 = vpack.c.b16 %v2283, %v2282
        %v2303 = vpack.c.b16 %v2285, %v2284
        %v2304 = vpack.c.b16 %v2287, %v2286
        %v2305 = vpack.c.b16 %v2289, %v2288
        %2322 = vmatprep.subr.bf16.mxu0 0
        %2323 = vmatpush1.bf16.msra.mxu0 %v2290
        %2324 = vmatprep.subr.bf16.mxu0 0
        %2325 = vmatpush1.bf16.msra.mxu0 %v2291
        %2326 = vmatprep.subr.bf16.mxu0 0
        %2327 = vmatpush1.bf16.msra.mxu0 %v2292
        %2328 = vmatprep.subr.bf16.mxu0 0
        %2329 = vmatpush1.bf16.msra.mxu0 %v2293
        %2330 = vmatprep.subr.bf16.mxu0 0
        %2331 = vmatpush1.bf16.msra.mxu0 %v2294
        %2332 = vmatprep.subr.bf16.mxu0 0
        %2333 = vmatpush1.bf16.msra.mxu0 %v2295
        %2334 = vmatprep.subr.bf16.mxu0 0
        %2335 = vmatpush1.bf16.msra.mxu0 %v2296
        %2336 = vmatprep.subr.bf16.mxu0 0
        %2337 = vmatpush1.bf16.msra.mxu0 %v2297
        %2338 = vmatprep.subr.bf16.mxu0 0
        %2339 = vmatpush1.bf16.msra.mxu0 %v2298
        %2340 = vmatprep.subr.bf16.mxu0 0
        %2341 = vmatpush1.bf16.msra.mxu0 %v2299
        %2342 = vmatprep.subr.bf16.mxu0 0
        %2343 = vmatpush1.bf16.msra.mxu0 %v2300
        %2344 = vmatprep.subr.bf16.mxu0 0
        %2345 = vmatpush1.bf16.msra.mxu0 %v2301
        %2346 = vmatprep.subr.bf16.mxu0 0
        %2347 = vmatpush1.bf16.msra.mxu0 %v2302
        %2348 = vmatprep.subr.bf16.mxu0 0
        %2349 = vmatpush1.bf16.msra.mxu0 %v2303
        %2350 = vmatprep.subr.bf16.mxu0 0
        %2351 = vmatpush1.bf16.msra.mxu0 %v2304
        %2352 = vmatprep.subr.bf16.mxu0 0
        %2353 = vmatpush1.bf16.msra.mxu0 %v2305
        %2354 = vmatprep.mubr.bf16.mxu0 %v2187
        %2355 = vmatmul.mubr.bf16.gmra.mrb[0].mxu0 %v2186
        %v2356 = vpop.f32.mrb[0].mxu0
        %v2357 = vadd.f32 0.0, %v2356
        %v2358 = vpop.f32.mrb[0].mxu0
        %v2359 = vpop.f32.mrb[0].mxu0
        %v2360 = vadd.f32 0.0, %v2359
        %v2361 = vpop.f32.mrb[0].mxu0
        %2362 = vmatprep.mubr.bf16.mxu0 %v2189
        %2363 = vmatmul.mubr.bf16.gmra.mrb[0].mxu0 %v2188
        %v2364 = vpop.f32.mrb[0].mxu0
        %v2365 = vadd.f32 0.0, %v2364
        %v2366 = vpop.f32.mrb[0].mxu0
        %v2367 = vpop.f32.mrb[0].mxu0
        %v2368 = vadd.f32 0.0, %v2367
        %v2369 = vpop.f32.mrb[0].mxu0
        %2370 = vmatprep.mubr.bf16.mxu0 %v2191
        %2371 = vmatmul.mubr.bf16.gmra.mrb[0].mxu0 %v2190
        %v2372 = vpop.f32.mrb[0].mxu0
        %v2373 = vadd.f32 0.0, %v2372
        %v2374 = vpop.f32.mrb[0].mxu0
        %v2375 = vpop.f32.mrb[0].mxu0
        %v2376 = vadd.f32 0.0, %v2375
        %v2377 = vpop.f32.mrb[0].mxu0
        %2378 = vmatprep.mubr.bf16.mxu0 %v2193
        %2379 = vmatmul.mubr.bf16.gmra.mrb[0].mxu0 %v2192
        %v2380 = vpop.f32.mrb[0].mxu0
        %v2381 = vadd.f32 0.0, %v2380
        %v2382 = vpop.f32.mrb[0].mxu0
        %v2383 = vpop.f32.mrb[0].mxu0
        %v2384 = vadd.f32 0.0, %v2383
        %v2385 = vpop.f32.mrb[0].mxu0
        %2386 = vdwg.mxu0
        %v2387 = vadd.f32 %v2178, %v2357
        %v2388 = vadd.f32 %v2179, %v2360
        %v2389 = vadd.f32 %v2180, %v2365
        %v2390 = vadd.f32 %v2181, %v2368
        %v2391 = vadd.f32 %v2182, %v2373
        %v2392 = vadd.f32 %v2183, %v2376
        %v2393 = vadd.f32 %v2184, %v2381
        %v2394 = vadd.f32 %v2185, %v2384
        %2395 = vst [vmem:[#allocation4] sm:$0xff] %v2387
        %2396 = vst [vmem:[#allocation4 + $0x8] sm:$0xff] %v2388
        %2397 = vst [vmem:[#allocation4 + $0x10] sm:$0xff] %v2389
        %2398 = vst [vmem:[#allocation4 + $0x18] sm:$0xff] %v2390
        %2399 = vst [vmem:[#allocation4 + $0x20] sm:$0xff] %v2391
        %2400 = vst [vmem:[#allocation4 + $0x28] sm:$0xff] %v2392
        %2401 = vst [vmem:[#allocation4 + $0x30] sm:$0xff] %v2393
        %2402 = vst [vmem:[#allocation4 + $0x38] sm:$0xff] %v2394
        %v2403 = vld [vmem:[#allocation4] sm:$0xff]
        %v2404 = vld [vmem:[#allocation4 + $0x8] sm:$0xff]
        %v2405 = vld [vmem:[#allocation4 + $0x10] sm:$0xff]
        %v2406 = vld [vmem:[#allocation4 + $0x18] sm:$0xff]
        %v2407 = vld [vmem:[#allocation4 + $0x20] sm:$0xff]
        %v2408 = vld [vmem:[#allocation4 + $0x28] sm:$0xff]
        %v2409 = vld [vmem:[#allocation4 + $0x30] sm:$0xff]
        %v2410 = vld [vmem:[#allocation4 + $0x38] sm:$0xff]
        %v2411 = vld [vmem:[%s4] sm:$0x1]
        %v2413 = vlaneseq
        %v2414 = vshrl.u32 %v2413, 7
        %v2415 = vsub.s32 0, %v2414
        %v2416 = vrot.slane %v2411, %v2415
        %v2418 = vadd.f32 %v2403, %v2416
        %v2419 = vadd.f32 %v2404, %v2416
        %v2420 = vadd.f32 %v2405, %v2416
        %v2421 = vadd.f32 %v2406, %v2416
        %v2422 = vadd.f32 %v2407, %v2416
        %v2423 = vadd.f32 %v2408, %v2416
        %v2424 = vadd.f32 %v2409, %v2416
        %v2425 = vadd.f32 %v2410, %v2416
        %v2426 = vld [vmem:[%s437] sm:$0xff]
        %v2427 = vld [vmem:[%s437 + $0x8] sm:$0xff]
        %v2428 = vld [vmem:[%s437 + $0x10] sm:$0xff]
        %v2429 = vld [vmem:[%s437 + $0x18] sm:$0xff]
        %v2430 = vld [vmem:[%s437 + $0x20] sm:$0xff]
        %v2431 = vld [vmem:[%s437 + $0x28] sm:$0xff]
        %v2432 = vld [vmem:[%s437 + $0x30] sm:$0xff]
        %v2433 = vld [vmem:[%s437 + $0x38] sm:$0xff]
        %v2434 = vadd.f32 %v2418, %v2426
        %v2435 = vadd.f32 %v2419, %v2427
        %v2436 = vadd.f32 %v2420, %v2428
        %v2437 = vadd.f32 %v2421, %v2429
        %v2438 = vadd.f32 %v2422, %v2430
        %v2439 = vadd.f32 %v2423, %v2431
        %v2440 = vadd.f32 %v2424, %v2432
        %v2441 = vadd.f32 %v2425, %v2433
        %2442 = vst [vmem:[%s419] sm:$0xff] %v2434
        %2443 = vst [vmem:[%s419 + $0x8] sm:$0xff] %v2435
        %2444 = vst [vmem:[%s419 + $0x10] sm:$0xff] %v2436
        %2445 = vst [vmem:[%s419 + $0x18] sm:$0xff] %v2437
        %2446 = vst [vmem:[%s419 + $0x20] sm:$0xff] %v2438
        %2447 = vst [vmem:[%s419 + $0x28] sm:$0xff] %v2439
        %2448 = vst [vmem:[%s419 + $0x30] sm:$0xff] %v2440
        %2449 = vst [vmem:[%s419 + $0x38] sm:$0xff] %v2441
        %s2450 = sand.u32 %s193, 1
        %s2451 = scalar_lea.sflag [#allocation8], %s2450
        %s2452 = sand.u32 %s193, 1
        %s2453 = smul.addr %s2452, 64
        %s2454 = scalar_lea.vmem [#allocation7], %s2453
        // Predicated region
        $region110: #{block_forward.7} parent=96 // pred_check
          %p2455 = pneg %p203
        $region111: #{block_forward.7} parent=96 // pred_check_branch
          %2457 = sbr.rel (%p2455) target = $region113
        $region112: #{block_forward.7} parent=96 // pred_region
          %s2459 = ssub.s32 1024, 1024
          %2460 = vsyncadd %s2451, %s2459
          %s2461 = smul.addr %s24, 8
          %s2462 = smul.addr %s2461, 128
          %s2463 = scalar_lea.hbm %s6, %s2462
          %s2464 = sshll.u32 %s2454, 4
          %s2465 = int_to_ptr.vmem [resolvable:$true] %s2464
          %2470 = dma.vmem_to_hbm [thread:$0]  %s2465, 1024, %s2463, %s2451, 128, 128, 8
        $region113: #{block_forward.7} parent=96 // pred_fallthru
          _
      $region97: #{block_forward.7} parent=5 // pred_fallthru
        _
      %p2471 = scmp.le.s32.totalorder 2, %s15
      // Predicated region
      $region114: #{block_forward.7} parent=5 // pred_check
        %p2472 = pneg %p2471
      $region115: #{block_forward.7} parent=5 // pred_check_branch
        %2474 = sbr.rel (%p2472) target = $region117
      $region116: #{block_forward.7} parent=5 // pred_region
        %s2475 = ssub.s32 %s15, 2
        // Predicated region
        $region118: #{block_forward.7} parent=116 // pred_check
          %p2476 = pneg %p209
        $region119: #{block_forward.7} parent=116 // pred_check_branch
          %2478 = sbr.rel (%p2476) target = $region121
        $region120: #{block_forward.7} parent=116 // pred_region
          %s2479 = sand.u32 %s194, 1
          %s2480 = scalar_lea.sflag [#allocation8], %s2479
          %s2481 = sand.u32 %s194, 1
          %s2482 = smul.addr %s2481, 64
          %s2483 = scalar_lea.vmem [#allocation7], %s2482
          %2484 = dma.done %s2480, 1024
        $region121: #{block_forward.7} parent=116 // pred_fallthru
          _
      $region117: #{block_forward.7} parent=5 // pred_fallthru
        _
    $region6: #{block_forward.7} parent=1 // loop_footer
      %s19 = sadd.s32 1, %s15
    $region7: #{block_forward.7} parent=1 // loop_footer_branch
      %14 = sbr.rel target = $region3
    $region8: #{block_forward.7} parent=1 // loop_exit
      _
    %2485 = vsyncpa [#allocation8], 1
    %s2486 = scalar_lea.sflag [#allocation8], 1
    %2487 = vsyncpa %s2486, 1

</llo_original>
